<compile_context>
chip_gen: v6e
topology: v6e:2x2x1
jax: 0.10.0
libtpu: 0.0.40
codegen_flags: <defaults>
</compile_context>

<pallas_src>
import math

import jax
import jax.numpy as jnp
import numpy as np
from jax import lax
from jax.experimental import pallas as pl
from jax.experimental.pallas import tpu as pltpu


def _gelu_exact(x):
    # nn.GELU() default = exact (erf-based) GELU
    return 0.5 * x * (1.0 + lax.erf(x / jnp.sqrt(jnp.asarray(2.0, x.dtype))))


def make_xlstm_kernel(num_layers, hidden_size, input_size, batch, t_chunk,
                      eps=1e-5):
    L, H, D, B, Tt = num_layers, hidden_size, input_size, batch, t_chunk
    # whh0, (wih, whh, b) per extra layer, gamma, beta, wproj, bproj
    n_w = 1 + 3 * (L - 1) + 4

    def kernel(g0_ref, x_ref, *args):
        w_refs = args[:n_w]
        out_ref, hout_ref, cout_ref = args[n_w:n_w + 3]
        h_scr, c_scr, ytop_scr = args[n_w + 3:]

        whh0_ref = w_refs[0]
        gamma_ref, beta_ref, wp_ref, bp_ref = w_refs[n_w - 4:]

        ci = pl.program_id(0)

        @pl.when(ci == 0)
        def _():
            h_scr[...] = jnp.zeros_like(h_scr)
            c_scr[...] = jnp.zeros_like(c_scr)

        # Hoist weight / broadcast loads out of the per-timestep loop
        # (JAX does not CSE broadcast_in_dim).
        whh0 = whh0_ref[...]                                       # (H, 4H)
        wih = [w_refs[1 + 3 * (l - 1)][...] for l in range(1, L)]  # (H, 4H)
        whh = [w_refs[2 + 3 * (l - 1)][...] for l in range(1, L)]  # (H, 4H)
        bb = [w_refs[3 + 3 * (l - 1)][...] for l in range(1, L)]   # (1, 4H)
        gamma = gamma_ref[...]                                     # (1, H)
        beta = beta_ref[...]                                       # (1, H)
        wp = wp_ref[...]                                           # (H, D)
        bp = bp_ref[...]                                           # (1, D)

        def cell(gates, c):
            # single exp over the concatenated [i|f] lane block
            ef = jnp.exp(gates[:, 0:2 * H])
            i_g = ef[:, 0:H]
            f_g = ef[:, H:2 * H]
            g_g = jnp.tanh(gates[:, 2 * H:3 * H])
            o_g = jax.nn.sigmoid(gates[:, 3 * H:4 * H])
            c_new = f_g * c + i_g * g_g
            h_new = o_g * jnp.tanh(c_new)
            return h_new, c_new

        # h/c live in loop-carry registers for the whole chunk; the scratch
        # refs are read once here and written once after the loop.
        h0s = tuple(h_scr[l] for l in range(L))
        c0s = tuple(c_scr[l] for l in range(L))

        def step(tt, carry):
            hs, cs = carry
            hs, cs = list(hs), list(cs)
            # layer 0: input projection precomputed outside the recurrence.
            gates0 = g0_ref[tt] + jnp.dot(
                hs[0], whh0, preferred_element_type=jnp.float32)
            h_new, c_new = cell(gates0, cs[0])
            hs[0], cs[0] = h_new, c_new
            x = h_new
            for l in range(1, L):                 # dropout p=0 -> identity
                gates = (jnp.dot(x, wih[l - 1],
                                 preferred_element_type=jnp.float32)
                         + jnp.dot(hs[l], whh[l - 1],
                                   preferred_element_type=jnp.float32)
                         + bb[l - 1])
                h_new, c_new = cell(gates, cs[l])
                hs[l], cs[l] = h_new, c_new
                x = h_new
            # stash top-layer output; epilogue is batched after the loop
            ytop_scr[tt] = x
            return (tuple(hs), tuple(cs))

        unroll = max(1, min(Tt, 8))
        hs, cs = lax.fori_loop(0, Tt, step, (h0s, c0s), unroll=unroll)

        # Write the chunk-final state back to scratch once.
        h_scr[...] = jnp.stack(hs, axis=0)
        c_scr[...] = jnp.stack(cs, axis=0)

        # ---- batched chunk epilogue: GELU -> LayerNorm -> proj -> +residual
        y = ytop_scr[...].reshape(Tt * B, H)
        act = _gelu_exact(y)
        mu = jnp.mean(act, axis=-1, keepdims=True)
        var = jnp.mean(act * act, axis=-1, keepdims=True) - mu * mu
        var = jnp.maximum(var, 0.0)               # guard single-pass variance
        normed = (act - mu) * lax.rsqrt(var + eps)
        normed = normed * gamma + beta
        proj = jnp.dot(normed, wp, preferred_element_type=jnp.float32) + bp
        res = x_ref[...].reshape(Tt * B, D)
        out_ref[...] = (proj + res).reshape(Tt, B, D).astype(out_ref.dtype)

        # Final (h, c) written only once, on the last grid step.
        @pl.when(ci == pl.num_programs(0) - 1)
        def _():
            hout_ref[...] = h_scr[...]
            cout_ref[...] = c_scr[...]

    return kernel


def xlstm_block_forward(x_tbd, params, num_layers, hidden_size,
                        time_chunk=None, eps=1e-5):
    """x_tbd: (T, B, D) float32.  Returns (out (T,B,D), h (L,B,H), c (L,B,H))."""
    T, B, D = x_tbd.shape
    H, L = hidden_size, num_layers
    Tt = T if time_chunk is None else time_chunk
    assert T % Tt == 0, "time_chunk must divide T"
    n_chunks = T // Tt

    # Hoist the layer-0 input projection out of the recurrence: one big
    # (T*B, D) x (D, 4H) matmul + bias, done by XLA outside the serial kernel.
    w_ih0_t = jnp.transpose(params["w_ih"][0])               # (D, 4H)
    g0 = (jnp.einsum("tbd,dg->tbg", x_tbd, w_ih0_t)
          + params["b"][0]).astype(jnp.float32)              # (T, B, 4H)

    # Pre-transposed weights (no in-kernel .T, no per-step concat).
    weight_arrays = [jnp.transpose(params["w_hh"][0])]       # (H, 4H)
    for l in range(1, L):
        weight_arrays += [jnp.transpose(params["w_ih"][l]),  # (H, 4H)
                          jnp.transpose(params["w_hh"][l]),  # (H, 4H)
                          params["b"][l]]                    # (1, 4H)
    weight_arrays += [params["gamma"], params["beta"],
                      jnp.transpose(params["w_proj"]),       # (H, D)
                      params["b_proj"]]                      # (1, D)

    flat_ins = [g0, x_tbd] + weight_arrays
    in_specs = [
        pl.BlockSpec((Tt, B, 4 * H), lambda ci: (ci, 0, 0)),
        pl.BlockSpec((Tt, B, D), lambda ci: (ci, 0, 0)),
    ]
    for w in weight_arrays:
        in_specs.append(pl.BlockSpec(w.shape, lambda ci, n=w.ndim: (0,) * n))

    out_shapes = (
        jax.ShapeDtypeStruct((T, B, D), x_tbd.dtype),
        jax.ShapeDtypeStruct((L, B, H), jnp.float32),
        jax.ShapeDtypeStruct((L, B, H), jnp.float32),
    )
    out_specs = [
        pl.BlockSpec((Tt, B, D), lambda ci: (ci, 0, 0)),
        pl.BlockSpec((L, B, H), lambda ci: (0, 0, 0)),
        pl.BlockSpec((L, B, H), lambda ci: (0, 0, 0)),
    ]

    kernel = make_xlstm_kernel(L, H, D, B, Tt, eps)
    return pl.pallas_call(
        kernel,
        out_shape=out_shapes,
        grid_spec=pltpu.PrefetchScalarGridSpec(
            num_scalar_prefetch=0,
            grid=(n_chunks,),
            in_specs=in_specs,
            out_specs=out_specs,
            scratch_shapes=[
                pltpu.VMEM((L, B, H), jnp.float32),    # h state
                pltpu.VMEM((L, B, H), jnp.float32),    # c state
                pltpu.VMEM((Tt, B, H), jnp.float32),   # top-layer h per chunk
            ],
        ),
        compiler_params=pltpu.CompilerParams(
            dimension_semantics=("arbitrary",),   # recurrent over time
            # <= ~48 MiB leaves headroom on v7x's 64 MiB physical VMEM;
            # generous on v5e/v6e (128 MiB).
            vmem_limit_bytes=48 * 1024 * 1024,
        ),
    )(*flat_ins)


# ---------------- parameter init (deterministic, Xavier-uniform style) -------


def _xavier_uniform(key, shape):
    fan_out, fan_in = shape
    bound = math.sqrt(6.0 / (fan_in + fan_out))
    return jax.random.uniform(key, shape, jnp.float32, -bound, bound)


def init_params(key, input_size, hidden_size, num_layers):
    H, D, L = hidden_size, input_size, num_layers
    keys = jax.random.split(key, 3 * L + 2)
    w_ih, w_hh, b = [], [], []
    for l in range(L):
        in_l = D if l == 0 else H
        w_ih.append(_xavier_uniform(keys[3 * l + 0], (4 * H, in_l)))
        w_hh.append(_xavier_uniform(keys[3 * l + 1], (4 * H, H)))
        b.append(jnp.zeros((1, 4 * H), jnp.float32))        # nn.init.zeros_
    params = {
        "w_ih": w_ih,
        "w_hh": w_hh,
        "b": b,
        "gamma": jnp.ones((1, H), jnp.float32),              # LayerNorm weight
        "beta": jnp.zeros((1, H), jnp.float32),              # LayerNorm bias
        "w_proj": _xavier_uniform(keys[-2], (D, H)),
        "b_proj": 0.01 * jax.random.normal(keys[-1], (1, D), jnp.float32),
    }
    return params


# ---------------- pure-JAX reference (for sanity check) ----------------------


def reference_forward(x_btd, params, num_layers, hidden_size, eps=1e-5):
    B, T, D = x_btd.shape
    H, L = hidden_size, num_layers
    h = [jnp.zeros((B, H), jnp.float32) for _ in range(L)]
    c = [jnp.zeros((B, H), jnp.float32) for _ in range(L)]
    outs = []
    for t in range(T):
        x = x_btd[:, t, :]
        for l in range(L):
            gates = (x @ params["w_ih"][l].T + params["b"][l]
                     + h[l] @ params["w_hh"][l].T)
            i_g = jnp.exp(gates[:, 0:H])
            f_g = jnp.exp(gates[:, H:2 * H])
            g_g = jnp.tanh(gates[:, 2 * H:3 * H])
            o_g = jax.nn.sigmoid(gates[:, 3 * H:4 * H])
            c[l] = f_g * c[l] + i_g * g_g
            h[l] = o_g * jnp.tanh(c[l])
            x = h[l]
        outs.append(x)
    y = jnp.stack(outs, axis=1)                             # (B, T, H)
    act = _gelu_exact(y)
    mu = jnp.mean(act, axis=-1, keepdims=True)
    var = jnp.mean((act - mu) ** 2, axis=-1, keepdims=True)
    normed = (act - mu) / jnp.sqrt(var + eps)
    normed = normed * params["gamma"][0] + params["beta"][0]
    proj = normed @ params["w_proj"].T + params["b_proj"][0]
    return proj + x_btd, jnp.stack(h), jnp.stack(c)


# ---------------- main --------------------------------------------------------

if __name__ == "__main__":
    # Lane/sublane-aligned small shapes: B=8 (sublane), D=H=128 (lane), 4H=512.
    B, T, D, H, L = 8, 16, 128, 128, 2   # batch, seq, input, hidden, layers

    key = jax.random.PRNGKey(0)
    k_x, k_p = jax.random.split(key)
    x_btd = jax.random.normal(k_x, (B, T, D), jnp.float32)
    params = init_params(k_p, D, H, L)

    # kernel layout is (T, B, D); two time chunks exercise the pipelined grid.
    x_tbd = jnp.transpose(x_btd, (1, 0, 2))
    out_tbd, h_fin, c_fin = xlstm_block_forward(x_tbd, params, L, H,
                                                time_chunk=8)
    out_btd = jnp.transpose(out_tbd, (1, 0, 2))
    jax.block_until_ready((out_btd, h_fin, c_fin))

    # sanity check vs pure-JAX reference
    ref_out, ref_h, ref_c = reference_forward(x_btd, params, L, H)
    np.testing.assert_allclose(np.asarray(out_btd), np.asarray(ref_out),
                               rtol=5e-2, atol=5e-2)
    np.testing.assert_allclose(np.asarray(h_fin), np.asarray(ref_h),
                               rtol=5e-2, atol=5e-2)
    np.testing.assert_allclose(np.asarray(c_fin), np.asarray(ref_c),
                               rtol=5e-2, atol=5e-2)

    print("KERNEL_OK")
</pallas_src>

<mosaic_0001>
module attributes {stable_mosaic.version = 11 : i64} {
  func.func @kernel(%arg0: i32, %arg1: memref<8x8x512xf32, #tpu.memory_space<vmem>>, %arg2: memref<8x8x128xf32, #tpu.memory_space<vmem>>, %arg3: memref<128x512xf32, #tpu.memory_space<vmem>>, %arg4: memref<128x512xf32, #tpu.memory_space<vmem>>, %arg5: memref<128x512xf32, #tpu.memory_space<vmem>>, %arg6: memref<1x512xf32, #tpu.memory_space<vmem>>, %arg7: memref<1x128xf32, #tpu.memory_space<vmem>>, %arg8: memref<1x128xf32, #tpu.memory_space<vmem>>, %arg9: memref<128x128xf32, #tpu.memory_space<vmem>>, %arg10: memref<1x128xf32, #tpu.memory_space<vmem>>, %arg11: memref<8x8x128xf32, #tpu.memory_space<vmem>>, %arg12: memref<2x8x128xf32, #tpu.memory_space<vmem>>, %arg13: memref<2x8x128xf32, #tpu.memory_space<vmem>>, %arg14: memref<2x8x128xf32, #tpu.memory_space<vmem>>, %arg15: memref<2x8x128xf32, #tpu.memory_space<vmem>>, %arg16: memref<8x8x128xf32, #tpu.memory_space<vmem>>) attributes {dimension_semantics = [#tpu.dimension_semantics<arbitrary>], iteration_bounds = array<i64: 2>, scalar_prefetch = 0 : i64, scratch_operands = 3 : i64, tpu.core_type = #tpu.core_type<tc>, window_params = [{transform_indices = @transform_0, window_bounds = array<i64: 8, 8, 512>}, {transform_indices = @transform_1, window_bounds = array<i64: 8, 8, 128>}, {pipeline_mode = #tpu.pipeline_mode<synchronous>, transform_indices = @transform_2, window_bounds = array<i64: 128, 512>}, {pipeline_mode = #tpu.pipeline_mode<synchronous>, transform_indices = @transform_3, window_bounds = array<i64: 128, 512>}, {pipeline_mode = #tpu.pipeline_mode<synchronous>, transform_indices = @transform_4, window_bounds = array<i64: 128, 512>}, {pipeline_mode = #tpu.pipeline_mode<synchronous>, transform_indices = @transform_5, window_bounds = array<i64: 1, 512>}, {pipeline_mode = #tpu.pipeline_mode<synchronous>, transform_indices = @transform_6, window_bounds = array<i64: 1, 128>}, {pipeline_mode = #tpu.pipeline_mode<synchronous>, transform_indices = @transform_7, window_bounds = array<i64: 1, 128>}, {pipeline_mode = #tpu.pipeline_mode<synchronous>, transform_indices = @transform_8, window_bounds = array<i64: 128, 128>}, {pipeline_mode = #tpu.pipeline_mode<synchronous>, transform_indices = @transform_9, window_bounds = array<i64: 1, 128>}, {transform_indices = @transform_10, window_bounds = array<i64: 8, 8, 128>}, {pipeline_mode = #tpu.pipeline_mode<synchronous>, transform_indices = @transform_11, window_bounds = array<i64: 2, 8, 128>}, {pipeline_mode = #tpu.pipeline_mode<synchronous>, transform_indices = @transform_12, window_bounds = array<i64: 2, 8, 128>}]} {
    %c0_i32 = arith.constant 0 : i32
    %0 = arith.cmpi eq, %arg0, %c0_i32 : i32
    %1 = arith.extui %0 : i1 to i32
    %c0_i32_0 = arith.constant 0 : i32
    %2 = arith.cmpi ne, %1, %c0_i32_0 : i32
    scf.if %2 {
      %cst_126 = arith.constant 0.000000e+00 : f32
      %457 = vector.broadcast %cst_126 : f32 to vector<2x8x128xf32>
      %c0_127 = arith.constant 0 : index
      %c0_128 = arith.constant 0 : index
      %c0_129 = arith.constant 0 : index
      %458 = vector.load %arg14[%c0_127, %c0_128, %c0_129] : memref<2x8x128xf32, #tpu.memory_space<vmem>>, vector<2x8x128xf32>
      tpu.vector_store %arg14[%c0_127, %c0_128, %c0_129], %457 {strides = array<i32>} : memref<2x8x128xf32, #tpu.memory_space<vmem>>, vector<2x8x128xf32>,
      %cst_130 = arith.constant 0.000000e+00 : f32
      %459 = vector.broadcast %cst_130 : f32 to vector<2x8x128xf32>
      %c0_131 = arith.constant 0 : index
      %c0_132 = arith.constant 0 : index
      %c0_133 = arith.constant 0 : index
      %460 = vector.load %arg15[%c0_131, %c0_132, %c0_133] : memref<2x8x128xf32, #tpu.memory_space<vmem>>, vector<2x8x128xf32>
      tpu.vector_store %arg15[%c0_131, %c0_132, %c0_133], %459 {strides = array<i32>} : memref<2x8x128xf32, #tpu.memory_space<vmem>>, vector<2x8x128xf32>,
    } else {
    }
    %c0 = arith.constant 0 : index
    %c0_1 = arith.constant 0 : index
    %3 = vector.load %arg3[%c0, %c0_1] : memref<128x512xf32, #tpu.memory_space<vmem>>, vector<128x512xf32>
    %c0_2 = arith.constant 0 : index
    %c0_3 = arith.constant 0 : index
    %4 = vector.load %arg4[%c0_2, %c0_3] : memref<128x512xf32, #tpu.memory_space<vmem>>, vector<128x512xf32>
    %c0_4 = arith.constant 0 : index
    %c0_5 = arith.constant 0 : index
    %5 = vector.load %arg5[%c0_4, %c0_5] : memref<128x512xf32, #tpu.memory_space<vmem>>, vector<128x512xf32>
    %c0_6 = arith.constant 0 : index
    %c0_7 = arith.constant 0 : index
    %6 = vector.load %arg6[%c0_6, %c0_7] : memref<1x512xf32, #tpu.memory_space<vmem>>, vector<1x512xf32>
    %c0_8 = arith.constant 0 : index
    %c0_9 = arith.constant 0 : index
    %7 = vector.load %arg7[%c0_8, %c0_9] : memref<1x128xf32, #tpu.memory_space<vmem>>, vector<1x128xf32>
    %c0_10 = arith.constant 0 : index
    %c0_11 = arith.constant 0 : index
    %8 = vector.load %arg8[%c0_10, %c0_11] : memref<1x128xf32, #tpu.memory_space<vmem>>, vector<1x128xf32>
    %c0_12 = arith.constant 0 : index
    %c0_13 = arith.constant 0 : index
    %9 = vector.load %arg9[%c0_12, %c0_13] : memref<128x128xf32, #tpu.memory_space<vmem>>, vector<128x128xf32>
    %c0_14 = arith.constant 0 : index
    %c0_15 = arith.constant 0 : index
    %10 = vector.load %arg10[%c0_14, %c0_15] : memref<1x128xf32, #tpu.memory_space<vmem>>, vector<1x128xf32>
    %c0_16 = arith.constant 0 : index
    %c0_17 = arith.constant 0 : index
    %c0_18 = arith.constant 0 : index
    %11 = vector.load %arg14[%c0_16, %c0_17, %c0_18] : memref<2x8x128xf32, #tpu.memory_space<vmem>>, vector<1x8x128xf32>
    %12 = vector.shape_cast %11 : vector<1x8x128xf32> to vector<8x128xf32>
    %c1 = arith.constant 1 : index
    %c0_19 = arith.constant 0 : index
    %c0_20 = arith.constant 0 : index
    %13 = vector.load %arg14[%c1, %c0_19, %c0_20] : memref<2x8x128xf32, #tpu.memory_space<vmem>>, vector<1x8x128xf32>
    %14 = vector.shape_cast %13 : vector<1x8x128xf32> to vector<8x128xf32>
    %c0_21 = arith.constant 0 : index
    %c0_22 = arith.constant 0 : index
    %c0_23 = arith.constant 0 : index
    %15 = vector.load %arg15[%c0_21, %c0_22, %c0_23] : memref<2x8x128xf32, #tpu.memory_space<vmem>>, vector<1x8x128xf32>
    %16 = vector.shape_cast %15 : vector<1x8x128xf32> to vector<8x128xf32>
    %c1_24 = arith.constant 1 : index
    %c0_25 = arith.constant 0 : index
    %c0_26 = arith.constant 0 : index
    %17 = vector.load %arg15[%c1_24, %c0_25, %c0_26] : memref<2x8x128xf32, #tpu.memory_space<vmem>>, vector<1x8x128xf32>
    %18 = vector.shape_cast %17 : vector<1x8x128xf32> to vector<8x128xf32>
    %c0_i32_27 = arith.constant 0 : i32
    %19 = arith.index_cast %c0_i32_27 : i32 to index
    %c0_28 = arith.constant 0 : index
    %c0_29 = arith.constant 0 : index
    %20 = vector.load %arg1[%19, %c0_28, %c0_29] : memref<8x8x512xf32, #tpu.memory_space<vmem>>, vector<1x8x512xf32>
    %21 = vector.shape_cast %20 : vector<1x8x512xf32> to vector<8x512xf32>
    %cst = arith.constant dense<0.000000e+00> : vector<8x512xf32>
    %22 = tpu.matmul %12, %3, %cst {dimension_numbers = #tpu.dot_dimension_numbers<[1], [0], [0], [1], [0, 0, 1, 1], [], []>} : vector<8x128xf32>, vector<128x512xf32>, vector<8x512xf32> -> vector<8x512xf32>
    %23 = arith.addf %21, %22 : vector<8x512xf32>
    %24 = vector.extract_strided_slice %23 {offsets = [0, 0], sizes = [8, 256], strides = [1, 1]} : vector<8x512xf32> to vector<8x256xf32>
    %25 = math.exp %24 : vector<8x256xf32>
    %26 = vector.extract_strided_slice %25 {offsets = [0, 0], sizes = [8, 128], strides = [1, 1]} : vector<8x256xf32> to vector<8x128xf32>
    %27 = vector.extract_strided_slice %25 {offsets = [0, 128], sizes = [8, 128], strides = [1, 1]} : vector<8x256xf32> to vector<8x128xf32>
    %28 = vector.extract_strided_slice %23 {offsets = [0, 256], sizes = [8, 128], strides = [1, 1]} : vector<8x512xf32> to vector<8x128xf32>
    %29 = math.tanh %28 : vector<8x128xf32>
    %30 = vector.extract_strided_slice %23 {offsets = [0, 384], sizes = [8, 128], strides = [1, 1]} : vector<8x512xf32> to vector<8x128xf32>
    %31 = arith.negf %30 : vector<8x128xf32>
    %32 = math.exp %31 : vector<8x128xf32>
    %cst_30 = arith.constant 1.000000e+00 : f32
    %33 = vector.broadcast %cst_30 : f32 to vector<8x128xf32>
    %34 = arith.addf %33, %32 : vector<8x128xf32>
    %35 = arith.divf %33, %34 : vector<8x128xf32>
    %36 = arith.mulf %27, %16 : vector<8x128xf32>
    %37 = arith.mulf %26, %29 : vector<8x128xf32>
    %38 = arith.addf %36, %37 : vector<8x128xf32>
    %39 = math.tanh %38 : vector<8x128xf32>
    %40 = arith.mulf %35, %39 : vector<8x128xf32>
    %cst_31 = arith.constant dense<0.000000e+00> : vector<8x512xf32>
    %41 = tpu.matmul %40, %4, %cst_31 {dimension_numbers = #tpu.dot_dimension_numbers<[1], [0], [0], [1], [0, 0, 1, 1], [], []>} : vector<8x128xf32>, vector<128x512xf32>, vector<8x512xf32> -> vector<8x512xf32>
    %cst_32 = arith.constant dense<0.000000e+00> : vector<8x512xf32>
    %42 = tpu.matmul %14, %5, %cst_32 {dimension_numbers = #tpu.dot_dimension_numbers<[1], [0], [0], [1], [0, 0, 1, 1], [], []>} : vector<8x128xf32>, vector<128x512xf32>, vector<8x512xf32> -> vector<8x512xf32>
    %43 = arith.addf %41, %42 : vector<8x512xf32>
    %44 = vector.broadcast %6 : vector<1x512xf32> to vector<8x512xf32>
    %45 = arith.addf %43, %44 : vector<8x512xf32>
    %46 = vector.extract_strided_slice %45 {offsets = [0, 0], sizes = [8, 256], strides = [1, 1]} : vector<8x512xf32> to vector<8x256xf32>
    %47 = math.exp %46 : vector<8x256xf32>
    %48 = vector.extract_strided_slice %47 {offsets = [0, 0], sizes = [8, 128], strides = [1, 1]} : vector<8x256xf32> to vector<8x128xf32>
    %49 = vector.extract_strided_slice %47 {offsets = [0, 128], sizes = [8, 128], strides = [1, 1]} : vector<8x256xf32> to vector<8x128xf32>
    %50 = vector.extract_strided_slice %45 {offsets = [0, 256], sizes = [8, 128], strides = [1, 1]} : vector<8x512xf32> to vector<8x128xf32>
    %51 = math.tanh %50 : vector<8x128xf32>
    %52 = vector.extract_strided_slice %45 {offsets = [0, 384], sizes = [8, 128], strides = [1, 1]} : vector<8x512xf32> to vector<8x128xf32>
    %53 = arith.negf %52 : vector<8x128xf32>
    %54 = math.exp %53 : vector<8x128xf32>
    %cst_33 = arith.constant 1.000000e+00 : f32
    %55 = vector.broadcast %cst_33 : f32 to vector<8x128xf32>
    %56 = arith.addf %55, %54 : vector<8x128xf32>
    %57 = arith.divf %55, %56 : vector<8x128xf32>
    %58 = arith.mulf %49, %18 : vector<8x128xf32>
    %59 = arith.mulf %48, %51 : vector<8x128xf32>
    %60 = arith.addf %58, %59 : vector<8x128xf32>
    %61 = math.tanh %60 : vector<8x128xf32>
    %62 = arith.mulf %57, %61 : vector<8x128xf32>
    %63 = arith.index_cast %c0_i32_27 : i32 to index
    %c0_34 = arith.constant 0 : index
    %c0_35 = arith.constant 0 : index
    %64 = vector.load %arg16[%63, %c0_34, %c0_35] : memref<8x8x128xf32, #tpu.memory_space<vmem>>, vector<1x8x128xf32>
    %65 = vector.shape_cast %64 : vector<1x8x128xf32> to vector<8x128xf32>
    %66 = vector.shape_cast %62 : vector<8x128xf32> to vector<1x8x128xf32>
    tpu.vector_store %arg16[%63, %c0_34, %c0_35], %66 {strides = array<i32>} : memref<8x8x128xf32, #tpu.memory_space<vmem>>, vector<1x8x128xf32>,
    %c1_i32 = arith.constant 1 : i32
    %67 = arith.index_cast %c1_i32 : i32 to index
    %c0_36 = arith.constant 0 : index
    %c0_37 = arith.constant 0 : index
    %68 = vector.load %arg1[%67, %c0_36, %c0_37] : memref<8x8x512xf32, #tpu.memory_space<vmem>>, vector<1x8x512xf32>
    %69 = vector.shape_cast %68 : vector<1x8x512xf32> to vector<8x512xf32>
    %cst_38 = arith.constant dense<0.000000e+00> : vector<8x512xf32>
    %70 = tpu.matmul %40, %3, %cst_38 {dimension_numbers = #tpu.dot_dimension_numbers<[1], [0], [0], [1], [0, 0, 1, 1], [], []>} : vector<8x128xf32>, vector<128x512xf32>, vector<8x512xf32> -> vector<8x512xf32>
    %71 = arith.addf %69, %70 : vector<8x512xf32>
    %72 = vector.extract_strided_slice %71 {offsets = [0, 0], sizes = [8, 256], strides = [1, 1]} : vector<8x512xf32> to vector<8x256xf32>
    %73 = math.exp %72 : vector<8x256xf32>
    %74 = vector.extract_strided_slice %73 {offsets = [0, 0], sizes = [8, 128], strides = [1, 1]} : vector<8x256xf32> to vector<8x128xf32>
    %75 = vector.extract_strided_slice %73 {offsets = [0, 128], sizes = [8, 128], strides = [1, 1]} : vector<8x256xf32> to vector<8x128xf32>
    %76 = vector.extract_strided_slice %71 {offsets = [0, 256], sizes = [8, 128], strides = [1, 1]} : vector<8x512xf32> to vector<8x128xf32>
    %77 = math.tanh %76 : vector<8x128xf32>
    %78 = vector.extract_strided_slice %71 {offsets = [0, 384], sizes = [8, 128], strides = [1, 1]} : vector<8x512xf32> to vector<8x128xf32>
    %79 = arith.negf %78 : vector<8x128xf32>
    %80 = math.exp %79 : vector<8x128xf32>
    %cst_39 = arith.constant 1.000000e+00 : f32
    %81 = vector.broadcast %cst_39 : f32 to vector<8x128xf32>
    %82 = arith.addf %81, %80 : vector<8x128xf32>
    %83 = arith.divf %81, %82 : vector<8x128xf32>
    %84 = arith.mulf %75, %38 : vector<8x128xf32>
    %85 = arith.mulf %74, %77 : vector<8x128xf32>
    %86 = arith.addf %84, %85 : vector<8x128xf32>
    %87 = math.tanh %86 : vector<8x128xf32>
    %88 = arith.mulf %83, %87 : vector<8x128xf32>
    %cst_40 = arith.constant dense<0.000000e+00> : vector<8x512xf32>
    %89 = tpu.matmul %88, %4, %cst_40 {dimension_numbers = #tpu.dot_dimension_numbers<[1], [0], [0], [1], [0, 0, 1, 1], [], []>} : vector<8x128xf32>, vector<128x512xf32>, vector<8x512xf32> -> vector<8x512xf32>
    %cst_41 = arith.constant dense<0.000000e+00> : vector<8x512xf32>
    %90 = tpu.matmul %62, %5, %cst_41 {dimension_numbers = #tpu.dot_dimension_numbers<[1], [0], [0], [1], [0, 0, 1, 1], [], []>} : vector<8x128xf32>, vector<128x512xf32>, vector<8x512xf32> -> vector<8x512xf32>
    %91 = arith.addf %89, %90 : vector<8x512xf32>
    %92 = vector.broadcast %6 : vector<1x512xf32> to vector<8x512xf32>
    %93 = arith.addf %91, %92 : vector<8x512xf32>
    %94 = vector.extract_strided_slice %93 {offsets = [0, 0], sizes = [8, 256], strides = [1, 1]} : vector<8x512xf32> to vector<8x256xf32>
    %95 = math.exp %94 : vector<8x256xf32>
    %96 = vector.extract_strided_slice %95 {offsets = [0, 0], sizes = [8, 128], strides = [1, 1]} : vector<8x256xf32> to vector<8x128xf32>
    %97 = vector.extract_strided_slice %95 {offsets = [0, 128], sizes = [8, 128], strides = [1, 1]} : vector<8x256xf32> to vector<8x128xf32>
    %98 = vector.extract_strided_slice %93 {offsets = [0, 256], sizes = [8, 128], strides = [1, 1]} : vector<8x512xf32> to vector<8x128xf32>
    %99 = math.tanh %98 : vector<8x128xf32>
    %100 = vector.extract_strided_slice %93 {offsets = [0, 384], sizes = [8, 128], strides = [1, 1]} : vector<8x512xf32> to vector<8x128xf32>
    %101 = arith.negf %100 : vector<8x128xf32>
    %102 = math.exp %101 : vector<8x128xf32>
    %cst_42 = arith.constant 1.000000e+00 : f32
    %103 = vector.broadcast %cst_42 : f32 to vector<8x128xf32>
    %104 = arith.addf %103, %102 : vector<8x128xf32>
    %105 = arith.divf %103, %104 : vector<8x128xf32>
    %106 = arith.mulf %97, %60 : vector<8x128xf32>
    %107 = arith.mulf %96, %99 : vector<8x128xf32>
    %108 = arith.addf %106, %107 : vector<8x128xf32>
    %109 = math.tanh %108 : vector<8x128xf32>
    %110 = arith.mulf %105, %109 : vector<8x128xf32>
    %111 = arith.index_cast %c1_i32 : i32 to index
    %c0_43 = arith.constant 0 : index
    %c0_44 = arith.constant 0 : index
    %112 = vector.load %arg16[%111, %c0_43, %c0_44] : memref<8x8x128xf32, #tpu.memory_space<vmem>>, vector<1x8x128xf32>
    %113 = vector.shape_cast %112 : vector<1x8x128xf32> to vector<8x128xf32>
    %114 = vector.shape_cast %110 : vector<8x128xf32> to vector<1x8x128xf32>
    tpu.vector_store %arg16[%111, %c0_43, %c0_44], %114 {strides = array<i32>} : memref<8x8x128xf32, #tpu.memory_space<vmem>>, vector<1x8x128xf32>,
    %c2_i32 = arith.constant 2 : i32
    %115 = arith.index_cast %c2_i32 : i32 to index
    %c0_45 = arith.constant 0 : index
    %c0_46 = arith.constant 0 : index
    %116 = vector.load %arg1[%115, %c0_45, %c0_46] : memref<8x8x512xf32, #tpu.memory_space<vmem>>, vector<1x8x512xf32>
    %117 = vector.shape_cast %116 : vector<1x8x512xf32> to vector<8x512xf32>
    %cst_47 = arith.constant dense<0.000000e+00> : vector<8x512xf32>
    %118 = tpu.matmul %88, %3, %cst_47 {dimension_numbers = #tpu.dot_dimension_numbers<[1], [0], [0], [1], [0, 0, 1, 1], [], []>} : vector<8x128xf32>, vector<128x512xf32>, vector<8x512xf32> -> vector<8x512xf32>
    %119 = arith.addf %117, %118 : vector<8x512xf32>
    %120 = vector.extract_strided_slice %119 {offsets = [0, 0], sizes = [8, 256], strides = [1, 1]} : vector<8x512xf32> to vector<8x256xf32>
    %121 = math.exp %120 : vector<8x256xf32>
    %122 = vector.extract_strided_slice %121 {offsets = [0, 0], sizes = [8, 128], strides = [1, 1]} : vector<8x256xf32> to vector<8x128xf32>
    %123 = vector.extract_strided_slice %121 {offsets = [0, 128], sizes = [8, 128], strides = [1, 1]} : vector<8x256xf32> to vector<8x128xf32>
    %124 = vector.extract_strided_slice %119 {offsets = [0, 256], sizes = [8, 128], strides = [1, 1]} : vector<8x512xf32> to vector<8x128xf32>
    %125 = math.tanh %124 : vector<8x128xf32>
    %126 = vector.extract_strided_slice %119 {offsets = [0, 384], sizes = [8, 128], strides = [1, 1]} : vector<8x512xf32> to vector<8x128xf32>
    %127 = arith.negf %126 : vector<8x128xf32>
    %128 = math.exp %127 : vector<8x128xf32>
    %cst_48 = arith.constant 1.000000e+00 : f32
    %129 = vector.broadcast %cst_48 : f32 to vector<8x128xf32>
    %130 = arith.addf %129, %128 : vector<8x128xf32>
    %131 = arith.divf %129, %130 : vector<8x128xf32>
    %132 = arith.mulf %123, %86 : vector<8x128xf32>
    %133 = arith.mulf %122, %125 : vector<8x128xf32>
    %134 = arith.addf %132, %133 : vector<8x128xf32>
    %135 = math.tanh %134 : vector<8x128xf32>
    %136 = arith.mulf %131, %135 : vector<8x128xf32>
    %cst_49 = arith.constant dense<0.000000e+00> : vector<8x512xf32>
    %137 = tpu.matmul %136, %4, %cst_49 {dimension_numbers = #tpu.dot_dimension_numbers<[1], [0], [0], [1], [0, 0, 1, 1], [], []>} : vector<8x128xf32>, vector<128x512xf32>, vector<8x512xf32> -> vector<8x512xf32>
    %cst_50 = arith.constant dense<0.000000e+00> : vector<8x512xf32>
    %138 = tpu.matmul %110, %5, %cst_50 {dimension_numbers = #tpu.dot_dimension_numbers<[1], [0], [0], [1], [0, 0, 1, 1], [], []>} : vector<8x128xf32>, vector<128x512xf32>, vector<8x512xf32> -> vector<8x512xf32>
    %139 = arith.addf %137, %138 : vector<8x512xf32>
    %140 = vector.broadcast %6 : vector<1x512xf32> to vector<8x512xf32>
    %141 = arith.addf %139, %140 : vector<8x512xf32>
    %142 = vector.extract_strided_slice %141 {offsets = [0, 0], sizes = [8, 256], strides = [1, 1]} : vector<8x512xf32> to vector<8x256xf32>
    %143 = math.exp %142 : vector<8x256xf32>
    %144 = vector.extract_strided_slice %143 {offsets = [0, 0], sizes = [8, 128], strides = [1, 1]} : vector<8x256xf32> to vector<8x128xf32>
    %145 = vector.extract_strided_slice %143 {offsets = [0, 128], sizes = [8, 128], strides = [1, 1]} : vector<8x256xf32> to vector<8x128xf32>
    %146 = vector.extract_strided_slice %141 {offsets = [0, 256], sizes = [8, 128], strides = [1, 1]} : vector<8x512xf32> to vector<8x128xf32>
    %147 = math.tanh %146 : vector<8x128xf32>
    %148 = vector.extract_strided_slice %141 {offsets = [0, 384], sizes = [8, 128], strides = [1, 1]} : vector<8x512xf32> to vector<8x128xf32>
    %149 = arith.negf %148 : vector<8x128xf32>
    %150 = math.exp %149 : vector<8x128xf32>
    %cst_51 = arith.constant 1.000000e+00 : f32
    %151 = vector.broadcast %cst_51 : f32 to vector<8x128xf32>
    %152 = arith.addf %151, %150 : vector<8x128xf32>
    %153 = arith.divf %151, %152 : vector<8x128xf32>
    %154 = arith.mulf %145, %108 : vector<8x128xf32>
    %155 = arith.mulf %144, %147 : vector<8x128xf32>
    %156 = arith.addf %154, %155 : vector<8x128xf32>
    %157 = math.tanh %156 : vector<8x128xf32>
    %158 = arith.mulf %153, %157 : vector<8x128xf32>
    %159 = arith.index_cast %c2_i32 : i32 to index
    %c0_52 = arith.constant 0 : index
    %c0_53 = arith.constant 0 : index
    %160 = vector.load %arg16[%159, %c0_52, %c0_53] : memref<8x8x128xf32, #tpu.memory_space<vmem>>, vector<1x8x128xf32>
    %161 = vector.shape_cast %160 : vector<1x8x128xf32> to vector<8x128xf32>
    %162 = vector.shape_cast %158 : vector<8x128xf32> to vector<1x8x128xf32>
    tpu.vector_store %arg16[%159, %c0_52, %c0_53], %162 {strides = array<i32>} : memref<8x8x128xf32, #tpu.memory_space<vmem>>, vector<1x8x128xf32>,
    %c3_i32 = arith.constant 3 : i32
    %163 = arith.index_cast %c3_i32 : i32 to index
    %c0_54 = arith.constant 0 : index
    %c0_55 = arith.constant 0 : index
    %164 = vector.load %arg1[%163, %c0_54, %c0_55] : memref<8x8x512xf32, #tpu.memory_space<vmem>>, vector<1x8x512xf32>
    %165 = vector.shape_cast %164 : vector<1x8x512xf32> to vector<8x512xf32>
    %cst_56 = arith.constant dense<0.000000e+00> : vector<8x512xf32>
    %166 = tpu.matmul %136, %3, %cst_56 {dimension_numbers = #tpu.dot_dimension_numbers<[1], [0], [0], [1], [0, 0, 1, 1], [], []>} : vector<8x128xf32>, vector<128x512xf32>, vector<8x512xf32> -> vector<8x512xf32>
    %167 = arith.addf %165, %166 : vector<8x512xf32>
    %168 = vector.extract_strided_slice %167 {offsets = [0, 0], sizes = [8, 256], strides = [1, 1]} : vector<8x512xf32> to vector<8x256xf32>
    %169 = math.exp %168 : vector<8x256xf32>
    %170 = vector.extract_strided_slice %169 {offsets = [0, 0], sizes = [8, 128], strides = [1, 1]} : vector<8x256xf32> to vector<8x128xf32>
    %171 = vector.extract_strided_slice %169 {offsets = [0, 128], sizes = [8, 128], strides = [1, 1]} : vector<8x256xf32> to vector<8x128xf32>
    %172 = vector.extract_strided_slice %167 {offsets = [0, 256], sizes = [8, 128], strides = [1, 1]} : vector<8x512xf32> to vector<8x128xf32>
    %173 = math.tanh %172 : vector<8x128xf32>
    %174 = vector.extract_strided_slice %167 {offsets = [0, 384], sizes = [8, 128], strides = [1, 1]} : vector<8x512xf32> to vector<8x128xf32>
    %175 = arith.negf %174 : vector<8x128xf32>
    %176 = math.exp %175 : vector<8x128xf32>
    %cst_57 = arith.constant 1.000000e+00 : f32
    %177 = vector.broadcast %cst_57 : f32 to vector<8x128xf32>
    %178 = arith.addf %177, %176 : vector<8x128xf32>
    %179 = arith.divf %177, %178 : vector<8x128xf32>
    %180 = arith.mulf %171, %134 : vector<8x128xf32>
    %181 = arith.mulf %170, %173 : vector<8x128xf32>
    %182 = arith.addf %180, %181 : vector<8x128xf32>
    %183 = math.tanh %182 : vector<8x128xf32>
    %184 = arith.mulf %179, %183 : vector<8x128xf32>
    %cst_58 = arith.constant dense<0.000000e+00> : vector<8x512xf32>
    %185 = tpu.matmul %184, %4, %cst_58 {dimension_numbers = #tpu.dot_dimension_numbers<[1], [0], [0], [1], [0, 0, 1, 1], [], []>} : vector<8x128xf32>, vector<128x512xf32>, vector<8x512xf32> -> vector<8x512xf32>
    %cst_59 = arith.constant dense<0.000000e+00> : vector<8x512xf32>
    %186 = tpu.matmul %158, %5, %cst_59 {dimension_numbers = #tpu.dot_dimension_numbers<[1], [0], [0], [1], [0, 0, 1, 1], [], []>} : vector<8x128xf32>, vector<128x512xf32>, vector<8x512xf32> -> vector<8x512xf32>
    %187 = arith.addf %185, %186 : vector<8x512xf32>
    %188 = vector.broadcast %6 : vector<1x512xf32> to vector<8x512xf32>
    %189 = arith.addf %187, %188 : vector<8x512xf32>
    %190 = vector.extract_strided_slice %189 {offsets = [0, 0], sizes = [8, 256], strides = [1, 1]} : vector<8x512xf32> to vector<8x256xf32>
    %191 = math.exp %190 : vector<8x256xf32>
    %192 = vector.extract_strided_slice %191 {offsets = [0, 0], sizes = [8, 128], strides = [1, 1]} : vector<8x256xf32> to vector<8x128xf32>
    %193 = vector.extract_strided_slice %191 {offsets = [0, 128], sizes = [8, 128], strides = [1, 1]} : vector<8x256xf32> to vector<8x128xf32>
    %194 = vector.extract_strided_slice %189 {offsets = [0, 256], sizes = [8, 128], strides = [1, 1]} : vector<8x512xf32> to vector<8x128xf32>
    %195 = math.tanh %194 : vector<8x128xf32>
    %196 = vector.extract_strided_slice %189 {offsets = [0, 384], sizes = [8, 128], strides = [1, 1]} : vector<8x512xf32> to vector<8x128xf32>
    %197 = arith.negf %196 : vector<8x128xf32>
    %198 = math.exp %197 : vector<8x128xf32>
    %cst_60 = arith.constant 1.000000e+00 : f32
    %199 = vector.broadcast %cst_60 : f32 to vector<8x128xf32>
    %200 = arith.addf %199, %198 : vector<8x128xf32>
    %201 = arith.divf %199, %200 : vector<8x128xf32>
    %202 = arith.mulf %193, %156 : vector<8x128xf32>
    %203 = arith.mulf %192, %195 : vector<8x128xf32>
    %204 = arith.addf %202, %203 : vector<8x128xf32>
    %205 = math.tanh %204 : vector<8x128xf32>
    %206 = arith.mulf %201, %205 : vector<8x128xf32>
    %207 = arith.index_cast %c3_i32 : i32 to index
    %c0_61 = arith.constant 0 : index
    %c0_62 = arith.constant 0 : index
    %208 = vector.load %arg16[%207, %c0_61, %c0_62] : memref<8x8x128xf32, #tpu.memory_space<vmem>>, vector<1x8x128xf32>
    %209 = vector.shape_cast %208 : vector<1x8x128xf32> to vector<8x128xf32>
    %210 = vector.shape_cast %206 : vector<8x128xf32> to vector<1x8x128xf32>
    tpu.vector_store %arg16[%207, %c0_61, %c0_62], %210 {strides = array<i32>} : memref<8x8x128xf32, #tpu.memory_space<vmem>>, vector<1x8x128xf32>,
    %c4_i32 = arith.constant 4 : i32
    %211 = arith.index_cast %c4_i32 : i32 to index
    %c0_63 = arith.constant 0 : index
    %c0_64 = arith.constant 0 : index
    %212 = vector.load %arg1[%211, %c0_63, %c0_64] : memref<8x8x512xf32, #tpu.memory_space<vmem>>, vector<1x8x512xf32>
    %213 = vector.shape_cast %212 : vector<1x8x512xf32> to vector<8x512xf32>
    %cst_65 = arith.constant dense<0.000000e+00> : vector<8x512xf32>
    %214 = tpu.matmul %184, %3, %cst_65 {dimension_numbers = #tpu.dot_dimension_numbers<[1], [0], [0], [1], [0, 0, 1, 1], [], []>} : vector<8x128xf32>, vector<128x512xf32>, vector<8x512xf32> -> vector<8x512xf32>
    %215 = arith.addf %213, %214 : vector<8x512xf32>
    %216 = vector.extract_strided_slice %215 {offsets = [0, 0], sizes = [8, 256], strides = [1, 1]} : vector<8x512xf32> to vector<8x256xf32>
    %217 = math.exp %216 : vector<8x256xf32>
    %218 = vector.extract_strided_slice %217 {offsets = [0, 0], sizes = [8, 128], strides = [1, 1]} : vector<8x256xf32> to vector<8x128xf32>
    %219 = vector.extract_strided_slice %217 {offsets = [0, 128], sizes = [8, 128], strides = [1, 1]} : vector<8x256xf32> to vector<8x128xf32>
    %220 = vector.extract_strided_slice %215 {offsets = [0, 256], sizes = [8, 128], strides = [1, 1]} : vector<8x512xf32> to vector<8x128xf32>
    %221 = math.tanh %220 : vector<8x128xf32>
    %222 = vector.extract_strided_slice %215 {offsets = [0, 384], sizes = [8, 128], strides = [1, 1]} : vector<8x512xf32> to vector<8x128xf32>
    %223 = arith.negf %222 : vector<8x128xf32>
    %224 = math.exp %223 : vector<8x128xf32>
    %cst_66 = arith.constant 1.000000e+00 : f32
    %225 = vector.broadcast %cst_66 : f32 to vector<8x128xf32>
    %226 = arith.addf %225, %224 : vector<8x128xf32>
    %227 = arith.divf %225, %226 : vector<8x128xf32>
    %228 = arith.mulf %219, %182 : vector<8x128xf32>
    %229 = arith.mulf %218, %221 : vector<8x128xf32>
    %230 = arith.addf %228, %229 : vector<8x128xf32>
    %231 = math.tanh %230 : vector<8x128xf32>
    %232 = arith.mulf %227, %231 : vector<8x128xf32>
    %cst_67 = arith.constant dense<0.000000e+00> : vector<8x512xf32>
    %233 = tpu.matmul %232, %4, %cst_67 {dimension_numbers = #tpu.dot_dimension_numbers<[1], [0], [0], [1], [0, 0, 1, 1], [], []>} : vector<8x128xf32>, vector<128x512xf32>, vector<8x512xf32> -> vector<8x512xf32>
    %cst_68 = arith.constant dense<0.000000e+00> : vector<8x512xf32>
    %234 = tpu.matmul %206, %5, %cst_68 {dimension_numbers = #tpu.dot_dimension_numbers<[1], [0], [0], [1], [0, 0, 1, 1], [], []>} : vector<8x128xf32>, vector<128x512xf32>, vector<8x512xf32> -> vector<8x512xf32>
    %235 = arith.addf %233, %234 : vector<8x512xf32>
    %236 = vector.broadcast %6 : vector<1x512xf32> to vector<8x512xf32>
    %237 = arith.addf %235, %236 : vector<8x512xf32>
    %238 = vector.extract_strided_slice %237 {offsets = [0, 0], sizes = [8, 256], strides = [1, 1]} : vector<8x512xf32> to vector<8x256xf32>
    %239 = math.exp %238 : vector<8x256xf32>
    %240 = vector.extract_strided_slice %239 {offsets = [0, 0], sizes = [8, 128], strides = [1, 1]} : vector<8x256xf32> to vector<8x128xf32>
    %241 = vector.extract_strided_slice %239 {offsets = [0, 128], sizes = [8, 128], strides = [1, 1]} : vector<8x256xf32> to vector<8x128xf32>
    %242 = vector.extract_strided_slice %237 {offsets = [0, 256], sizes = [8, 128], strides = [1, 1]} : vector<8x512xf32> to vector<8x128xf32>
    %243 = math.tanh %242 : vector<8x128xf32>
    %244 = vector.extract_strided_slice %237 {offsets = [0, 384], sizes = [8, 128], strides = [1, 1]} : vector<8x512xf32> to vector<8x128xf32>
    %245 = arith.negf %244 : vector<8x128xf32>
    %246 = math.exp %245 : vector<8x128xf32>
    %cst_69 = arith.constant 1.000000e+00 : f32
    %247 = vector.broadcast %cst_69 : f32 to vector<8x128xf32>
    %248 = arith.addf %247, %246 : vector<8x128xf32>
    %249 = arith.divf %247, %248 : vector<8x128xf32>
    %250 = arith.mulf %241, %204 : vector<8x128xf32>
    %251 = arith.mulf %240, %243 : vector<8x128xf32>
    %252 = arith.addf %250, %251 : vector<8x128xf32>
    %253 = math.tanh %252 : vector<8x128xf32>
    %254 = arith.mulf %249, %253 : vector<8x128xf32>
    %255 = arith.index_cast %c4_i32 : i32 to index
    %c0_70 = arith.constant 0 : index
    %c0_71 = arith.constant 0 : index
    %256 = vector.load %arg16[%255, %c0_70, %c0_71] : memref<8x8x128xf32, #tpu.memory_space<vmem>>, vector<1x8x128xf32>
    %257 = vector.shape_cast %256 : vector<1x8x128xf32> to vector<8x128xf32>
    %258 = vector.shape_cast %254 : vector<8x128xf32> to vector<1x8x128xf32>
    tpu.vector_store %arg16[%255, %c0_70, %c0_71], %258 {strides = array<i32>} : memref<8x8x128xf32, #tpu.memory_space<vmem>>, vector<1x8x128xf32>,
    %c5_i32 = arith.constant 5 : i32
    %259 = arith.index_cast %c5_i32 : i32 to index
    %c0_72 = arith.constant 0 : index
    %c0_73 = arith.constant 0 : index
    %260 = vector.load %arg1[%259, %c0_72, %c0_73] : memref<8x8x512xf32, #tpu.memory_space<vmem>>, vector<1x8x512xf32>
    %261 = vector.shape_cast %260 : vector<1x8x512xf32> to vector<8x512xf32>
    %cst_74 = arith.constant dense<0.000000e+00> : vector<8x512xf32>
    %262 = tpu.matmul %232, %3, %cst_74 {dimension_numbers = #tpu.dot_dimension_numbers<[1], [0], [0], [1], [0, 0, 1, 1], [], []>} : vector<8x128xf32>, vector<128x512xf32>, vector<8x512xf32> -> vector<8x512xf32>
    %263 = arith.addf %261, %262 : vector<8x512xf32>
    %264 = vector.extract_strided_slice %263 {offsets = [0, 0], sizes = [8, 256], strides = [1, 1]} : vector<8x512xf32> to vector<8x256xf32>
    %265 = math.exp %264 : vector<8x256xf32>
    %266 = vector.extract_strided_slice %265 {offsets = [0, 0], sizes = [8, 128], strides = [1, 1]} : vector<8x256xf32> to vector<8x128xf32>
    %267 = vector.extract_strided_slice %265 {offsets = [0, 128], sizes = [8, 128], strides = [1, 1]} : vector<8x256xf32> to vector<8x128xf32>
    %268 = vector.extract_strided_slice %263 {offsets = [0, 256], sizes = [8, 128], strides = [1, 1]} : vector<8x512xf32> to vector<8x128xf32>
    %269 = math.tanh %268 : vector<8x128xf32>
    %270 = vector.extract_strided_slice %263 {offsets = [0, 384], sizes = [8, 128], strides = [1, 1]} : vector<8x512xf32> to vector<8x128xf32>
    %271 = arith.negf %270 : vector<8x128xf32>
    %272 = math.exp %271 : vector<8x128xf32>
    %cst_75 = arith.constant 1.000000e+00 : f32
    %273 = vector.broadcast %cst_75 : f32 to vector<8x128xf32>
    %274 = arith.addf %273, %272 : vector<8x128xf32>
    %275 = arith.divf %273, %274 : vector<8x128xf32>
    %276 = arith.mulf %267, %230 : vector<8x128xf32>
    %277 = arith.mulf %266, %269 : vector<8x128xf32>
    %278 = arith.addf %276, %277 : vector<8x128xf32>
    %279 = math.tanh %278 : vector<8x128xf32>
    %280 = arith.mulf %275, %279 : vector<8x128xf32>
    %cst_76 = arith.constant dense<0.000000e+00> : vector<8x512xf32>
    %281 = tpu.matmul %280, %4, %cst_76 {dimension_numbers = #tpu.dot_dimension_numbers<[1], [0], [0], [1], [0, 0, 1, 1], [], []>} : vector<8x128xf32>, vector<128x512xf32>, vector<8x512xf32> -> vector<8x512xf32>
    %cst_77 = arith.constant dense<0.000000e+00> : vector<8x512xf32>
    %282 = tpu.matmul %254, %5, %cst_77 {dimension_numbers = #tpu.dot_dimension_numbers<[1], [0], [0], [1], [0, 0, 1, 1], [], []>} : vector<8x128xf32>, vector<128x512xf32>, vector<8x512xf32> -> vector<8x512xf32>
    %283 = arith.addf %281, %282 : vector<8x512xf32>
    %284 = vector.broadcast %6 : vector<1x512xf32> to vector<8x512xf32>
    %285 = arith.addf %283, %284 : vector<8x512xf32>
    %286 = vector.extract_strided_slice %285 {offsets = [0, 0], sizes = [8, 256], strides = [1, 1]} : vector<8x512xf32> to vector<8x256xf32>
    %287 = math.exp %286 : vector<8x256xf32>
    %288 = vector.extract_strided_slice %287 {offsets = [0, 0], sizes = [8, 128], strides = [1, 1]} : vector<8x256xf32> to vector<8x128xf32>
    %289 = vector.extract_strided_slice %287 {offsets = [0, 128], sizes = [8, 128], strides = [1, 1]} : vector<8x256xf32> to vector<8x128xf32>
    %290 = vector.extract_strided_slice %285 {offsets = [0, 256], sizes = [8, 128], strides = [1, 1]} : vector<8x512xf32> to vector<8x128xf32>
    %291 = math.tanh %290 : vector<8x128xf32>
    %292 = vector.extract_strided_slice %285 {offsets = [0, 384], sizes = [8, 128], strides = [1, 1]} : vector<8x512xf32> to vector<8x128xf32>
    %293 = arith.negf %292 : vector<8x128xf32>
    %294 = math.exp %293 : vector<8x128xf32>
    %cst_78 = arith.constant 1.000000e+00 : f32
    %295 = vector.broadcast %cst_78 : f32 to vector<8x128xf32>
    %296 = arith.addf %295, %294 : vector<8x128xf32>
    %297 = arith.divf %295, %296 : vector<8x128xf32>
    %298 = arith.mulf %289, %252 : vector<8x128xf32>
    %299 = arith.mulf %288, %291 : vector<8x128xf32>
    %300 = arith.addf %298, %299 : vector<8x128xf32>
    %301 = math.tanh %300 : vector<8x128xf32>
    %302 = arith.mulf %297, %301 : vector<8x128xf32>
    %303 = arith.index_cast %c5_i32 : i32 to index
    %c0_79 = arith.constant 0 : index
    %c0_80 = arith.constant 0 : index
    %304 = vector.load %arg16[%303, %c0_79, %c0_80] : memref<8x8x128xf32, #tpu.memory_space<vmem>>, vector<1x8x128xf32>
    %305 = vector.shape_cast %304 : vector<1x8x128xf32> to vector<8x128xf32>
    %306 = vector.shape_cast %302 : vector<8x128xf32> to vector<1x8x128xf32>
    tpu.vector_store %arg16[%303, %c0_79, %c0_80], %306 {strides = array<i32>} : memref<8x8x128xf32, #tpu.memory_space<vmem>>, vector<1x8x128xf32>,
    %c6_i32 = arith.constant 6 : i32
    %307 = arith.index_cast %c6_i32 : i32 to index
    %c0_81 = arith.constant 0 : index
    %c0_82 = arith.constant 0 : index
    %308 = vector.load %arg1[%307, %c0_81, %c0_82] : memref<8x8x512xf32, #tpu.memory_space<vmem>>, vector<1x8x512xf32>
    %309 = vector.shape_cast %308 : vector<1x8x512xf32> to vector<8x512xf32>
    %cst_83 = arith.constant dense<0.000000e+00> : vector<8x512xf32>
    %310 = tpu.matmul %280, %3, %cst_83 {dimension_numbers = #tpu.dot_dimension_numbers<[1], [0], [0], [1], [0, 0, 1, 1], [], []>} : vector<8x128xf32>, vector<128x512xf32>, vector<8x512xf32> -> vector<8x512xf32>
    %311 = arith.addf %309, %310 : vector<8x512xf32>
    %312 = vector.extract_strided_slice %311 {offsets = [0, 0], sizes = [8, 256], strides = [1, 1]} : vector<8x512xf32> to vector<8x256xf32>
    %313 = math.exp %312 : vector<8x256xf32>
    %314 = vector.extract_strided_slice %313 {offsets = [0, 0], sizes = [8, 128], strides = [1, 1]} : vector<8x256xf32> to vector<8x128xf32>
    %315 = vector.extract_strided_slice %313 {offsets = [0, 128], sizes = [8, 128], strides = [1, 1]} : vector<8x256xf32> to vector<8x128xf32>
    %316 = vector.extract_strided_slice %311 {offsets = [0, 256], sizes = [8, 128], strides = [1, 1]} : vector<8x512xf32> to vector<8x128xf32>
    %317 = math.tanh %316 : vector<8x128xf32>
    %318 = vector.extract_strided_slice %311 {offsets = [0, 384], sizes = [8, 128], strides = [1, 1]} : vector<8x512xf32> to vector<8x128xf32>
    %319 = arith.negf %318 : vector<8x128xf32>
    %320 = math.exp %319 : vector<8x128xf32>
    %cst_84 = arith.constant 1.000000e+00 : f32
    %321 = vector.broadcast %cst_84 : f32 to vector<8x128xf32>
    %322 = arith.addf %321, %320 : vector<8x128xf32>
    %323 = arith.divf %321, %322 : vector<8x128xf32>
    %324 = arith.mulf %315, %278 : vector<8x128xf32>
    %325 = arith.mulf %314, %317 : vector<8x128xf32>
    %326 = arith.addf %324, %325 : vector<8x128xf32>
    %327 = math.tanh %326 : vector<8x128xf32>
    %328 = arith.mulf %323, %327 : vector<8x128xf32>
    %cst_85 = arith.constant dense<0.000000e+00> : vector<8x512xf32>
    %329 = tpu.matmul %328, %4, %cst_85 {dimension_numbers = #tpu.dot_dimension_numbers<[1], [0], [0], [1], [0, 0, 1, 1], [], []>} : vector<8x128xf32>, vector<128x512xf32>, vector<8x512xf32> -> vector<8x512xf32>
    %cst_86 = arith.constant dense<0.000000e+00> : vector<8x512xf32>
    %330 = tpu.matmul %302, %5, %cst_86 {dimension_numbers = #tpu.dot_dimension_numbers<[1], [0], [0], [1], [0, 0, 1, 1], [], []>} : vector<8x128xf32>, vector<128x512xf32>, vector<8x512xf32> -> vector<8x512xf32>
    %331 = arith.addf %329, %330 : vector<8x512xf32>
    %332 = vector.broadcast %6 : vector<1x512xf32> to vector<8x512xf32>
    %333 = arith.addf %331, %332 : vector<8x512xf32>
    %334 = vector.extract_strided_slice %333 {offsets = [0, 0], sizes = [8, 256], strides = [1, 1]} : vector<8x512xf32> to vector<8x256xf32>
    %335 = math.exp %334 : vector<8x256xf32>
    %336 = vector.extract_strided_slice %335 {offsets = [0, 0], sizes = [8, 128], strides = [1, 1]} : vector<8x256xf32> to vector<8x128xf32>
    %337 = vector.extract_strided_slice %335 {offsets = [0, 128], sizes = [8, 128], strides = [1, 1]} : vector<8x256xf32> to vector<8x128xf32>
    %338 = vector.extract_strided_slice %333 {offsets = [0, 256], sizes = [8, 128], strides = [1, 1]} : vector<8x512xf32> to vector<8x128xf32>
    %339 = math.tanh %338 : vector<8x128xf32>
    %340 = vector.extract_strided_slice %333 {offsets = [0, 384], sizes = [8, 128], strides = [1, 1]} : vector<8x512xf32> to vector<8x128xf32>
    %341 = arith.negf %340 : vector<8x128xf32>
    %342 = math.exp %341 : vector<8x128xf32>
    %cst_87 = arith.constant 1.000000e+00 : f32
    %343 = vector.broadcast %cst_87 : f32 to vector<8x128xf32>
    %344 = arith.addf %343, %342 : vector<8x128xf32>
    %345 = arith.divf %343, %344 : vector<8x128xf32>
    %346 = arith.mulf %337, %300 : vector<8x128xf32>
    %347 = arith.mulf %336, %339 : vector<8x128xf32>
    %348 = arith.addf %346, %347 : vector<8x128xf32>
    %349 = math.tanh %348 : vector<8x128xf32>
    %350 = arith.mulf %345, %349 : vector<8x128xf32>
    %351 = arith.index_cast %c6_i32 : i32 to index
    %c0_88 = arith.constant 0 : index
    %c0_89 = arith.constant 0 : index
    %352 = vector.load %arg16[%351, %c0_88, %c0_89] : memref<8x8x128xf32, #tpu.memory_space<vmem>>, vector<1x8x128xf32>
    %353 = vector.shape_cast %352 : vector<1x8x128xf32> to vector<8x128xf32>
    %354 = vector.shape_cast %350 : vector<8x128xf32> to vector<1x8x128xf32>
    tpu.vector_store %arg16[%351, %c0_88, %c0_89], %354 {strides = array<i32>} : memref<8x8x128xf32, #tpu.memory_space<vmem>>, vector<1x8x128xf32>,
    %c7_i32 = arith.constant 7 : i32
    %355 = arith.index_cast %c7_i32 : i32 to index
    %c0_90 = arith.constant 0 : index
    %c0_91 = arith.constant 0 : index
    %356 = vector.load %arg1[%355, %c0_90, %c0_91] : memref<8x8x512xf32, #tpu.memory_space<vmem>>, vector<1x8x512xf32>
    %357 = vector.shape_cast %356 : vector<1x8x512xf32> to vector<8x512xf32>
    %cst_92 = arith.constant dense<0.000000e+00> : vector<8x512xf32>
    %358 = tpu.matmul %328, %3, %cst_92 {dimension_numbers = #tpu.dot_dimension_numbers<[1], [0], [0], [1], [0, 0, 1, 1], [], []>} : vector<8x128xf32>, vector<128x512xf32>, vector<8x512xf32> -> vector<8x512xf32>
    %359 = arith.addf %357, %358 : vector<8x512xf32>
    %360 = vector.extract_strided_slice %359 {offsets = [0, 0], sizes = [8, 256], strides = [1, 1]} : vector<8x512xf32> to vector<8x256xf32>
    %361 = math.exp %360 : vector<8x256xf32>
    %362 = vector.extract_strided_slice %361 {offsets = [0, 0], sizes = [8, 128], strides = [1, 1]} : vector<8x256xf32> to vector<8x128xf32>
    %363 = vector.extract_strided_slice %361 {offsets = [0, 128], sizes = [8, 128], strides = [1, 1]} : vector<8x256xf32> to vector<8x128xf32>
    %364 = vector.extract_strided_slice %359 {offsets = [0, 256], sizes = [8, 128], strides = [1, 1]} : vector<8x512xf32> to vector<8x128xf32>
    %365 = math.tanh %364 : vector<8x128xf32>
    %366 = vector.extract_strided_slice %359 {offsets = [0, 384], sizes = [8, 128], strides = [1, 1]} : vector<8x512xf32> to vector<8x128xf32>
    %367 = arith.negf %366 : vector<8x128xf32>
    %368 = math.exp %367 : vector<8x128xf32>
    %cst_93 = arith.constant 1.000000e+00 : f32
    %369 = vector.broadcast %cst_93 : f32 to vector<8x128xf32>
    %370 = arith.addf %369, %368 : vector<8x128xf32>
    %371 = arith.divf %369, %370 : vector<8x128xf32>
    %372 = arith.mulf %363, %326 : vector<8x128xf32>
    %373 = arith.mulf %362, %365 : vector<8x128xf32>
    %374 = arith.addf %372, %373 : vector<8x128xf32>
    %375 = math.tanh %374 : vector<8x128xf32>
    %376 = arith.mulf %371, %375 : vector<8x128xf32>
    %cst_94 = arith.constant dense<0.000000e+00> : vector<8x512xf32>
    %377 = tpu.matmul %376, %4, %cst_94 {dimension_numbers = #tpu.dot_dimension_numbers<[1], [0], [0], [1], [0, 0, 1, 1], [], []>} : vector<8x128xf32>, vector<128x512xf32>, vector<8x512xf32> -> vector<8x512xf32>
    %cst_95 = arith.constant dense<0.000000e+00> : vector<8x512xf32>
    %378 = tpu.matmul %350, %5, %cst_95 {dimension_numbers = #tpu.dot_dimension_numbers<[1], [0], [0], [1], [0, 0, 1, 1], [], []>} : vector<8x128xf32>, vector<128x512xf32>, vector<8x512xf32> -> vector<8x512xf32>
    %379 = arith.addf %377, %378 : vector<8x512xf32>
    %380 = vector.broadcast %6 : vector<1x512xf32> to vector<8x512xf32>
    %381 = arith.addf %379, %380 : vector<8x512xf32>
    %382 = vector.extract_strided_slice %381 {offsets = [0, 0], sizes = [8, 256], strides = [1, 1]} : vector<8x512xf32> to vector<8x256xf32>
    %383 = math.exp %382 : vector<8x256xf32>
    %384 = vector.extract_strided_slice %383 {offsets = [0, 0], sizes = [8, 128], strides = [1, 1]} : vector<8x256xf32> to vector<8x128xf32>
    %385 = vector.extract_strided_slice %383 {offsets = [0, 128], sizes = [8, 128], strides = [1, 1]} : vector<8x256xf32> to vector<8x128xf32>
    %386 = vector.extract_strided_slice %381 {offsets = [0, 256], sizes = [8, 128], strides = [1, 1]} : vector<8x512xf32> to vector<8x128xf32>
    %387 = math.tanh %386 : vector<8x128xf32>
    %388 = vector.extract_strided_slice %381 {offsets = [0, 384], sizes = [8, 128], strides = [1, 1]} : vector<8x512xf32> to vector<8x128xf32>
    %389 = arith.negf %388 : vector<8x128xf32>
    %390 = math.exp %389 : vector<8x128xf32>
    %cst_96 = arith.constant 1.000000e+00 : f32
    %391 = vector.broadcast %cst_96 : f32 to vector<8x128xf32>
    %392 = arith.addf %391, %390 : vector<8x128xf32>
    %393 = arith.divf %391, %392 : vector<8x128xf32>
    %394 = arith.mulf %385, %348 : vector<8x128xf32>
    %395 = arith.mulf %384, %387 : vector<8x128xf32>
    %396 = arith.addf %394, %395 : vector<8x128xf32>
    %397 = math.tanh %396 : vector<8x128xf32>
    %398 = arith.mulf %393, %397 : vector<8x128xf32>
    %399 = arith.index_cast %c7_i32 : i32 to index
    %c0_97 = arith.constant 0 : index
    %c0_98 = arith.constant 0 : index
    %400 = vector.load %arg16[%399, %c0_97, %c0_98] : memref<8x8x128xf32, #tpu.memory_space<vmem>>, vector<1x8x128xf32>
    %401 = vector.shape_cast %400 : vector<1x8x128xf32> to vector<8x128xf32>
    %402 = vector.shape_cast %398 : vector<8x128xf32> to vector<1x8x128xf32>
    tpu.vector_store %arg16[%399, %c0_97, %c0_98], %402 {strides = array<i32>} : memref<8x8x128xf32, #tpu.memory_space<vmem>>, vector<1x8x128xf32>,
    %c8_i32 = arith.constant 8 : i32
    %403 = vector.shape_cast %376 : vector<8x128xf32> to vector<1x8x128xf32>
    %404 = vector.shape_cast %398 : vector<8x128xf32> to vector<1x8x128xf32>
    %405 = tpu.concatenate %403, %404 in 0 : vector<1x8x128xf32>, vector<1x8x128xf32> -> vector<2x8x128xf32>
    %c0_99 = arith.constant 0 : index
    %c0_100 = arith.constant 0 : index
    %c0_101 = arith.constant 0 : index
    %406 = vector.load %arg14[%c0_99, %c0_100, %c0_101] : memref<2x8x128xf32, #tpu.memory_space<vmem>>, vector<2x8x128xf32>
    tpu.vector_store %arg14[%c0_99, %c0_100, %c0_101], %405 {strides = array<i32>} : memref<2x8x128xf32, #tpu.memory_space<vmem>>, vector<2x8x128xf32>,
    %407 = vector.shape_cast %374 : vector<8x128xf32> to vector<1x8x128xf32>
    %408 = vector.shape_cast %396 : vector<8x128xf32> to vector<1x8x128xf32>
    %409 = tpu.concatenate %407, %408 in 0 : vector<1x8x128xf32>, vector<1x8x128xf32> -> vector<2x8x128xf32>
    %c0_102 = arith.constant 0 : index
    %c0_103 = arith.constant 0 : index
    %c0_104 = arith.constant 0 : index
    %410 = vector.load %arg15[%c0_102, %c0_103, %c0_104] : memref<2x8x128xf32, #tpu.memory_space<vmem>>, vector<2x8x128xf32>
    tpu.vector_store %arg15[%c0_102, %c0_103, %c0_104], %409 {strides = array<i32>} : memref<2x8x128xf32, #tpu.memory_space<vmem>>, vector<2x8x128xf32>,
    %c0_105 = arith.constant 0 : index
    %c0_106 = arith.constant 0 : index
    %c0_107 = arith.constant 0 : index
    %411 = vector.load %arg16[%c0_105, %c0_106, %c0_107] : memref<8x8x128xf32, #tpu.memory_space<vmem>>, vector<8x8x128xf32>
    %412 = vector.shape_cast %411 : vector<8x8x128xf32> to vector<64x128xf32>
    %cst_108 = arith.constant 5.000000e-01 : f32
    %413 = vector.broadcast %cst_108 : f32 to vector<64x128xf32>
    %414 = arith.mulf %413, %412 : vector<64x128xf32>
    %cst_109 = arith.constant 2.000000e+00 : f32
    %415 = math.sqrt %cst_109 : f32
    %416 = vector.broadcast %415 : f32 to vector<64x128xf32>
    %417 = arith.divf %412, %416 : vector<64x128xf32>
    %418 = math.erf %417 : vector<64x128xf32>
    %cst_110 = arith.constant 1.000000e+00 : f32
    %419 = vector.broadcast %cst_110 : f32 to vector<64x128xf32>
    %420 = arith.addf %419, %418 : vector<64x128xf32>
    %421 = arith.mulf %414, %420 : vector<64x128xf32>
    %cst_111 = arith.constant dense<0.000000e+00> : vector<64xf32>
    %422 = vector.multi_reduction <add>, %421, %cst_111 [1] : vector<64x128xf32> to vector<64xf32>
    %423 = vector.shape_cast %422 : vector<64xf32> to vector<64x1xf32>
    %cst_112 = arith.constant 1.280000e+02 : f32
    %424 = vector.broadcast %cst_112 : f32 to vector<64x1xf32>
    %425 = arith.divf %423, %424 : vector<64x1xf32>
    %426 = arith.mulf %421, %421 : vector<64x128xf32>
    %cst_113 = arith.constant dense<0.000000e+00> : vector<64xf32>
    %427 = vector.multi_reduction <add>, %426, %cst_113 [1] : vector<64x128xf32> to vector<64xf32>
    %428 = vector.shape_cast %427 : vector<64xf32> to vector<64x1xf32>
    %cst_114 = arith.constant 1.280000e+02 : f32
    %429 = vector.broadcast %cst_114 : f32 to vector<64x1xf32>
    %430 = arith.divf %428, %429 : vector<64x1xf32>
    %431 = arith.mulf %425, %425 : vector<64x1xf32>
    %432 = arith.subf %430, %431 : vector<64x1xf32>
    %cst_115 = arith.constant 0.000000e+00 : f32
    %433 = vector.broadcast %cst_115 : f32 to vector<64x1xf32>
    %434 = arith.maximumf %432, %433 : vector<64x1xf32>
    %435 = vector.broadcast %425 : vector<64x1xf32> to vector<64x128xf32>
    %436 = arith.subf %421, %435 : vector<64x128xf32>
    %cst_116 = arith.constant 9.99999974E-6 : f32
    %437 = vector.broadcast %cst_116 : f32 to vector<64x1xf32>
    %438 = arith.addf %434, %437 : vector<64x1xf32>
    %439 = math.rsqrt %438 : vector<64x1xf32>
    %440 = vector.broadcast %439 : vector<64x1xf32> to vector<64x128xf32>
    %441 = arith.mulf %436, %440 : vector<64x128xf32>
    %442 = vector.broadcast %7 : vector<1x128xf32> to vector<64x128xf32>
    %443 = arith.mulf %441, %442 : vector<64x128xf32>
    %444 = vector.broadcast %8 : vector<1x128xf32> to vector<64x128xf32>
    %445 = arith.addf %443, %444 : vector<64x128xf32>
    %cst_117 = arith.constant dense<0.000000e+00> : vector<64x128xf32>
    %446 = tpu.matmul %445, %9, %cst_117 {dimension_numbers = #tpu.dot_dimension_numbers<[1], [0], [0], [1], [0, 0, 1, 1], [], []>} : vector<64x128xf32>, vector<128x128xf32>, vector<64x128xf32> -> vector<64x128xf32>
    %447 = vector.broadcast %10 : vector<1x128xf32> to vector<64x128xf32>
    %448 = arith.addf %446, %447 : vector<64x128xf32>
    %c0_118 = arith.constant 0 : index
    %c0_119 = arith.constant 0 : index
    %c0_120 = arith.constant 0 : index
    %449 = vector.load %arg2[%c0_118, %c0_119, %c0_120] : memref<8x8x128xf32, #tpu.memory_space<vmem>>, vector<8x8x128xf32>
    %450 = vector.shape_cast %449 : vector<8x8x128xf32> to vector<64x128xf32>
    %451 = arith.addf %448, %450 : vector<64x128xf32>
    %452 = vector.shape_cast %451 : vector<64x128xf32> to vector<8x8x128xf32>
    %c0_121 = arith.constant 0 : index
    %c0_122 = arith.constant 0 : index
    %c0_123 = arith.constant 0 : index
    %453 = vector.load %arg11[%c0_121, %c0_122, %c0_123] : memref<8x8x128xf32, #tpu.memory_space<vmem>>, vector<8x8x128xf32>
    tpu.vector_store %arg11[%c0_121, %c0_122, %c0_123], %452 {strides = array<i32>} : memref<8x8x128xf32, #tpu.memory_space<vmem>>, vector<8x8x128xf32>,
    %c1_i32_124 = arith.constant 1 : i32
    %454 = arith.cmpi eq, %arg0, %c1_i32_124 : i32
    %455 = arith.extui %454 : i1 to i32
    %c0_i32_125 = arith.constant 0 : i32
    %456 = arith.cmpi ne, %455, %c0_i32_125 : i32
    scf.if %456 {
      %c0_126 = arith.constant 0 : index
      %c0_127 = arith.constant 0 : index
      %c0_128 = arith.constant 0 : index
      %457 = vector.load %arg14[%c0_126, %c0_127, %c0_128] : memref<2x8x128xf32, #tpu.memory_space<vmem>>, vector<2x8x128xf32>
      %c0_129 = arith.constant 0 : index
      %c0_130 = arith.constant 0 : index
      %c0_131 = arith.constant 0 : index
      %458 = vector.load %arg12[%c0_129, %c0_130, %c0_131] : memref<2x8x128xf32, #tpu.memory_space<vmem>>, vector<2x8x128xf32>
      tpu.vector_store %arg12[%c0_129, %c0_130, %c0_131], %457 {strides = array<i32>} : memref<2x8x128xf32, #tpu.memory_space<vmem>>, vector<2x8x128xf32>,
      %c0_132 = arith.constant 0 : index
      %c0_133 = arith.constant 0 : index
      %c0_134 = arith.constant 0 : index
      %459 = vector.load %arg15[%c0_132, %c0_133, %c0_134] : memref<2x8x128xf32, #tpu.memory_space<vmem>>, vector<2x8x128xf32>
      %c0_135 = arith.constant 0 : index
      %c0_136 = arith.constant 0 : index
      %c0_137 = arith.constant 0 : index
      %460 = vector.load %arg13[%c0_135, %c0_136, %c0_137] : memref<2x8x128xf32, #tpu.memory_space<vmem>>, vector<2x8x128xf32>
      tpu.vector_store %arg13[%c0_135, %c0_136, %c0_137], %459 {strides = array<i32>} : memref<2x8x128xf32, #tpu.memory_space<vmem>>, vector<2x8x128xf32>,
    } else {
    }
    return
  }
  func.func @transform_0(%arg0: i32) -> (i32, i32, i32) {
    %c0_i32 = arith.constant 0 : i32
    %c0_i32_0 = arith.constant 0 : i32
    %c0_i32_1 = arith.constant 0 : i32
    return %arg0, %c0_i32, %c0_i32_0 : i32, i32, i32
  }
  func.func @transform_1(%arg0: i32) -> (i32, i32, i32) {
    %c0_i32 = arith.constant 0 : i32
    %c0_i32_0 = arith.constant 0 : i32
    %c0_i32_1 = arith.constant 0 : i32
    return %arg0, %c0_i32, %c0_i32_0 : i32, i32, i32
  }
  func.func @transform_2(%arg0: i32) -> (i32, i32) {
    %c0_i32 = arith.constant 0 : i32
    %c0_i32_0 = arith.constant 0 : i32
    %c0_i32_1 = arith.constant 0 : i32
    return %c0_i32, %c0_i32_0 : i32, i32
  }
  func.func @transform_3(%arg0: i32) -> (i32, i32) {
    %c0_i32 = arith.constant 0 : i32
    %c0_i32_0 = arith.constant 0 : i32
    %c0_i32_1 = arith.constant 0 : i32
    return %c0_i32, %c0_i32_0 : i32, i32
  }
  func.func @transform_4(%arg0: i32) -> (i32, i32) {
    %c0_i32 = arith.constant 0 : i32
    %c0_i32_0 = arith.constant 0 : i32
    %c0_i32_1 = arith.constant 0 : i32
    return %c0_i32, %c0_i32_0 : i32, i32
  }
  func.func @transform_5(%arg0: i32) -> (i32, i32) {
    %c0_i32 = arith.constant 0 : i32
    %c0_i32_0 = arith.constant 0 : i32
    %c0_i32_1 = arith.constant 0 : i32
    return %c0_i32, %c0_i32_0 : i32, i32
  }
  func.func @transform_6(%arg0: i32) -> (i32, i32) {
    %c0_i32 = arith.constant 0 : i32
    %c0_i32_0 = arith.constant 0 : i32
    %c0_i32_1 = arith.constant 0 : i32
    return %c0_i32, %c0_i32_0 : i32, i32
  }
  func.func @transform_7(%arg0: i32) -> (i32, i32) {
    %c0_i32 = arith.constant 0 : i32
    %c0_i32_0 = arith.constant 0 : i32
    %c0_i32_1 = arith.constant 0 : i32
    return %c0_i32, %c0_i32_0 : i32, i32
  }
  func.func @transform_8(%arg0: i32) -> (i32, i32) {
    %c0_i32 = arith.constant 0 : i32
    %c0_i32_0 = arith.constant 0 : i32
    %c0_i32_1 = arith.constant 0 : i32
    return %c0_i32, %c0_i32_0 : i32, i32
  }
  func.func @transform_9(%arg0: i32) -> (i32, i32) {
    %c0_i32 = arith.constant 0 : i32
    %c0_i32_0 = arith.constant 0 : i32
    %c0_i32_1 = arith.constant 0 : i32
    return %c0_i32, %c0_i32_0 : i32, i32
  }
  func.func @transform_10(%arg0: i32) -> (i32, i32, i32) {
    %c0_i32 = arith.constant 0 : i32
    %c0_i32_0 = arith.constant 0 : i32
    %c0_i32_1 = arith.constant 0 : i32
    return %arg0, %c0_i32, %c0_i32_0 : i32, i32, i32
  }
  func.func @transform_11(%arg0: i32) -> (i32, i32, i32) {
    %c0_i32 = arith.constant 0 : i32
    %c0_i32_0 = arith.constant 0 : i32
    %c0_i32_1 = arith.constant 0 : i32
    %c0_i32_2 = arith.constant 0 : i32
    return %c0_i32, %c0_i32_0, %c0_i32_1 : i32, i32, i32
  }
  func.func @transform_12(%arg0: i32) -> (i32, i32, i32) {
    %c0_i32 = arith.constant 0 : i32
    %c0_i32_0 = arith.constant 0 : i32
    %c0_i32_1 = arith.constant 0 : i32
    %c0_i32_2 = arith.constant 0 : i32
    return %c0_i32, %c0_i32_0, %c0_i32_1 : i32, i32, i32
  }
}

</mosaic_0001>

<llo_original>
// kernel: tpu_custom_call.1
$region0: #{tpu_custom_call.1}
  #allocation0 [shape = 'u32[]', space=smem, size = 0x4, offset = 0x4, fixed_abs, tag = 'smem constant byte address 0x4 - core index']
  #allocation1 [shape = 'u32[144,128]{1,0:T(1,128)}', space=vmem, size = 0x12000, scoped, tag = 'internal scratch']
  #allocation2 [shape = 'f32[2,8,128]{2,1,0:T(8,128)}', space=vmem, size = 0x2000, scoped, tag = 'scratch operand']
  #allocation3 [shape = 'f32[2,8,128]{2,1,0:T(8,128)}', space=vmem, size = 0x2000, scoped, tag = 'scratch operand']
  #allocation4 [shape = 'f32[8,8,128]{2,1,0:T(8,128)}', space=vmem, size = 0x8000, scoped, tag = 'scratch operand']
  %s0 = inlined_call_operand.hbm [shape: f32[16,8,512], index: 0, kind: input, shape index: {}]
  %s1 = inlined_call_operand.hbm [shape: f32[16,8,128], index: 1, kind: input, shape index: {}]
  %s2 = inlined_call_operand.hbm [shape: f32[128,512], index: 2, kind: input, shape index: {}]
  %s3 = inlined_call_operand.hbm [shape: f32[128,512], index: 3, kind: input, shape index: {}]
  %s4 = inlined_call_operand.hbm [shape: f32[128,512], index: 4, kind: input, shape index: {}]
  %s5 = inlined_call_operand.vmem [shape: f32[1,512], index: 5, kind: input, shape index: {}]
  %s6 = inlined_call_operand.vmem [shape: f32[1,128], index: 6, kind: input, shape index: {}]
  %s7 = inlined_call_operand.vmem [shape: f32[1,128], index: 7, kind: input, shape index: {}]
  %s8 = inlined_call_operand.hbm [shape: f32[128,128], index: 8, kind: input, shape index: {}]
  %s9 = inlined_call_operand.vmem [shape: f32[1,128], index: 9, kind: input, shape index: {}]
  %s10 = inlined_call_operand.hbm [shape: f32[16,8,128], index: 10, kind: output, shape index: {0}]
  %s11 = inlined_call_operand.hbm [shape: f32[2,8,128], index: 11, kind: output, shape index: {1}]
  %s12 = inlined_call_operand.hbm [shape: f32[2,8,128], index: 12, kind: output, shape index: {2}]
  %13 = xla_tuple %s10, %s11, %s12
  %s14 = sld [smem:[#allocation0]]
  $region121: #{tpu_custom_call.1} parent=0
    _
  %s16 = ssub.s32 1, %s14
  %s17 = scalar_select 0, %s16, %s14
  $region1: #{tpu_custom_call.1} parent=0
    #allocation5 [shape = 'u8[262144]{0}', space=vmem, size = 0x40000, scoped, tag = 'input window, operand 0']
    #allocation6 [shape = 's32[2]{0}', space=sflag, size = 0x8, scoped, tag = 'scoped memory for tpu_custom_call.1']
    #allocation7 [shape = 's32[2]{0}', space=sflag, size = 0x8, scoped, tag = 'scoped memory for tpu_custom_call.1']
    #allocation8 [shape = 'u8[65536]{0}', space=vmem, size = 0x10000, scoped, tag = 'input window, operand 1']
    #allocation9 [shape = 's32[2]{0}', space=sflag, size = 0x8, scoped, tag = 'scoped memory for tpu_custom_call.1']
    #allocation10 [shape = 'u8[262144]{0}', space=vmem, size = 0x40000, scoped, tag = 'input window, operand 2, single buffered']
    #allocation11 [shape = 'u8[262144]{0}', space=vmem, size = 0x40000, scoped, tag = 'input window, operand 3, single buffered']
    #allocation12 [shape = 's32[1]{0}', space=sflag, size = 0x4, scoped, tag = 'scoped memory for tpu_custom_call.1']
    #allocation13 [shape = 'u8[262144]{0}', space=vmem, size = 0x40000, scoped, tag = 'input window, operand 4, single buffered']
    #allocation14 [shape = 'u8[65536]{0}', space=vmem, size = 0x10000, scoped, tag = 'input window, operand 8, single buffered']
    #allocation15 [shape = 's32[1]{0}', space=sflag, size = 0x4, scoped, tag = 'scoped memory for tpu_custom_call.1']
    #allocation16 [shape = 'u8[65536]{0}', space=vmem, size = 0x10000, scoped, tag = 'output window, operand 0']
    #allocation17 [shape = 'u8[8192]{0}', space=vmem, size = 0x2000, scoped, tag = 'output window, operand 1, single buffered']
    #allocation18 [shape = 's32[1]{0}', space=sflag, size = 0x4, scoped, tag = 'scoped memory for tpu_custom_call.1']
    #allocation19 [shape = 'u8[8192]{0}', space=vmem, size = 0x2000, scoped, tag = 'output window, operand 2, single buffered']
    %18 = vsyncpa [#allocation6], 0
    %s19 = scalar_lea.sflag [#allocation6], 1
    %20 = vsyncpa %s19, 0
    %21 = vsyncpa [#allocation9], 0
    %s22 = scalar_lea.sflag [#allocation9], 1
    %23 = vsyncpa %s22, 0
    %24 = vsyncpa [#allocation12], 0
    %25 = vsyncpa [#allocation15], 0
    %26 = vsyncpa [#allocation7], 0
    %s27 = scalar_lea.sflag [#allocation7], 1
    %28 = vsyncpa %s27, 0
    %29 = vsyncpa [#allocation18], 0
    loop: start=0, step=1, limit=4
    $region2: #{tpu_custom_call.1} parent=1 // loop_pre_header
      _
    $region3: #{tpu_custom_call.1} parent=1 // loop_header
      %s31 = sphi 0, %s35
      %p32 = scmp.ge.s32.totalorder %s31, 4
      %s41 = sphi 0, %s43
      %s44 = sphi 0, %s41
      %s45 = sphi 0, %s44
      %s61 = sphi 0, %s45
      %s67 = sphi 0, %s69
      %s70 = sphi 0, %s67
      %s71 = sphi 0, %s70
      %s87 = sphi 0, %s71
      %s91 = sphi 0, %s91
      %s93 = sphi 0, %s91
      %s94 = sphi 0, %s93
      %s108 = sphi 0, %s94
      %s112 = sphi 0, %s112
      %s114 = sphi 0, %s112
      %s115 = sphi 0, %s114
      %s129 = sphi 0, %s115
      %s133 = sphi 0, %s133
      %s135 = sphi 0, %s133
      %s136 = sphi 0, %s135
      %s150 = sphi 0, %s136
      %s154 = sphi 0, %s154
      %s156 = sphi 0, %s154
      %s157 = sphi 0, %s156
      %s171 = sphi 0, %s157
      %s175 = sphi 0, %s175
      %s177 = sphi 0, %s175
      %s178 = sphi 0, %s177
      %s192 = sphi 0, %s178
      %s196 = sphi 0, %s196
      %s198 = sphi 0, %s196
      %s199 = sphi 0, %s198
      %s213 = sphi 0, %s199
      %s217 = sphi 0, %s217
      %s219 = sphi 0, %s217
      %s220 = sphi 0, %s219
      %s234 = sphi 0, %s220
      %s238 = sphi 0, %s238
      %s240 = sphi 0, %s238
      %s241 = sphi 0, %s240
      %s255 = sphi 0, %s241
      %s261 = sphi 0, %s263
      %s264 = sphi 0, %s261
      %s265 = sphi 0, %s264
      %s281 = sphi 0, %s265
      %s285 = sphi 0, %s285
      %s287 = sphi 0, %s285
      %s288 = sphi 0, %s287
      %s302 = sphi 0, %s288
      %s306 = sphi 0, %s306
      %s308 = sphi 0, %s306
      %s309 = sphi 0, %s308
      %s323 = sphi 0, %s309
    $region4: #{tpu_custom_call.1} parent=1 // loop_header_branch
      %34 = sbr.rel (%p32) target = $region8
    $region5: #{tpu_custom_call.1} parent=1 // loop_body
      %s36 = ssub.s32 %s31, 1
      %s37 = ssub.s32 %s31, 2
      %s38 = sadd.s32 %s31, 1
      %s39 = ssub.s32 %s31, %s38
      %p40 = scmp.eq.s32.totalorder %s39, 0
      %s42 = sadd.s32 %s41, 1
      %s43 = scalar_select %p40, %s41, %s42
      %p46 = pneg %p40
      %p47 = scmp.eq.s32.totalorder %s31, 1
      %p48 = por %p46, %p47
      %p49 = scmp.ne.s32.totalorder %s41, %s44
      %p50 = scmp.eq.s32.totalorder %s31, 0
      %p51 = por %p49, %p50
      %p52 = scmp.ne.s32.totalorder %s41, %s44
      %p53 = scmp.eq.s32.totalorder %s36, 1
      %p54 = por %p52, %p53
      %p55 = scmp.ne.s32.totalorder %s44, %s45
      %p56 = scmp.eq.s32.totalorder %s36, 0
      %p57 = por %p55, %p56
      %p58 = scmp.ne.s32.totalorder %s44, %s45
      %p59 = scmp.eq.s32.totalorder %s37, 1
      %p60 = por %p58, %p59
      %p62 = scmp.ne.s32.totalorder %s45, %s61
      %p63 = scmp.eq.s32.totalorder %s37, 0
      %p64 = por %p62, %p63
      %s65 = ssub.s32 %s31, %s38
      %p66 = scmp.eq.s32.totalorder %s65, 0
      %s68 = sadd.s32 %s67, 1
      %s69 = scalar_select %p66, %s67, %s68
      %p72 = pneg %p66
      %p73 = scmp.eq.s32.totalorder %s31, 1
      %p74 = por %p72, %p73
      %p75 = scmp.ne.s32.totalorder %s67, %s70
      %p76 = scmp.eq.s32.totalorder %s31, 0
      %p77 = por %p75, %p76
      %p78 = scmp.ne.s32.totalorder %s67, %s70
      %p79 = scmp.eq.s32.totalorder %s36, 1
      %p80 = por %p78, %p79
      %p81 = scmp.ne.s32.totalorder %s70, %s71
      %p82 = scmp.eq.s32.totalorder %s36, 0
      %p83 = por %p81, %p82
      %p84 = scmp.ne.s32.totalorder %s70, %s71
      %p85 = scmp.eq.s32.totalorder %s37, 1
      %p86 = por %p84, %p85
      %p88 = scmp.ne.s32.totalorder %s71, %s87
      %p89 = scmp.eq.s32.totalorder %s37, 0
      %p90 = por %p88, %p89
      %s92 = sadd.s32 %s91, 1
      %p95 = scmp.eq.s32.totalorder %s31, 1
      %p96 = scmp.ne.s32.totalorder %s91, %s93
      %p97 = scmp.eq.s32.totalorder %s31, 0
      %p98 = por %p96, %p97
      %p99 = scmp.ne.s32.totalorder %s91, %s93
      %p100 = scmp.eq.s32.totalorder %s36, 1
      %p101 = por %p99, %p100
      %p102 = scmp.ne.s32.totalorder %s93, %s94
      %p103 = scmp.eq.s32.totalorder %s36, 0
      %p104 = por %p102, %p103
      %p105 = scmp.ne.s32.totalorder %s93, %s94
      %p106 = scmp.eq.s32.totalorder %s37, 1
      %p107 = por %p105, %p106
      %p109 = scmp.ne.s32.totalorder %s94, %s108
      %p110 = scmp.eq.s32.totalorder %s37, 0
      %p111 = por %p109, %p110
      %s113 = sadd.s32 %s112, 1
      %p116 = scmp.eq.s32.totalorder %s31, 1
      %p117 = scmp.ne.s32.totalorder %s112, %s114
      %p118 = scmp.eq.s32.totalorder %s31, 0
      %p119 = por %p117, %p118
      %p120 = scmp.ne.s32.totalorder %s112, %s114
      %p121 = scmp.eq.s32.totalorder %s36, 1
      %p122 = por %p120, %p121
      %p123 = scmp.ne.s32.totalorder %s114, %s115
      %p124 = scmp.eq.s32.totalorder %s36, 0
      %p125 = por %p123, %p124
      %p126 = scmp.ne.s32.totalorder %s114, %s115
      %p127 = scmp.eq.s32.totalorder %s37, 1
      %p128 = por %p126, %p127
      %p130 = scmp.ne.s32.totalorder %s115, %s129
      %p131 = scmp.eq.s32.totalorder %s37, 0
      %p132 = por %p130, %p131
      %s134 = sadd.s32 %s133, 1
      %p137 = scmp.eq.s32.totalorder %s31, 1
      %p138 = scmp.ne.s32.totalorder %s133, %s135
      %p139 = scmp.eq.s32.totalorder %s31, 0
      %p140 = por %p138, %p139
      %p141 = scmp.ne.s32.totalorder %s133, %s135
      %p142 = scmp.eq.s32.totalorder %s36, 1
      %p143 = por %p141, %p142
      %p144 = scmp.ne.s32.totalorder %s135, %s136
      %p145 = scmp.eq.s32.totalorder %s36, 0
      %p146 = por %p144, %p145
      %p147 = scmp.ne.s32.totalorder %s135, %s136
      %p148 = scmp.eq.s32.totalorder %s37, 1
      %p149 = por %p147, %p148
      %p151 = scmp.ne.s32.totalorder %s136, %s150
      %p152 = scmp.eq.s32.totalorder %s37, 0
      %p153 = por %p151, %p152
      %s155 = sadd.s32 %s154, 1
      %p158 = scmp.eq.s32.totalorder %s31, 1
      %p159 = scmp.ne.s32.totalorder %s154, %s156
      %p160 = scmp.eq.s32.totalorder %s31, 0
      %p161 = por %p159, %p160
      %p162 = scmp.ne.s32.totalorder %s154, %s156
      %p163 = scmp.eq.s32.totalorder %s36, 1
      %p164 = por %p162, %p163
      %p165 = scmp.ne.s32.totalorder %s156, %s157
      %p166 = scmp.eq.s32.totalorder %s36, 0
      %p167 = por %p165, %p166
      %p168 = scmp.ne.s32.totalorder %s156, %s157
      %p169 = scmp.eq.s32.totalorder %s37, 1
      %p170 = por %p168, %p169
      %p172 = scmp.ne.s32.totalorder %s157, %s171
      %p173 = scmp.eq.s32.totalorder %s37, 0
      %p174 = por %p172, %p173
      %s176 = sadd.s32 %s175, 1
      %p179 = scmp.eq.s32.totalorder %s31, 1
      %p180 = scmp.ne.s32.totalorder %s175, %s177
      %p181 = scmp.eq.s32.totalorder %s31, 0
      %p182 = por %p180, %p181
      %p183 = scmp.ne.s32.totalorder %s175, %s177
      %p184 = scmp.eq.s32.totalorder %s36, 1
      %p185 = por %p183, %p184
      %p186 = scmp.ne.s32.totalorder %s177, %s178
      %p187 = scmp.eq.s32.totalorder %s36, 0
      %p188 = por %p186, %p187
      %p189 = scmp.ne.s32.totalorder %s177, %s178
      %p190 = scmp.eq.s32.totalorder %s37, 1
      %p191 = por %p189, %p190
      %p193 = scmp.ne.s32.totalorder %s178, %s192
      %p194 = scmp.eq.s32.totalorder %s37, 0
      %p195 = por %p193, %p194
      %s197 = sadd.s32 %s196, 1
      %p200 = scmp.eq.s32.totalorder %s31, 1
      %p201 = scmp.ne.s32.totalorder %s196, %s198
      %p202 = scmp.eq.s32.totalorder %s31, 0
      %p203 = por %p201, %p202
      %p204 = scmp.ne.s32.totalorder %s196, %s198
      %p205 = scmp.eq.s32.totalorder %s36, 1
      %p206 = por %p204, %p205
      %p207 = scmp.ne.s32.totalorder %s198, %s199
      %p208 = scmp.eq.s32.totalorder %s36, 0
      %p209 = por %p207, %p208
      %p210 = scmp.ne.s32.totalorder %s198, %s199
      %p211 = scmp.eq.s32.totalorder %s37, 1
      %p212 = por %p210, %p211
      %p214 = scmp.ne.s32.totalorder %s199, %s213
      %p215 = scmp.eq.s32.totalorder %s37, 0
      %p216 = por %p214, %p215
      %s218 = sadd.s32 %s217, 1
      %p221 = scmp.eq.s32.totalorder %s31, 1
      %p222 = scmp.ne.s32.totalorder %s217, %s219
      %p223 = scmp.eq.s32.totalorder %s31, 0
      %p224 = por %p222, %p223
      %p225 = scmp.ne.s32.totalorder %s217, %s219
      %p226 = scmp.eq.s32.totalorder %s36, 1
      %p227 = por %p225, %p226
      %p228 = scmp.ne.s32.totalorder %s219, %s220
      %p229 = scmp.eq.s32.totalorder %s36, 0
      %p230 = por %p228, %p229
      %p231 = scmp.ne.s32.totalorder %s219, %s220
      %p232 = scmp.eq.s32.totalorder %s37, 1
      %p233 = por %p231, %p232
      %p235 = scmp.ne.s32.totalorder %s220, %s234
      %p236 = scmp.eq.s32.totalorder %s37, 0
      %p237 = por %p235, %p236
      %s239 = sadd.s32 %s238, 1
      %p242 = scmp.eq.s32.totalorder %s31, 1
      %p243 = scmp.ne.s32.totalorder %s238, %s240
      %p244 = scmp.eq.s32.totalorder %s31, 0
      %p245 = por %p243, %p244
      %p246 = scmp.ne.s32.totalorder %s238, %s240
      %p247 = scmp.eq.s32.totalorder %s36, 1
      %p248 = por %p246, %p247
      %p249 = scmp.ne.s32.totalorder %s240, %s241
      %p250 = scmp.eq.s32.totalorder %s36, 0
      %p251 = por %p249, %p250
      %p252 = scmp.ne.s32.totalorder %s240, %s241
      %p253 = scmp.eq.s32.totalorder %s37, 1
      %p254 = por %p252, %p253
      %p256 = scmp.ne.s32.totalorder %s241, %s255
      %p257 = scmp.eq.s32.totalorder %s37, 0
      %p258 = por %p256, %p257
      %s259 = ssub.s32 %s31, %s38
      %p260 = scmp.eq.s32.totalorder %s259, 0
      %s262 = sadd.s32 %s261, 1
      %s263 = scalar_select %p260, %s261, %s262
      %p266 = pneg %p260
      %p267 = scmp.eq.s32.totalorder %s31, 1
      %p268 = por %p266, %p267
      %p269 = scmp.ne.s32.totalorder %s261, %s264
      %p270 = scmp.eq.s32.totalorder %s31, 0
      %p271 = por %p269, %p270
      %p272 = scmp.ne.s32.totalorder %s261, %s264
      %p273 = scmp.eq.s32.totalorder %s36, 1
      %p274 = por %p272, %p273
      %p275 = scmp.ne.s32.totalorder %s264, %s265
      %p276 = scmp.eq.s32.totalorder %s36, 0
      %p277 = por %p275, %p276
      %p278 = scmp.ne.s32.totalorder %s264, %s265
      %p279 = scmp.eq.s32.totalorder %s37, 1
      %p280 = por %p278, %p279
      %p282 = scmp.ne.s32.totalorder %s265, %s281
      %p283 = scmp.eq.s32.totalorder %s37, 0
      %p284 = por %p282, %p283
      %s286 = sadd.s32 %s285, 1
      %p289 = scmp.eq.s32.totalorder %s31, 1
      %p290 = scmp.ne.s32.totalorder %s285, %s287
      %p291 = scmp.eq.s32.totalorder %s31, 0
      %p292 = por %p290, %p291
      %p293 = scmp.ne.s32.totalorder %s285, %s287
      %p294 = scmp.eq.s32.totalorder %s36, 1
      %p295 = por %p293, %p294
      %p296 = scmp.ne.s32.totalorder %s287, %s288
      %p297 = scmp.eq.s32.totalorder %s36, 0
      %p298 = por %p296, %p297
      %p299 = scmp.ne.s32.totalorder %s287, %s288
      %p300 = scmp.eq.s32.totalorder %s37, 1
      %p301 = por %p299, %p300
      %p303 = scmp.ne.s32.totalorder %s288, %s302
      %p304 = scmp.eq.s32.totalorder %s37, 0
      %p305 = por %p303, %p304
      %s307 = sadd.s32 %s306, 1
      %p310 = scmp.eq.s32.totalorder %s31, 1
      %p311 = scmp.ne.s32.totalorder %s306, %s308
      %p312 = scmp.eq.s32.totalorder %s31, 0
      %p313 = por %p311, %p312
      %p314 = scmp.ne.s32.totalorder %s306, %s308
      %p315 = scmp.eq.s32.totalorder %s36, 1
      %p316 = por %p314, %p315
      %p317 = scmp.ne.s32.totalorder %s308, %s309
      %p318 = scmp.eq.s32.totalorder %s36, 0
      %p319 = por %p317, %p318
      %p320 = scmp.ne.s32.totalorder %s308, %s309
      %p321 = scmp.eq.s32.totalorder %s37, 1
      %p322 = por %p320, %p321
      %p324 = scmp.ne.s32.totalorder %s309, %s323
      %p325 = scmp.eq.s32.totalorder %s37, 0
      %p326 = por %p324, %p325
      %p327 = scmp.le.s32.totalorder 1, %s31
      %p328 = scmp.lt.s32.totalorder %s31, 3
      %p329 = pnand %p327, %p328
      %p330 = pneg %p329
      // Predicated region
      $region9: #{tpu_custom_call.1} parent=5 // pred_check
        _
      $region10: #{tpu_custom_call.1} parent=5 // pred_check_branch
        %332 = sbr.rel (%p329) target = $region12
      $region11: #{tpu_custom_call.1} parent=5 // pred_region
        %s333 = ssub.s32 %s31, 1
        // Predicated region
        $region13: #{tpu_custom_call.1} parent=11 // pred_check
          %p334 = pneg %p104
        $region14: #{tpu_custom_call.1} parent=11 // pred_check_branch
          %336 = sbr.rel (%p334) target = $region16
        $region15: #{tpu_custom_call.1} parent=11 // pred_region
          %s338 = ssub.s32 8192, 8192
          %339 = vsyncadd [#allocation9], %s338
          %s340 = sshll.u32 [#allocation10], 4
          %s341 = int_to_ptr.vmem [resolvable:$true] %s340
          %346 = dma.hbm_to_vmem [thread:$0]  %s2, 8192, %s341, [#allocation9], 512, 512, 32
        $region16: #{tpu_custom_call.1} parent=11 // pred_fallthru
          _
        // Predicated region
        $region17: #{tpu_custom_call.1} parent=11 // pred_check
          %p347 = pneg %p125
        $region18: #{tpu_custom_call.1} parent=11 // pred_check_branch
          %349 = sbr.rel (%p347) target = $region20
        $region19: #{tpu_custom_call.1} parent=11 // pred_region
          %s351 = ssub.s32 8192, 8192
          %352 = vsyncadd [#allocation12], %s351
          %s353 = sshll.u32 [#allocation11], 4
          %s354 = int_to_ptr.vmem [resolvable:$true] %s353
          %359 = dma.hbm_to_vmem [thread:$0]  %s3, 8192, %s354, [#allocation12], 512, 512, 32
        $region20: #{tpu_custom_call.1} parent=11 // pred_fallthru
          _
        // Predicated region
        $region21: #{tpu_custom_call.1} parent=11 // pred_check
          %p360 = pneg %p146
        $region22: #{tpu_custom_call.1} parent=11 // pred_check_branch
          %362 = sbr.rel (%p360) target = $region24
        $region23: #{tpu_custom_call.1} parent=11 // pred_region
          %s364 = ssub.s32 8192, 8192
          %365 = vsyncadd [#allocation12], %s364
          %s366 = sshll.u32 [#allocation13], 4
          %s367 = int_to_ptr.vmem [resolvable:$true] %s366
          %372 = dma.hbm_to_vmem [thread:$0]  %s4, 8192, %s367, [#allocation12], 512, 512, 32
        $region24: #{tpu_custom_call.1} parent=11 // pred_fallthru
          _
        // Predicated region
        $region25: #{tpu_custom_call.1} parent=11 // pred_check
          %p373 = pneg %p167
        $region26: #{tpu_custom_call.1} parent=11 // pred_check_branch
          %375 = sbr.rel (%p373) target = $region28
        $region27: #{tpu_custom_call.1} parent=11 // pred_region
          _
        $region28: #{tpu_custom_call.1} parent=11 // pred_fallthru
          _
        // Predicated region
        $region29: #{tpu_custom_call.1} parent=11 // pred_check
          %p376 = pneg %p188
        $region30: #{tpu_custom_call.1} parent=11 // pred_check_branch
          %378 = sbr.rel (%p376) target = $region32
        $region31: #{tpu_custom_call.1} parent=11 // pred_region
          _
        $region32: #{tpu_custom_call.1} parent=11 // pred_fallthru
          _
        // Predicated region
        $region33: #{tpu_custom_call.1} parent=11 // pred_check
          %p379 = pneg %p209
        $region34: #{tpu_custom_call.1} parent=11 // pred_check_branch
          %381 = sbr.rel (%p379) target = $region36
        $region35: #{tpu_custom_call.1} parent=11 // pred_region
          _
        $region36: #{tpu_custom_call.1} parent=11 // pred_fallthru
          _
        // Predicated region
        $region37: #{tpu_custom_call.1} parent=11 // pred_check
          %p382 = pneg %p230
        $region38: #{tpu_custom_call.1} parent=11 // pred_check_branch
          %384 = sbr.rel (%p382) target = $region40
        $region39: #{tpu_custom_call.1} parent=11 // pred_region
          %s386 = ssub.s32 2048, 2048
          %387 = vsyncadd [#allocation15], %s386
          %s388 = sshll.u32 [#allocation14], 4
          %s389 = int_to_ptr.vmem [resolvable:$true] %s388
          %394 = dma.hbm_to_vmem [thread:$0]  %s8, 2048, %s389, [#allocation15], 128, 128, 8
        $region40: #{tpu_custom_call.1} parent=11 // pred_fallthru
          _
        // Predicated region
        $region41: #{tpu_custom_call.1} parent=11 // pred_check
          %p395 = pneg %p251
        $region42: #{tpu_custom_call.1} parent=11 // pred_check_branch
          %397 = sbr.rel (%p395) target = $region44
        $region43: #{tpu_custom_call.1} parent=11 // pred_region
          _
        $region44: #{tpu_custom_call.1} parent=11 // pred_fallthru
          _
      $region12: #{tpu_custom_call.1} parent=5 // pred_fallthru
        _
      %p398 = scmp.lt.s32.totalorder %s31, 2
      // Predicated region
      $region45: #{tpu_custom_call.1} parent=5 // pred_check
        %p399 = pneg %p398
      $region46: #{tpu_custom_call.1} parent=5 // pred_check_branch
        %401 = sbr.rel (%p399) target = $region48
      $region47: #{tpu_custom_call.1} parent=5 // pred_region
        // Predicated region
        $region49: #{tpu_custom_call.1} parent=47 // pred_check
          %p402 = pneg %p51
        $region50: #{tpu_custom_call.1} parent=47 // pred_check_branch
          %404 = sbr.rel (%p402) target = $region52
        $region51: #{tpu_custom_call.1} parent=47 // pred_region
          %s405 = sand.u32 %s41, 1
          %s406 = scalar_lea.sflag [#allocation6], %s405
          %s407 = sand.u32 %s41, 1
          %s408 = smul.addr %s407, 256
          %s409 = scalar_lea.vmem [#allocation5], %s408
          %s410 = smul.u32 8, %s31
          %s412 = ssub.s32 4096, 4096
          %413 = vsyncadd %s406, %s412
          %s414 = smul.addr %s410, 4
          %s415 = smul.addr %s414, 128
          %s416 = scalar_lea.hbm %s0, %s415
          %s417 = sshll.u32 %s409, 4
          %s418 = int_to_ptr.vmem [resolvable:$true] %s417
          %423 = dma.hbm_to_vmem [thread:$0]  %s416, 4096, %s418, %s406, 512, 512, 32
        $region52: #{tpu_custom_call.1} parent=47 // pred_fallthru
          _
        // Predicated region
        $region53: #{tpu_custom_call.1} parent=47 // pred_check
          %p424 = pneg %p77
        $region54: #{tpu_custom_call.1} parent=47 // pred_check_branch
          %426 = sbr.rel (%p424) target = $region56
        $region55: #{tpu_custom_call.1} parent=47 // pred_region
          %s427 = sand.u32 %s31, 1
          %s428 = scalar_lea.sflag [#allocation9], %s427
          %s429 = sand.u32 %s67, 1
          %s430 = smul.addr %s429, 64
          %s431 = scalar_lea.vmem [#allocation8], %s430
          %s432 = smul.u32 8, %s31
          %s434 = ssub.s32 1024, 1024
          %435 = vsyncadd %s428, %s434
          %s436 = smul.addr %s432, 128
          %s437 = scalar_lea.hbm %s1, %s436
          %s438 = sshll.u32 %s431, 4
          %s439 = int_to_ptr.vmem [resolvable:$true] %s438
          %444 = dma.hbm_to_vmem [thread:$0]  %s437, 1024, %s439, %s428, 128, 128, 8
        $region56: #{tpu_custom_call.1} parent=47 // pred_fallthru
          _
      $region48: #{tpu_custom_call.1} parent=5 // pred_fallthru
        _
      %p445 = scmp.le.s32.totalorder 1, %s31
      %p446 = scmp.lt.s32.totalorder %s31, 3
      %p447 = pnand %p445, %p446
      %p448 = pneg %p447
      // Predicated region
      $region57: #{tpu_custom_call.1} parent=5 // pred_check
        _
      $region58: #{tpu_custom_call.1} parent=5 // pred_check_branch
        %450 = sbr.rel (%p447) target = $region60
      $region59: #{tpu_custom_call.1} parent=5 // pred_region
        %s451 = ssub.s32 %s31, 1
        %s452 = sand.u32 %s44, 1
        %s453 = scalar_lea.sflag [#allocation6], %s452
        %s454 = sand.u32 %s44, 1
        %s455 = smul.addr %s454, 256
        %s456 = scalar_lea.vmem [#allocation5], %s455
        // Predicated region
        $region61: #{tpu_custom_call.1} parent=59 // pred_check
          %p457 = pneg %p57
        $region62: #{tpu_custom_call.1} parent=59 // pred_check_branch
          %459 = sbr.rel (%p457) target = $region64
        $region63: #{tpu_custom_call.1} parent=59 // pred_region
          %460 = dma.done %s453, 4096
        $region64: #{tpu_custom_call.1} parent=59 // pred_fallthru
          _
        %s461 = sand.u32 %s36, 1
        %s462 = scalar_lea.sflag [#allocation9], %s461
        %s463 = sand.u32 %s70, 1
        %s464 = smul.addr %s463, 64
        %s465 = scalar_lea.vmem [#allocation8], %s464
        // Predicated region
        $region65: #{tpu_custom_call.1} parent=59 // pred_check
          %p466 = pneg %p83
        $region66: #{tpu_custom_call.1} parent=59 // pred_check_branch
          %468 = sbr.rel (%p466) target = $region68
        $region67: #{tpu_custom_call.1} parent=59 // pred_region
          %469 = dma.done %s462, 1024
        $region68: #{tpu_custom_call.1} parent=59 // pred_fallthru
          _
        // Predicated region
        $region69: #{tpu_custom_call.1} parent=59 // pred_check
          %p470 = pneg %p104
        $region70: #{tpu_custom_call.1} parent=59 // pred_check_branch
          %472 = sbr.rel (%p470) target = $region72
        $region71: #{tpu_custom_call.1} parent=59 // pred_region
          %473 = dma.done [#allocation9], 8192
        $region72: #{tpu_custom_call.1} parent=59 // pred_fallthru
          _
        // Predicated region
        $region73: #{tpu_custom_call.1} parent=59 // pred_check
          %p474 = pneg %p125
        $region74: #{tpu_custom_call.1} parent=59 // pred_check_branch
          %476 = sbr.rel (%p474) target = $region76
        $region75: #{tpu_custom_call.1} parent=59 // pred_region
          %477 = dma.done [#allocation12], 8192
        $region76: #{tpu_custom_call.1} parent=59 // pred_fallthru
          _
        // Predicated region
        $region77: #{tpu_custom_call.1} parent=59 // pred_check
          %p478 = pneg %p146
        $region78: #{tpu_custom_call.1} parent=59 // pred_check_branch
          %480 = sbr.rel (%p478) target = $region80
        $region79: #{tpu_custom_call.1} parent=59 // pred_region
          %481 = dma.done [#allocation12], 8192
        $region80: #{tpu_custom_call.1} parent=59 // pred_fallthru
          _
        // Predicated region
        $region81: #{tpu_custom_call.1} parent=59 // pred_check
          %p482 = pneg %p230
        $region82: #{tpu_custom_call.1} parent=59 // pred_check_branch
          %484 = sbr.rel (%p482) target = $region84
        $region83: #{tpu_custom_call.1} parent=59 // pred_region
          %485 = dma.done [#allocation15], 2048
        $region84: #{tpu_custom_call.1} parent=59 // pred_fallthru
          _
        %s486 = sand.u32 %s44, 1
        %s487 = scalar_lea.sflag [#allocation6], %s486
        %s488 = sand.u32 %s44, 1
        %s489 = smul.addr %s488, 256
        %s490 = scalar_lea.vmem [#allocation5], %s489
        %p491 = pneg %p57
        %p492 = pneg %p54
        %s493 = sand.u32 %s36, 1
        %s494 = scalar_lea.sflag [#allocation9], %s493
        %s495 = sand.u32 %s70, 1
        %s496 = smul.addr %s495, 64
        %s497 = scalar_lea.vmem [#allocation8], %s496
        %p498 = pneg %p83
        %p499 = pneg %p80
        %p500 = pneg %p104
        %p501 = pneg %p101
        %p502 = pneg %p125
        %p503 = pneg %p122
        %p504 = pneg %p146
        %p505 = pneg %p143
        %p506 = pneg %p167
        %p507 = pneg %p164
        %p508 = pneg %p188
        %p509 = pneg %p185
        %p510 = pneg %p209
        %p511 = pneg %p206
        %p512 = pneg %p230
        %p513 = pneg %p227
        %p514 = pneg %p251
        %p515 = pneg %p248
        %p516 = pneg %p277
        %p517 = pneg %p274
        %s518 = sand.u32 %s264, 1
        %s519 = scalar_lea.sflag [#allocation7], %s518
        %s520 = sand.u32 %s264, 1
        %s521 = smul.addr %s520, 64
        %s522 = scalar_lea.vmem [#allocation16], %s521
        %p523 = pneg %p298
        %p524 = pneg %p295
        %p525 = pneg %p319
        %p526 = pneg %p316
        %s527 = smul.u32 8, %s36
        %s528 = smul.u32 8, %s36
        %s529 = smul.u32 8, %s36
        %p530 = scmp.eq.s32.totalorder %s36, 0
        // Predicated region
        $region85: #{tpu_custom_call.1} parent=59 // pred_check
          %p531 = pneg %p530
        $region86: #{tpu_custom_call.1} parent=59 // pred_check_branch
          %533 = sbr.rel (%p531) target = $region88
        $region87: #{tpu_custom_call.1} parent=59 // pred_region
          %534 = vst [vmem:[#allocation2] sm:$0xff] 0.0
          %535 = vst [vmem:[#allocation2 + $0x8] sm:$0xff] 0.0
          %536 = vst [vmem:[#allocation3] sm:$0xff] 0.0
          %537 = vst [vmem:[#allocation3 + $0x8] sm:$0xff] 0.0
        $region88: #{tpu_custom_call.1} parent=59 // pred_fallthru
          _
        %v538 = vld [vmem:[#allocation10] sm:$0xff]
        %v539 = vld [vmem:[#allocation10 + $0x8] sm:$0xff]
        %v540 = vld [vmem:[#allocation10 + $0x10] sm:$0xff]
        %v541 = vld [vmem:[#allocation10 + $0x18] sm:$0xff]
        %v542 = vld [vmem:[#allocation10 + $0x20] sm:$0xff]
        %v543 = vld [vmem:[#allocation10 + $0x28] sm:$0xff]
        %v544 = vld [vmem:[#allocation10 + $0x30] sm:$0xff]
        %v545 = vld [vmem:[#allocation10 + $0x38] sm:$0xff]
        %v546 = vld [vmem:[#allocation10 + $0x40] sm:$0xff]
        %v547 = vld [vmem:[#allocation10 + $0x48] sm:$0xff]
        %v548 = vld [vmem:[#allocation10 + $0x50] sm:$0xff]
        %v549 = vld [vmem:[#allocation10 + $0x58] sm:$0xff]
        %v550 = vld [vmem:[#allocation10 + $0x60] sm:$0xff]
        %v551 = vld [vmem:[#allocation10 + $0x68] sm:$0xff]
        %v552 = vld [vmem:[#allocation10 + $0x70] sm:$0xff]
        %v553 = vld [vmem:[#allocation10 + $0x78] sm:$0xff]
        %v554 = vld [vmem:[#allocation10 + $0x80] sm:$0xff]
        %v555 = vld [vmem:[#allocation10 + $0x88] sm:$0xff]
        %v556 = vld [vmem:[#allocation10 + $0x90] sm:$0xff]
        %v557 = vld [vmem:[#allocation10 + $0x98] sm:$0xff]
        %v558 = vld [vmem:[#allocation10 + $0xa0] sm:$0xff]
        %v559 = vld [vmem:[#allocation10 + $0xa8] sm:$0xff]
        %v560 = vld [vmem:[#allocation10 + $0xb0] sm:$0xff]
        %v561 = vld [vmem:[#allocation10 + $0xb8] sm:$0xff]
        %v562 = vld [vmem:[#allocation10 + $0xc0] sm:$0xff]
        %v563 = vld [vmem:[#allocation10 + $0xc8] sm:$0xff]
        %v564 = vld [vmem:[#allocation10 + $0xd0] sm:$0xff]
        %v565 = vld [vmem:[#allocation10 + $0xd8] sm:$0xff]
        %v566 = vld [vmem:[#allocation10 + $0xe0] sm:$0xff]
        %v567 = vld [vmem:[#allocation10 + $0xe8] sm:$0xff]
        %v568 = vld [vmem:[#allocation10 + $0xf0] sm:$0xff]
        %v569 = vld [vmem:[#allocation10 + $0xf8] sm:$0xff]
        %v570 = vld [vmem:[#allocation10 + $0x100] sm:$0xff]
        %v571 = vld [vmem:[#allocation10 + $0x108] sm:$0xff]
        %v572 = vld [vmem:[#allocation10 + $0x110] sm:$0xff]
        %v573 = vld [vmem:[#allocation10 + $0x118] sm:$0xff]
        %v574 = vld [vmem:[#allocation10 + $0x120] sm:$0xff]
        %v575 = vld [vmem:[#allocation10 + $0x128] sm:$0xff]
        %v576 = vld [vmem:[#allocation10 + $0x130] sm:$0xff]
        %v577 = vld [vmem:[#allocation10 + $0x138] sm:$0xff]
        %v578 = vld [vmem:[#allocation10 + $0x140] sm:$0xff]
        %v579 = vld [vmem:[#allocation10 + $0x148] sm:$0xff]
        %v580 = vld [vmem:[#allocation10 + $0x150] sm:$0xff]
        %v581 = vld [vmem:[#allocation10 + $0x158] sm:$0xff]
        %v582 = vld [vmem:[#allocation10 + $0x160] sm:$0xff]
        %v583 = vld [vmem:[#allocation10 + $0x168] sm:$0xff]
        %v584 = vld [vmem:[#allocation10 + $0x170] sm:$0xff]
        %v585 = vld [vmem:[#allocation10 + $0x178] sm:$0xff]
        %v586 = vld [vmem:[#allocation10 + $0x180] sm:$0xff]
        %v587 = vld [vmem:[#allocation10 + $0x188] sm:$0xff]
        %v588 = vld [vmem:[#allocation10 + $0x190] sm:$0xff]
        %v589 = vld [vmem:[#allocation10 + $0x198] sm:$0xff]
        %v590 = vld [vmem:[#allocation10 + $0x1a0] sm:$0xff]
        %v591 = vld [vmem:[#allocation10 + $0x1a8] sm:$0xff]
        %v592 = vld [vmem:[#allocation10 + $0x1b0] sm:$0xff]
        %v593 = vld [vmem:[#allocation10 + $0x1b8] sm:$0xff]
        %v594 = vld [vmem:[#allocation10 + $0x1c0] sm:$0xff]
        %v595 = vld [vmem:[#allocation10 + $0x1c8] sm:$0xff]
        %v596 = vld [vmem:[#allocation10 + $0x1d0] sm:$0xff]
        %v597 = vld [vmem:[#allocation10 + $0x1d8] sm:$0xff]
        %v598 = vld [vmem:[#allocation10 + $0x1e0] sm:$0xff]
        %v599 = vld [vmem:[#allocation10 + $0x1e8] sm:$0xff]
        %v600 = vld [vmem:[#allocation10 + $0x1f0] sm:$0xff]
        %v601 = vld [vmem:[#allocation10 + $0x1f8] sm:$0xff]
        %v602 = vld [vmem:[#allocation11] sm:$0xff]
        %v603 = vld [vmem:[#allocation11 + $0x8] sm:$0xff]
        %v604 = vld [vmem:[#allocation11 + $0x10] sm:$0xff]
        %v605 = vld [vmem:[#allocation11 + $0x18] sm:$0xff]
        %v606 = vld [vmem:[#allocation11 + $0x20] sm:$0xff]
        %v607 = vld [vmem:[#allocation11 + $0x28] sm:$0xff]
        %v608 = vld [vmem:[#allocation11 + $0x30] sm:$0xff]
        %v609 = vld [vmem:[#allocation11 + $0x38] sm:$0xff]
        %v610 = vld [vmem:[#allocation11 + $0x40] sm:$0xff]
        %v611 = vld [vmem:[#allocation11 + $0x48] sm:$0xff]
        %v612 = vld [vmem:[#allocation11 + $0x50] sm:$0xff]
        %v613 = vld [vmem:[#allocation11 + $0x58] sm:$0xff]
        %v614 = vld [vmem:[#allocation11 + $0x60] sm:$0xff]
        %v615 = vld [vmem:[#allocation11 + $0x68] sm:$0xff]
        %v616 = vld [vmem:[#allocation11 + $0x70] sm:$0xff]
        %v617 = vld [vmem:[#allocation11 + $0x78] sm:$0xff]
        %v618 = vld [vmem:[#allocation11 + $0x80] sm:$0xff]
        %v619 = vld [vmem:[#allocation11 + $0x88] sm:$0xff]
        %v620 = vld [vmem:[#allocation11 + $0x90] sm:$0xff]
        %v621 = vld [vmem:[#allocation11 + $0x98] sm:$0xff]
        %v622 = vld [vmem:[#allocation11 + $0xa0] sm:$0xff]
        %v623 = vld [vmem:[#allocation11 + $0xa8] sm:$0xff]
        %v624 = vld [vmem:[#allocation11 + $0xb0] sm:$0xff]
        %v625 = vld [vmem:[#allocation11 + $0xb8] sm:$0xff]
        %v626 = vld [vmem:[#allocation11 + $0xc0] sm:$0xff]
        %v627 = vld [vmem:[#allocation11 + $0xc8] sm:$0xff]
        %v628 = vld [vmem:[#allocation11 + $0xd0] sm:$0xff]
        %v629 = vld [vmem:[#allocation11 + $0xd8] sm:$0xff]
        %v630 = vld [vmem:[#allocation11 + $0xe0] sm:$0xff]
        %v631 = vld [vmem:[#allocation11 + $0xe8] sm:$0xff]
        %v632 = vld [vmem:[#allocation11 + $0xf0] sm:$0xff]
        %v633 = vld [vmem:[#allocation11 + $0xf8] sm:$0xff]
        %v634 = vld [vmem:[#allocation11 + $0x100] sm:$0xff]
        %v635 = vld [vmem:[#allocation11 + $0x108] sm:$0xff]
        %v636 = vld [vmem:[#allocation11 + $0x110] sm:$0xff]
        %v637 = vld [vmem:[#allocation11 + $0x118] sm:$0xff]
        %v638 = vld [vmem:[#allocation11 + $0x120] sm:$0xff]
        %v639 = vld [vmem:[#allocation11 + $0x128] sm:$0xff]
        %v640 = vld [vmem:[#allocation11 + $0x130] sm:$0xff]
        %v641 = vld [vmem:[#allocation11 + $0x138] sm:$0xff]
        %v642 = vld [vmem:[#allocation11 + $0x140] sm:$0xff]
        %v643 = vld [vmem:[#allocation11 + $0x148] sm:$0xff]
        %v644 = vld [vmem:[#allocation11 + $0x150] sm:$0xff]
        %v645 = vld [vmem:[#allocation11 + $0x158] sm:$0xff]
        %v646 = vld [vmem:[#allocation11 + $0x160] sm:$0xff]
        %v647 = vld [vmem:[#allocation11 + $0x168] sm:$0xff]
        %v648 = vld [vmem:[#allocation11 + $0x170] sm:$0xff]
        %v649 = vld [vmem:[#allocation11 + $0x178] sm:$0xff]
        %v650 = vld [vmem:[#allocation11 + $0x180] sm:$0xff]
        %v651 = vld [vmem:[#allocation11 + $0x188] sm:$0xff]
        %v652 = vld [vmem:[#allocation11 + $0x190] sm:$0xff]
        %v653 = vld [vmem:[#allocation11 + $0x198] sm:$0xff]
        %v654 = vld [vmem:[#allocation11 + $0x1a0] sm:$0xff]
        %v655 = vld [vmem:[#allocation11 + $0x1a8] sm:$0xff]
        %v656 = vld [vmem:[#allocation11 + $0x1b0] sm:$0xff]
        %v657 = vld [vmem:[#allocation11 + $0x1b8] sm:$0xff]
        %v658 = vld [vmem:[#allocation11 + $0x1c0] sm:$0xff]
        %v659 = vld [vmem:[#allocation11 + $0x1c8] sm:$0xff]
        %v660 = vld [vmem:[#allocation11 + $0x1d0] sm:$0xff]
        %v661 = vld [vmem:[#allocation11 + $0x1d8] sm:$0xff]
        %v662 = vld [vmem:[#allocation11 + $0x1e0] sm:$0xff]
        %v663 = vld [vmem:[#allocation11 + $0x1e8] sm:$0xff]
        %v664 = vld [vmem:[#allocation11 + $0x1f0] sm:$0xff]
        %v665 = vld [vmem:[#allocation11 + $0x1f8] sm:$0xff]
        %v666 = vld [vmem:[#allocation13] sm:$0xff]
        %v667 = vld [vmem:[#allocation13 + $0x8] sm:$0xff]
        %v668 = vld [vmem:[#allocation13 + $0x10] sm:$0xff]
        %v669 = vld [vmem:[#allocation13 + $0x18] sm:$0xff]
        %v670 = vld [vmem:[#allocation13 + $0x20] sm:$0xff]
        %v671 = vld [vmem:[#allocation13 + $0x28] sm:$0xff]
        %v672 = vld [vmem:[#allocation13 + $0x30] sm:$0xff]
        %v673 = vld [vmem:[#allocation13 + $0x38] sm:$0xff]
        %v674 = vld [vmem:[#allocation13 + $0x40] sm:$0xff]
        %v675 = vld [vmem:[#allocation13 + $0x48] sm:$0xff]
        %v676 = vld [vmem:[#allocation13 + $0x50] sm:$0xff]
        %v677 = vld [vmem:[#allocation13 + $0x58] sm:$0xff]
        %v678 = vld [vmem:[#allocation13 + $0x60] sm:$0xff]
        %v679 = vld [vmem:[#allocation13 + $0x68] sm:$0xff]
        %v680 = vld [vmem:[#allocation13 + $0x70] sm:$0xff]
        %v681 = vld [vmem:[#allocation13 + $0x78] sm:$0xff]
        %v682 = vld [vmem:[#allocation13 + $0x80] sm:$0xff]
        %v683 = vld [vmem:[#allocation13 + $0x88] sm:$0xff]
        %v684 = vld [vmem:[#allocation13 + $0x90] sm:$0xff]
        %v685 = vld [vmem:[#allocation13 + $0x98] sm:$0xff]
        %v686 = vld [vmem:[#allocation13 + $0xa0] sm:$0xff]
        %v687 = vld [vmem:[#allocation13 + $0xa8] sm:$0xff]
        %v688 = vld [vmem:[#allocation13 + $0xb0] sm:$0xff]
        %v689 = vld [vmem:[#allocation13 + $0xb8] sm:$0xff]
        %v690 = vld [vmem:[#allocation13 + $0xc0] sm:$0xff]
        %v691 = vld [vmem:[#allocation13 + $0xc8] sm:$0xff]
        %v692 = vld [vmem:[#allocation13 + $0xd0] sm:$0xff]
        %v693 = vld [vmem:[#allocation13 + $0xd8] sm:$0xff]
        %v694 = vld [vmem:[#allocation13 + $0xe0] sm:$0xff]
        %v695 = vld [vmem:[#allocation13 + $0xe8] sm:$0xff]
        %v696 = vld [vmem:[#allocation13 + $0xf0] sm:$0xff]
        %v697 = vld [vmem:[#allocation13 + $0xf8] sm:$0xff]
        %v698 = vld [vmem:[#allocation13 + $0x100] sm:$0xff]
        %v699 = vld [vmem:[#allocation13 + $0x108] sm:$0xff]
        %v700 = vld [vmem:[#allocation13 + $0x110] sm:$0xff]
        %v701 = vld [vmem:[#allocation13 + $0x118] sm:$0xff]
        %v702 = vld [vmem:[#allocation13 + $0x120] sm:$0xff]
        %v703 = vld [vmem:[#allocation13 + $0x128] sm:$0xff]
        %v704 = vld [vmem:[#allocation13 + $0x130] sm:$0xff]
        %v705 = vld [vmem:[#allocation13 + $0x138] sm:$0xff]
        %v706 = vld [vmem:[#allocation13 + $0x140] sm:$0xff]
        %v707 = vld [vmem:[#allocation13 + $0x148] sm:$0xff]
        %v708 = vld [vmem:[#allocation13 + $0x150] sm:$0xff]
        %v709 = vld [vmem:[#allocation13 + $0x158] sm:$0xff]
        %v710 = vld [vmem:[#allocation13 + $0x160] sm:$0xff]
        %v711 = vld [vmem:[#allocation13 + $0x168] sm:$0xff]
        %v712 = vld [vmem:[#allocation13 + $0x170] sm:$0xff]
        %v713 = vld [vmem:[#allocation13 + $0x178] sm:$0xff]
        %v714 = vld [vmem:[#allocation13 + $0x180] sm:$0xff]
        %v715 = vld [vmem:[#allocation13 + $0x188] sm:$0xff]
        %v716 = vld [vmem:[#allocation13 + $0x190] sm:$0xff]
        %v717 = vld [vmem:[#allocation13 + $0x198] sm:$0xff]
        %v718 = vld [vmem:[#allocation13 + $0x1a0] sm:$0xff]
        %v719 = vld [vmem:[#allocation13 + $0x1a8] sm:$0xff]
        %v720 = vld [vmem:[#allocation13 + $0x1b0] sm:$0xff]
        %v721 = vld [vmem:[#allocation13 + $0x1b8] sm:$0xff]
        %v722 = vld [vmem:[#allocation13 + $0x1c0] sm:$0xff]
        %v723 = vld [vmem:[#allocation13 + $0x1c8] sm:$0xff]
        %v724 = vld [vmem:[#allocation13 + $0x1d0] sm:$0xff]
        %v725 = vld [vmem:[#allocation13 + $0x1d8] sm:$0xff]
        %v726 = vld [vmem:[#allocation13 + $0x1e0] sm:$0xff]
        %v727 = vld [vmem:[#allocation13 + $0x1e8] sm:$0xff]
        %v728 = vld [vmem:[#allocation13 + $0x1f0] sm:$0xff]
        %v729 = vld [vmem:[#allocation13 + $0x1f8] sm:$0xff]
        %v730 = vld [vmem:[%s5] sm:$0xf]
        %v731 = vld [vmem:[%s6] sm:$0x1]
        %v732 = vld [vmem:[%s7] sm:$0x1]
        %v733 = vld [vmem:[#allocation14] sm:$0xff]
        %v734 = vld [vmem:[#allocation14 + $0x8] sm:$0xff]
        %v735 = vld [vmem:[#allocation14 + $0x10] sm:$0xff]
        %v736 = vld [vmem:[#allocation14 + $0x18] sm:$0xff]
        %v737 = vld [vmem:[#allocation14 + $0x20] sm:$0xff]
        %v738 = vld [vmem:[#allocation14 + $0x28] sm:$0xff]
        %v739 = vld [vmem:[#allocation14 + $0x30] sm:$0xff]
        %v740 = vld [vmem:[#allocation14 + $0x38] sm:$0xff]
        %v741 = vld [vmem:[#allocation14 + $0x40] sm:$0xff]
        %v742 = vld [vmem:[#allocation14 + $0x48] sm:$0xff]
        %v743 = vld [vmem:[#allocation14 + $0x50] sm:$0xff]
        %v744 = vld [vmem:[#allocation14 + $0x58] sm:$0xff]
        %v745 = vld [vmem:[#allocation14 + $0x60] sm:$0xff]
        %v746 = vld [vmem:[#allocation14 + $0x68] sm:$0xff]
        %v747 = vld [vmem:[#allocation14 + $0x70] sm:$0xff]
        %v748 = vld [vmem:[#allocation14 + $0x78] sm:$0xff]
        %v749 = vld [vmem:[%s9] sm:$0x1]
        %v750 = vld [vmem:[#allocation2] sm:$0xff]
        %s751 = scalar_lea.vmem [#allocation2], 8
        %v752 = vld [vmem:[%s751] sm:$0xff]
        %v753 = vld [vmem:[#allocation3] sm:$0xff]
        %s754 = scalar_lea.vmem [#allocation3], 8
        %v755 = vld [vmem:[%s754] sm:$0xff]
        %v756 = vld [vmem:[%s456] sm:$0xff]
        %v757 = vld [vmem:[%s456 + $0x8] sm:$0xff]
        %v758 = vld [vmem:[%s456 + $0x10] sm:$0xff]
        %v759 = vld [vmem:[%s456 + $0x18] sm:$0xff]
        %760 = vmatprep.subr.mxu0 %v599
        %761 = vmatpush1.msra.mxu0 %v598
        %762 = vmatprep.subr.mxu0 %v595
        %763 = vmatpush1.msra.mxu0 %v594
        %764 = vmatprep.subr.mxu0 %v591
        %765 = vmatpush1.msra.mxu0 %v590
        %766 = vmatprep.subr.mxu0 %v587
        %767 = vmatpush1.msra.mxu0 %v586
        %768 = vmatprep.subr.mxu0 %v583
        %769 = vmatpush1.msra.mxu0 %v582
        %770 = vmatprep.subr.mxu0 %v579
        %771 = vmatpush1.msra.mxu0 %v578
        %772 = vmatprep.subr.mxu0 %v575
        %773 = vmatpush1.msra.mxu0 %v574
        %774 = vmatprep.subr.mxu0 %v571
        %775 = vmatpush1.msra.mxu0 %v570
        %776 = vmatprep.subr.mxu0 %v567
        %777 = vmatpush1.msra.mxu0 %v566
        %778 = vmatprep.subr.mxu0 %v563
        %779 = vmatpush1.msra.mxu0 %v562
        %780 = vmatprep.subr.mxu0 %v559
        %781 = vmatpush1.msra.mxu0 %v558
        %782 = vmatprep.subr.mxu0 %v555
        %783 = vmatpush1.msra.mxu0 %v554
        %784 = vmatprep.subr.mxu0 %v551
        %785 = vmatpush1.msra.mxu0 %v550
        %786 = vmatprep.subr.mxu0 %v547
        %787 = vmatpush1.msra.mxu0 %v546
        %788 = vmatprep.subr.mxu0 %v543
        %789 = vmatpush1.msra.mxu0 %v542
        %790 = vmatprep.subr.mxu0 %v539
        %791 = vmatpush1.msra.mxu0 %v538
        %792 = vmatprep.subr.mxu0 0.0
        %793 = vmatpush2.msra.mxu0 0.0
        %794 = vmatprep.subr.mxu0 0.0
        %795 = vmatpush2.msra.mxu0 0.0
        %796 = vmatprep.subr.mxu0 0.0
        %797 = vmatpush2.msra.mxu0 0.0
        %798 = vmatprep.subr.mxu0 0.0
        %799 = vmatpush2.msra.mxu0 0.0
        %800 = vmatprep.subr.mxu0 0.0
        %801 = vmatpush2.msra.mxu0 0.0
        %802 = vmatprep.subr.mxu0 0.0
        %803 = vmatpush2.msra.mxu0 0.0
        %804 = vmatprep.subr.mxu0 0.0
        %805 = vmatpush2.msra.mxu0 0.0
        %806 = vmatprep.subr.mxu0 0.0
        %807 = vmatpush2.msra.mxu0 0.0
        %808 = vmatprep.subr.mxu0 0.0
        %809 = vmatpush2.msra.mxu0 0.0
        %810 = vmatprep.subr.mxu0 0.0
        %811 = vmatpush2.msra.mxu0 0.0
        %812 = vmatprep.subr.mxu0 0.0
        %813 = vmatpush2.msra.mxu0 0.0
        %814 = vmatprep.subr.mxu0 0.0
        %815 = vmatpush2.msra.mxu0 0.0
        %816 = vmatprep.subr.mxu0 0.0
        %817 = vmatpush2.msra.mxu0 0.0
        %818 = vmatprep.subr.mxu0 0.0
        %819 = vmatpush2.msra.mxu0 0.0
        %820 = vmatprep.subr.mxu0 0.0
        %821 = vmatpush2.msra.mxu0 0.0
        %822 = vmatprep.subr.mxu0 0.0
        %823 = vmatpush2.msra.mxu0 0.0
        %824 = vmatprep.mubr.f32.mxu0 0.0
        %825 = vmatmul.mubr.f32.gmra.mxu0 %v750
        %v826 = vpop.f32.mrf.mxu0
        %v827 = vadd.f32 0.0, %v826
        %v828 = vpop.f32.mrf.mxu0
        %v829 = vadd.f32 0.0, %v828
        %830 = vdwg.mxu0
        %831 = vmatprep.subr.mxu0 %v601
        %832 = vmatpush1.msra.mxu0 %v600
        %833 = vmatprep.subr.mxu0 %v597
        %834 = vmatpush1.msra.mxu0 %v596
        %835 = vmatprep.subr.mxu0 %v593
        %836 = vmatpush1.msra.mxu0 %v592
        %837 = vmatprep.subr.mxu0 %v589
        %838 = vmatpush1.msra.mxu0 %v588
        %839 = vmatprep.subr.mxu0 %v585
        %840 = vmatpush1.msra.mxu0 %v584
        %841 = vmatprep.subr.mxu0 %v581
        %842 = vmatpush1.msra.mxu0 %v580
        %843 = vmatprep.subr.mxu0 %v577
        %844 = vmatpush1.msra.mxu0 %v576
        %845 = vmatprep.subr.mxu0 %v573
        %846 = vmatpush1.msra.mxu0 %v572
        %847 = vmatprep.subr.mxu0 %v569
        %848 = vmatpush1.msra.mxu0 %v568
        %849 = vmatprep.subr.mxu0 %v565
        %850 = vmatpush1.msra.mxu0 %v564
        %851 = vmatprep.subr.mxu0 %v561
        %852 = vmatpush1.msra.mxu0 %v560
        %853 = vmatprep.subr.mxu0 %v557
        %854 = vmatpush1.msra.mxu0 %v556
        %855 = vmatprep.subr.mxu0 %v553
        %856 = vmatpush1.msra.mxu0 %v552
        %857 = vmatprep.subr.mxu0 %v549
        %858 = vmatpush1.msra.mxu0 %v548
        %859 = vmatprep.subr.mxu0 %v545
        %860 = vmatpush1.msra.mxu0 %v544
        %861 = vmatprep.subr.mxu0 %v541
        %862 = vmatpush1.msra.mxu0 %v540
        %863 = vmatprep.subr.mxu0 0.0
        %864 = vmatpush2.msra.mxu0 0.0
        %865 = vmatprep.subr.mxu0 0.0
        %866 = vmatpush2.msra.mxu0 0.0
        %867 = vmatprep.subr.mxu0 0.0
        %868 = vmatpush2.msra.mxu0 0.0
        %869 = vmatprep.subr.mxu0 0.0
        %870 = vmatpush2.msra.mxu0 0.0
        %871 = vmatprep.subr.mxu0 0.0
        %872 = vmatpush2.msra.mxu0 0.0
        %873 = vmatprep.subr.mxu0 0.0
        %874 = vmatpush2.msra.mxu0 0.0
        %875 = vmatprep.subr.mxu0 0.0
        %876 = vmatpush2.msra.mxu0 0.0
        %877 = vmatprep.subr.mxu0 0.0
        %878 = vmatpush2.msra.mxu0 0.0
        %879 = vmatprep.subr.mxu0 0.0
        %880 = vmatpush2.msra.mxu0 0.0
        %881 = vmatprep.subr.mxu0 0.0
        %882 = vmatpush2.msra.mxu0 0.0
        %883 = vmatprep.subr.mxu0 0.0
        %884 = vmatpush2.msra.mxu0 0.0
        %885 = vmatprep.subr.mxu0 0.0
        %886 = vmatpush2.msra.mxu0 0.0
        %887 = vmatprep.subr.mxu0 0.0
        %888 = vmatpush2.msra.mxu0 0.0
        %889 = vmatprep.subr.mxu0 0.0
        %890 = vmatpush2.msra.mxu0 0.0
        %891 = vmatprep.subr.mxu0 0.0
        %892 = vmatpush2.msra.mxu0 0.0
        %893 = vmatprep.subr.mxu0 0.0
        %894 = vmatpush2.msra.mxu0 0.0
        %895 = vmatprep.mubr.f32.mxu0 0.0
        %896 = vmatmul.mubr.f32.gmra.mxu0 %v750
        %v897 = vpop.f32.mrf.mxu0
        %v898 = vadd.f32 0.0, %v897
        %v899 = vpop.f32.mrf.mxu0
        %v900 = vadd.f32 0.0, %v899
        %901 = vdwg.mxu0
        %v902 = vadd.f32 %v756, %v827
        %v903 = vadd.f32 %v757, %v829
        %v904 = vadd.f32 %v758, %v898
        %v905 = vadd.f32 %v759, %v900
        %v906 = vmul.f32 %v902, 1.442695
        %v907 = vpow.pop %v906
        %v908 = vmul.f32 %v903, 1.442695
        %v909 = vpow.pop %v908
        %v910 = vtanh.pop %v904
        %v911 = vxor.u32 %v905, 2147483648
        %v912 = vmul.f32 %v911, 1.442695
        %v913 = vpow.pop %v912
        %v914 = vadd.f32 %v913, 1.0
        %v915 = vrcp.pop %v914
        %v916 = vmul.f32 1.0, %v915
        %v917 = vmul.f32 %v909, %v753
        %v918 = vmul.f32 %v907, %v910
        %v919 = vadd.f32 %v917, %v918
        %v920 = vtanh.pop %v919
        %v921 = vmul.f32 %v916, %v920
        %922 = vmatprep.subr.mxu0 %v727
        %923 = vmatpush1.msra.mxu0 %v726
        %924 = vmatprep.subr.mxu0 %v723
        %925 = vmatpush1.msra.mxu0 %v722
        %926 = vmatprep.subr.mxu0 %v719
        %927 = vmatpush1.msra.mxu0 %v718
        %928 = vmatprep.subr.mxu0 %v715
        %929 = vmatpush1.msra.mxu0 %v714
        %930 = vmatprep.subr.mxu0 %v711
        %931 = vmatpush1.msra.mxu0 %v710
        %932 = vmatprep.subr.mxu0 %v707
        %933 = vmatpush1.msra.mxu0 %v706
        %934 = vmatprep.subr.mxu0 %v703
        %935 = vmatpush1.msra.mxu0 %v702
        %936 = vmatprep.subr.mxu0 %v699
        %937 = vmatpush1.msra.mxu0 %v698
        %938 = vmatprep.subr.mxu0 %v695
        %939 = vmatpush1.msra.mxu0 %v694
        %940 = vmatprep.subr.mxu0 %v691
        %941 = vmatpush1.msra.mxu0 %v690
        %942 = vmatprep.subr.mxu0 %v687
        %943 = vmatpush1.msra.mxu0 %v686
        %944 = vmatprep.subr.mxu0 %v683
        %945 = vmatpush1.msra.mxu0 %v682
        %946 = vmatprep.subr.mxu0 %v679
        %947 = vmatpush1.msra.mxu0 %v678
        %948 = vmatprep.subr.mxu0 %v675
        %949 = vmatpush1.msra.mxu0 %v674
        %950 = vmatprep.subr.mxu0 %v671
        %951 = vmatpush1.msra.mxu0 %v670
        %952 = vmatprep.subr.mxu0 %v667
        %953 = vmatpush1.msra.mxu0 %v666
        %954 = vmatprep.subr.mxu0 0.0
        %955 = vmatpush2.msra.mxu0 0.0
        %956 = vmatprep.subr.mxu0 0.0
        %957 = vmatpush2.msra.mxu0 0.0
        %958 = vmatprep.subr.mxu0 0.0
        %959 = vmatpush2.msra.mxu0 0.0
        %960 = vmatprep.subr.mxu0 0.0
        %961 = vmatpush2.msra.mxu0 0.0
        %962 = vmatprep.subr.mxu0 0.0
        %963 = vmatpush2.msra.mxu0 0.0
        %964 = vmatprep.subr.mxu0 0.0
        %965 = vmatpush2.msra.mxu0 0.0
        %966 = vmatprep.subr.mxu0 0.0
        %967 = vmatpush2.msra.mxu0 0.0
        %968 = vmatprep.subr.mxu0 0.0
        %969 = vmatpush2.msra.mxu0 0.0
        %970 = vmatprep.subr.mxu0 0.0
        %971 = vmatpush2.msra.mxu0 0.0
        %972 = vmatprep.subr.mxu0 0.0
        %973 = vmatpush2.msra.mxu0 0.0
        %974 = vmatprep.subr.mxu0 0.0
        %975 = vmatpush2.msra.mxu0 0.0
        %976 = vmatprep.subr.mxu0 0.0
        %977 = vmatpush2.msra.mxu0 0.0
        %978 = vmatprep.subr.mxu0 0.0
        %979 = vmatpush2.msra.mxu0 0.0
        %980 = vmatprep.subr.mxu0 0.0
        %981 = vmatpush2.msra.mxu0 0.0
        %982 = vmatprep.subr.mxu0 0.0
        %983 = vmatpush2.msra.mxu0 0.0
        %984 = vmatprep.subr.mxu0 0.0
        %985 = vmatpush2.msra.mxu0 0.0
        %986 = vmatprep.mubr.f32.mxu0 0.0
        %987 = vmatmul.mubr.f32.gmra.mxu0 %v752
        %v988 = vpop.f32.mrf.mxu0
        %v989 = vadd.f32 0.0, %v988
        %v990 = vpop.f32.mrf.mxu0
        %v991 = vadd.f32 0.0, %v990
        %992 = vdwg.mxu0
        %993 = vmatprep.subr.mxu0 %v729
        %994 = vmatpush1.msra.mxu0 %v728
        %995 = vmatprep.subr.mxu0 %v725
        %996 = vmatpush1.msra.mxu0 %v724
        %997 = vmatprep.subr.mxu0 %v721
        %998 = vmatpush1.msra.mxu0 %v720
        %999 = vmatprep.subr.mxu0 %v717
        %1000 = vmatpush1.msra.mxu0 %v716
        %1001 = vmatprep.subr.mxu0 %v713
        %1002 = vmatpush1.msra.mxu0 %v712
        %1003 = vmatprep.subr.mxu0 %v709
        %1004 = vmatpush1.msra.mxu0 %v708
        %1005 = vmatprep.subr.mxu0 %v705
        %1006 = vmatpush1.msra.mxu0 %v704
        %1007 = vmatprep.subr.mxu0 %v701
        %1008 = vmatpush1.msra.mxu0 %v700
        %1009 = vmatprep.subr.mxu0 %v697
        %1010 = vmatpush1.msra.mxu0 %v696
        %1011 = vmatprep.subr.mxu0 %v693
        %1012 = vmatpush1.msra.mxu0 %v692
        %1013 = vmatprep.subr.mxu0 %v689
        %1014 = vmatpush1.msra.mxu0 %v688
        %1015 = vmatprep.subr.mxu0 %v685
        %1016 = vmatpush1.msra.mxu0 %v684
        %1017 = vmatprep.subr.mxu0 %v681
        %1018 = vmatpush1.msra.mxu0 %v680
        %1019 = vmatprep.subr.mxu0 %v677
        %1020 = vmatpush1.msra.mxu0 %v676
        %1021 = vmatprep.subr.mxu0 %v673
        %1022 = vmatpush1.msra.mxu0 %v672
        %1023 = vmatprep.subr.mxu0 %v669
        %1024 = vmatpush1.msra.mxu0 %v668
        %1025 = vmatprep.subr.mxu0 0.0
        %1026 = vmatpush2.msra.mxu0 0.0
        %1027 = vmatprep.subr.mxu0 0.0
        %1028 = vmatpush2.msra.mxu0 0.0
        %1029 = vmatprep.subr.mxu0 0.0
        %1030 = vmatpush2.msra.mxu0 0.0
        %1031 = vmatprep.subr.mxu0 0.0
        %1032 = vmatpush2.msra.mxu0 0.0
        %1033 = vmatprep.subr.mxu0 0.0
        %1034 = vmatpush2.msra.mxu0 0.0
        %1035 = vmatprep.subr.mxu0 0.0
        %1036 = vmatpush2.msra.mxu0 0.0
        %1037 = vmatprep.subr.mxu0 0.0
        %1038 = vmatpush2.msra.mxu0 0.0
        %1039 = vmatprep.subr.mxu0 0.0
        %1040 = vmatpush2.msra.mxu0 0.0
        %1041 = vmatprep.subr.mxu0 0.0
        %1042 = vmatpush2.msra.mxu0 0.0
        %1043 = vmatprep.subr.mxu0 0.0
        %1044 = vmatpush2.msra.mxu0 0.0
        %1045 = vmatprep.subr.mxu0 0.0
        %1046 = vmatpush2.msra.mxu0 0.0
        %1047 = vmatprep.subr.mxu0 0.0
        %1048 = vmatpush2.msra.mxu0 0.0
        %1049 = vmatprep.subr.mxu0 0.0
        %1050 = vmatpush2.msra.mxu0 0.0
        %1051 = vmatprep.subr.mxu0 0.0
        %1052 = vmatpush2.msra.mxu0 0.0
        %1053 = vmatprep.subr.mxu0 0.0
        %1054 = vmatpush2.msra.mxu0 0.0
        %1055 = vmatprep.subr.mxu0 0.0
        %1056 = vmatpush2.msra.mxu0 0.0
        %1057 = vmatprep.mubr.f32.mxu0 0.0
        %1058 = vmatmul.mubr.f32.gmra.mxu0 %v752
        %v1059 = vpop.f32.mrf.mxu0
        %v1060 = vadd.f32 0.0, %v1059
        %v1061 = vpop.f32.mrf.mxu0
        %v1062 = vadd.f32 0.0, %v1061
        %1063 = vdwg.mxu0
        %1064 = vmatprep.subr.mxu0 %v663
        %1065 = vmatpush1.msra.mxu0 %v662
        %1066 = vmatprep.subr.mxu0 %v659
        %1067 = vmatpush1.msra.mxu0 %v658
        %1068 = vmatprep.subr.mxu0 %v655
        %1069 = vmatpush1.msra.mxu0 %v654
        %1070 = vmatprep.subr.mxu0 %v651
        %1071 = vmatpush1.msra.mxu0 %v650
        %1072 = vmatprep.subr.mxu0 %v647
        %1073 = vmatpush1.msra.mxu0 %v646
        %1074 = vmatprep.subr.mxu0 %v643
        %1075 = vmatpush1.msra.mxu0 %v642
        %1076 = vmatprep.subr.mxu0 %v639
        %1077 = vmatpush1.msra.mxu0 %v638
        %1078 = vmatprep.subr.mxu0 %v635
        %1079 = vmatpush1.msra.mxu0 %v634
        %1080 = vmatprep.subr.mxu0 %v631
        %1081 = vmatpush1.msra.mxu0 %v630
        %1082 = vmatprep.subr.mxu0 %v627
        %1083 = vmatpush1.msra.mxu0 %v626
        %1084 = vmatprep.subr.mxu0 %v623
        %1085 = vmatpush1.msra.mxu0 %v622
        %1086 = vmatprep.subr.mxu0 %v619
        %1087 = vmatpush1.msra.mxu0 %v618
        %1088 = vmatprep.subr.mxu0 %v615
        %1089 = vmatpush1.msra.mxu0 %v614
        %1090 = vmatprep.subr.mxu0 %v611
        %1091 = vmatpush1.msra.mxu0 %v610
        %1092 = vmatprep.subr.mxu0 %v607
        %1093 = vmatpush1.msra.mxu0 %v606
        %1094 = vmatprep.subr.mxu0 %v603
        %1095 = vmatpush1.msra.mxu0 %v602
        %1096 = vmatprep.subr.mxu0 0.0
        %1097 = vmatpush2.msra.mxu0 0.0
        %1098 = vmatprep.subr.mxu0 0.0
        %1099 = vmatpush2.msra.mxu0 0.0
        %1100 = vmatprep.subr.mxu0 0.0
        %1101 = vmatpush2.msra.mxu0 0.0
        %1102 = vmatprep.subr.mxu0 0.0
        %1103 = vmatpush2.msra.mxu0 0.0
        %1104 = vmatprep.subr.mxu0 0.0
        %1105 = vmatpush2.msra.mxu0 0.0
        %1106 = vmatprep.subr.mxu0 0.0
        %1107 = vmatpush2.msra.mxu0 0.0
        %1108 = vmatprep.subr.mxu0 0.0
        %1109 = vmatpush2.msra.mxu0 0.0
        %1110 = vmatprep.subr.mxu0 0.0
        %1111 = vmatpush2.msra.mxu0 0.0
        %1112 = vmatprep.subr.mxu0 0.0
        %1113 = vmatpush2.msra.mxu0 0.0
        %1114 = vmatprep.subr.mxu0 0.0
        %1115 = vmatpush2.msra.mxu0 0.0
        %1116 = vmatprep.subr.mxu0 0.0
        %1117 = vmatpush2.msra.mxu0 0.0
        %1118 = vmatprep.subr.mxu0 0.0
        %1119 = vmatpush2.msra.mxu0 0.0
        %1120 = vmatprep.subr.mxu0 0.0
        %1121 = vmatpush2.msra.mxu0 0.0
        %1122 = vmatprep.subr.mxu0 0.0
        %1123 = vmatpush2.msra.mxu0 0.0
        %1124 = vmatprep.subr.mxu0 0.0
        %1125 = vmatpush2.msra.mxu0 0.0
        %1126 = vmatprep.subr.mxu0 0.0
        %1127 = vmatpush2.msra.mxu0 0.0
        %1128 = vmatprep.mubr.f32.mxu0 0.0
        %1129 = vmatmul.mubr.f32.gmra.mxu0 %v921
        %v1130 = vpop.f32.mrf.mxu0
        %v1131 = vadd.f32 %v989, %v1130
        %v1132 = vpop.f32.mrf.mxu0
        %v1133 = vadd.f32 %v991, %v1132
        %1134 = vdwg.mxu0
        %1135 = vmatprep.subr.mxu0 %v665
        %1136 = vmatpush1.msra.mxu0 %v664
        %1137 = vmatprep.subr.mxu0 %v661
        %1138 = vmatpush1.msra.mxu0 %v660
        %1139 = vmatprep.subr.mxu0 %v657
        %1140 = vmatpush1.msra.mxu0 %v656
        %1141 = vmatprep.subr.mxu0 %v653
        %1142 = vmatpush1.msra.mxu0 %v652
        %1143 = vmatprep.subr.mxu0 %v649
        %1144 = vmatpush1.msra.mxu0 %v648
        %1145 = vmatprep.subr.mxu0 %v645
        %1146 = vmatpush1.msra.mxu0 %v644
        %1147 = vmatprep.subr.mxu0 %v641
        %1148 = vmatpush1.msra.mxu0 %v640
        %1149 = vmatprep.subr.mxu0 %v637
        %1150 = vmatpush1.msra.mxu0 %v636
        %1151 = vmatprep.subr.mxu0 %v633
        %1152 = vmatpush1.msra.mxu0 %v632
        %1153 = vmatprep.subr.mxu0 %v629
        %1154 = vmatpush1.msra.mxu0 %v628
        %1155 = vmatprep.subr.mxu0 %v625
        %1156 = vmatpush1.msra.mxu0 %v624
        %1157 = vmatprep.subr.mxu0 %v621
        %1158 = vmatpush1.msra.mxu0 %v620
        %1159 = vmatprep.subr.mxu0 %v617
        %1160 = vmatpush1.msra.mxu0 %v616
        %1161 = vmatprep.subr.mxu0 %v613
        %1162 = vmatpush1.msra.mxu0 %v612
        %1163 = vmatprep.subr.mxu0 %v609
        %1164 = vmatpush1.msra.mxu0 %v608
        %1165 = vmatprep.subr.mxu0 %v605
        %1166 = vmatpush1.msra.mxu0 %v604
        %1167 = vmatprep.subr.mxu0 0.0
        %1168 = vmatpush2.msra.mxu0 0.0
        %1169 = vmatprep.subr.mxu0 0.0
        %1170 = vmatpush2.msra.mxu0 0.0
        %1171 = vmatprep.subr.mxu0 0.0
        %1172 = vmatpush2.msra.mxu0 0.0
        %1173 = vmatprep.subr.mxu0 0.0
        %1174 = vmatpush2.msra.mxu0 0.0
        %1175 = vmatprep.subr.mxu0 0.0
        %1176 = vmatpush2.msra.mxu0 0.0
        %1177 = vmatprep.subr.mxu0 0.0
        %1178 = vmatpush2.msra.mxu0 0.0
        %1179 = vmatprep.subr.mxu0 0.0
        %1180 = vmatpush2.msra.mxu0 0.0
        %1181 = vmatprep.subr.mxu0 0.0
        %1182 = vmatpush2.msra.mxu0 0.0
        %1183 = vmatprep.subr.mxu0 0.0
        %1184 = vmatpush2.msra.mxu0 0.0
        %1185 = vmatprep.subr.mxu0 0.0
        %1186 = vmatpush2.msra.mxu0 0.0
        %1187 = vmatprep.subr.mxu0 0.0
        %1188 = vmatpush2.msra.mxu0 0.0
        %1189 = vmatprep.subr.mxu0 0.0
        %1190 = vmatpush2.msra.mxu0 0.0
        %1191 = vmatprep.subr.mxu0 0.0
        %1192 = vmatpush2.msra.mxu0 0.0
        %1193 = vmatprep.subr.mxu0 0.0
        %1194 = vmatpush2.msra.mxu0 0.0
        %1195 = vmatprep.subr.mxu0 0.0
        %1196 = vmatpush2.msra.mxu0 0.0
        %1197 = vmatprep.subr.mxu0 0.0
        %1198 = vmatpush2.msra.mxu0 0.0
        %1199 = vmatprep.mubr.f32.mxu0 0.0
        %1200 = vmatmul.mubr.f32.gmra.mxu0 %v921
        %v1201 = vpop.f32.mrf.mxu0
        %v1202 = vadd.f32 %v1060, %v1201
        %v1203 = vpop.f32.mrf.mxu0
        %v1204 = vadd.f32 %v1062, %v1203
        %1205 = vdwg.mxu0
        %v1207 = vlaneseq
        %v1208 = vshrl.u32 %v1207, 7
        %v1209 = vsub.s32 0, %v1208
        %v1210 = vrot.slane %v730, %v1209
        %v1211 = vlaneseq
        %v1212 = vshrl.u32 %v1211, 7
        %v1213 = vsub.s32 1, %v1212
        %v1214 = vrot.slane %v730, %v1213
        %v1215 = vlaneseq
        %v1216 = vshrl.u32 %v1215, 7
        %v1217 = vsub.s32 2, %v1216
        %v1218 = vrot.slane %v730, %v1217
        %v1219 = vlaneseq
        %v1220 = vshrl.u32 %v1219, 7
        %v1221 = vsub.s32 3, %v1220
        %v1222 = vrot.slane %v730, %v1221
        %v1227 = vadd.f32 %v1131, %v1210
        %v1228 = vadd.f32 %v1133, %v1214
        %v1229 = vadd.f32 %v1202, %v1218
        %v1230 = vadd.f32 %v1204, %v1222
        %v1231 = vmul.f32 %v1227, 1.442695
        %v1232 = vpow.pop %v1231
        %v1233 = vmul.f32 %v1228, 1.442695
        %v1234 = vpow.pop %v1233
        %v1235 = vtanh.pop %v1229
        %v1236 = vxor.u32 %v1230, 2147483648
        %v1237 = vmul.f32 %v1236, 1.442695
        %v1238 = vpow.pop %v1237
        %v1239 = vadd.f32 %v1238, 1.0
        %v1240 = vrcp.pop %v1239
        %v1241 = vmul.f32 1.0, %v1240
        %v1242 = vmul.f32 %v1234, %v755
        %v1243 = vmul.f32 %v1232, %v1235
        %v1244 = vadd.f32 %v1242, %v1243
        %v1245 = vtanh.pop %v1244
        %v1246 = vmul.f32 %v1241, %v1245
        %1247 = vst [vmem:[#allocation4] sm:$0xff] %v1246
        %s1248 = scalar_lea.vmem %s456, 32 [#allocation5]
        %v1249 = vld [vmem:[%s1248] sm:$0xff]
        %v1250 = vld [vmem:[%s1248 + $0x8] sm:$0xff]
        %v1251 = vld [vmem:[%s1248 + $0x10] sm:$0xff]
        %v1252 = vld [vmem:[%s1248 + $0x18] sm:$0xff]
        %1253 = vmatprep.subr.mxu0 %v599
        %1254 = vmatpush1.msra.mxu0 %v598
        %1255 = vmatprep.subr.mxu0 %v595
        %1256 = vmatpush1.msra.mxu0 %v594
        %1257 = vmatprep.subr.mxu0 %v591
        %1258 = vmatpush1.msra.mxu0 %v590
        %1259 = vmatprep.subr.mxu0 %v587
        %1260 = vmatpush1.msra.mxu0 %v586
        %1261 = vmatprep.subr.mxu0 %v583
        %1262 = vmatpush1.msra.mxu0 %v582
        %1263 = vmatprep.subr.mxu0 %v579
        %1264 = vmatpush1.msra.mxu0 %v578
        %1265 = vmatprep.subr.mxu0 %v575
        %1266 = vmatpush1.msra.mxu0 %v574
        %1267 = vmatprep.subr.mxu0 %v571
        %1268 = vmatpush1.msra.mxu0 %v570
        %1269 = vmatprep.subr.mxu0 %v567
        %1270 = vmatpush1.msra.mxu0 %v566
        %1271 = vmatprep.subr.mxu0 %v563
        %1272 = vmatpush1.msra.mxu0 %v562
        %1273 = vmatprep.subr.mxu0 %v559
        %1274 = vmatpush1.msra.mxu0 %v558
        %1275 = vmatprep.subr.mxu0 %v555
        %1276 = vmatpush1.msra.mxu0 %v554
        %1277 = vmatprep.subr.mxu0 %v551
        %1278 = vmatpush1.msra.mxu0 %v550
        %1279 = vmatprep.subr.mxu0 %v547
        %1280 = vmatpush1.msra.mxu0 %v546
        %1281 = vmatprep.subr.mxu0 %v543
        %1282 = vmatpush1.msra.mxu0 %v542
        %1283 = vmatprep.subr.mxu0 %v539
        %1284 = vmatpush1.msra.mxu0 %v538
        %1285 = vmatprep.subr.mxu0 0.0
        %1286 = vmatpush2.msra.mxu0 0.0
        %1287 = vmatprep.subr.mxu0 0.0
        %1288 = vmatpush2.msra.mxu0 0.0
        %1289 = vmatprep.subr.mxu0 0.0
        %1290 = vmatpush2.msra.mxu0 0.0
        %1291 = vmatprep.subr.mxu0 0.0
        %1292 = vmatpush2.msra.mxu0 0.0
        %1293 = vmatprep.subr.mxu0 0.0
        %1294 = vmatpush2.msra.mxu0 0.0
        %1295 = vmatprep.subr.mxu0 0.0
        %1296 = vmatpush2.msra.mxu0 0.0
        %1297 = vmatprep.subr.mxu0 0.0
        %1298 = vmatpush2.msra.mxu0 0.0
        %1299 = vmatprep.subr.mxu0 0.0
        %1300 = vmatpush2.msra.mxu0 0.0
        %1301 = vmatprep.subr.mxu0 0.0
        %1302 = vmatpush2.msra.mxu0 0.0
        %1303 = vmatprep.subr.mxu0 0.0
        %1304 = vmatpush2.msra.mxu0 0.0
        %1305 = vmatprep.subr.mxu0 0.0
        %1306 = vmatpush2.msra.mxu0 0.0
        %1307 = vmatprep.subr.mxu0 0.0
        %1308 = vmatpush2.msra.mxu0 0.0
        %1309 = vmatprep.subr.mxu0 0.0
        %1310 = vmatpush2.msra.mxu0 0.0
        %1311 = vmatprep.subr.mxu0 0.0
        %1312 = vmatpush2.msra.mxu0 0.0
        %1313 = vmatprep.subr.mxu0 0.0
        %1314 = vmatpush2.msra.mxu0 0.0
        %1315 = vmatprep.subr.mxu0 0.0
        %1316 = vmatpush2.msra.mxu0 0.0
        %1317 = vmatprep.mubr.f32.mxu0 0.0
        %1318 = vmatmul.mubr.f32.gmra.mxu0 %v921
        %v1319 = vpop.f32.mrf.mxu0
        %v1320 = vadd.f32 0.0, %v1319
        %v1321 = vpop.f32.mrf.mxu0
        %v1322 = vadd.f32 0.0, %v1321
        %1323 = vdwg.mxu0
        %1324 = vmatprep.subr.mxu0 %v601
        %1325 = vmatpush1.msra.mxu0 %v600
        %1326 = vmatprep.subr.mxu0 %v597
        %1327 = vmatpush1.msra.mxu0 %v596
        %1328 = vmatprep.subr.mxu0 %v593
        %1329 = vmatpush1.msra.mxu0 %v592
        %1330 = vmatprep.subr.mxu0 %v589
        %1331 = vmatpush1.msra.mxu0 %v588
        %1332 = vmatprep.subr.mxu0 %v585
        %1333 = vmatpush1.msra.mxu0 %v584
        %1334 = vmatprep.subr.mxu0 %v581
        %1335 = vmatpush1.msra.mxu0 %v580
        %1336 = vmatprep.subr.mxu0 %v577
        %1337 = vmatpush1.msra.mxu0 %v576
        %1338 = vmatprep.subr.mxu0 %v573
        %1339 = vmatpush1.msra.mxu0 %v572
        %1340 = vmatprep.subr.mxu0 %v569
        %1341 = vmatpush1.msra.mxu0 %v568
        %1342 = vmatprep.subr.mxu0 %v565
        %1343 = vmatpush1.msra.mxu0 %v564
        %1344 = vmatprep.subr.mxu0 %v561
        %1345 = vmatpush1.msra.mxu0 %v560
        %1346 = vmatprep.subr.mxu0 %v557
        %1347 = vmatpush1.msra.mxu0 %v556
        %1348 = vmatprep.subr.mxu0 %v553
        %1349 = vmatpush1.msra.mxu0 %v552
        %1350 = vmatprep.subr.mxu0 %v549
        %1351 = vmatpush1.msra.mxu0 %v548
        %1352 = vmatprep.subr.mxu0 %v545
        %1353 = vmatpush1.msra.mxu0 %v544
        %1354 = vmatprep.subr.mxu0 %v541
        %1355 = vmatpush1.msra.mxu0 %v540
        %1356 = vmatprep.subr.mxu0 0.0
        %1357 = vmatpush2.msra.mxu0 0.0
        %1358 = vmatprep.subr.mxu0 0.0
        %1359 = vmatpush2.msra.mxu0 0.0
        %1360 = vmatprep.subr.mxu0 0.0
        %1361 = vmatpush2.msra.mxu0 0.0
        %1362 = vmatprep.subr.mxu0 0.0
        %1363 = vmatpush2.msra.mxu0 0.0
        %1364 = vmatprep.subr.mxu0 0.0
        %1365 = vmatpush2.msra.mxu0 0.0
        %1366 = vmatprep.subr.mxu0 0.0
        %1367 = vmatpush2.msra.mxu0 0.0
        %1368 = vmatprep.subr.mxu0 0.0
        %1369 = vmatpush2.msra.mxu0 0.0
        %1370 = vmatprep.subr.mxu0 0.0
        %1371 = vmatpush2.msra.mxu0 0.0
        %1372 = vmatprep.subr.mxu0 0.0
        %1373 = vmatpush2.msra.mxu0 0.0
        %1374 = vmatprep.subr.mxu0 0.0
        %1375 = vmatpush2.msra.mxu0 0.0
        %1376 = vmatprep.subr.mxu0 0.0
        %1377 = vmatpush2.msra.mxu0 0.0
        %1378 = vmatprep.subr.mxu0 0.0
        %1379 = vmatpush2.msra.mxu0 0.0
        %1380 = vmatprep.subr.mxu0 0.0
        %1381 = vmatpush2.msra.mxu0 0.0
        %1382 = vmatprep.subr.mxu0 0.0
        %1383 = vmatpush2.msra.mxu0 0.0
        %1384 = vmatprep.subr.mxu0 0.0
        %1385 = vmatpush2.msra.mxu0 0.0
        %1386 = vmatprep.subr.mxu0 0.0
        %1387 = vmatpush2.msra.mxu0 0.0
        %1388 = vmatprep.mubr.f32.mxu0 0.0
        %1389 = vmatmul.mubr.f32.gmra.mxu0 %v921
        %v1390 = vpop.f32.mrf.mxu0
        %v1391 = vadd.f32 0.0, %v1390
        %v1392 = vpop.f32.mrf.mxu0
        %v1393 = vadd.f32 0.0, %v1392
        %1394 = vdwg.mxu0
        %v1395 = vadd.f32 %v1249, %v1320
        %v1396 = vadd.f32 %v1250, %v1322
        %v1397 = vadd.f32 %v1251, %v1391
        %v1398 = vadd.f32 %v1252, %v1393
        %v1399 = vmul.f32 %v1395, 1.442695
        %v1400 = vpow.pop %v1399
        %v1401 = vmul.f32 %v1396, 1.442695
        %v1402 = vpow.pop %v1401
        %v1403 = vtanh.pop %v1397
        %v1404 = vxor.u32 %v1398, 2147483648
        %v1405 = vmul.f32 %v1404, 1.442695
        %v1406 = vpow.pop %v1405
        %v1407 = vadd.f32 %v1406, 1.0
        %v1408 = vrcp.pop %v1407
        %v1409 = vmul.f32 1.0, %v1408
        %v1410 = vmul.f32 %v1402, %v919
        %v1411 = vmul.f32 %v1400, %v1403
        %v1412 = vadd.f32 %v1410, %v1411
        %v1413 = vtanh.pop %v1412
        %v1414 = vmul.f32 %v1409, %v1413
        %1415 = vmatprep.subr.mxu0 %v727
        %1416 = vmatpush1.msra.mxu0 %v726
        %1417 = vmatprep.subr.mxu0 %v723
        %1418 = vmatpush1.msra.mxu0 %v722
        %1419 = vmatprep.subr.mxu0 %v719
        %1420 = vmatpush1.msra.mxu0 %v718
        %1421 = vmatprep.subr.mxu0 %v715
        %1422 = vmatpush1.msra.mxu0 %v714
        %1423 = vmatprep.subr.mxu0 %v711
        %1424 = vmatpush1.msra.mxu0 %v710
        %1425 = vmatprep.subr.mxu0 %v707
        %1426 = vmatpush1.msra.mxu0 %v706
        %1427 = vmatprep.subr.mxu0 %v703
        %1428 = vmatpush1.msra.mxu0 %v702
        %1429 = vmatprep.subr.mxu0 %v699
        %1430 = vmatpush1.msra.mxu0 %v698
        %1431 = vmatprep.subr.mxu0 %v695
        %1432 = vmatpush1.msra.mxu0 %v694
        %1433 = vmatprep.subr.mxu0 %v691
        %1434 = vmatpush1.msra.mxu0 %v690
        %1435 = vmatprep.subr.mxu0 %v687
        %1436 = vmatpush1.msra.mxu0 %v686
        %1437 = vmatprep.subr.mxu0 %v683
        %1438 = vmatpush1.msra.mxu0 %v682
        %1439 = vmatprep.subr.mxu0 %v679
        %1440 = vmatpush1.msra.mxu0 %v678
        %1441 = vmatprep.subr.mxu0 %v675
        %1442 = vmatpush1.msra.mxu0 %v674
        %1443 = vmatprep.subr.mxu0 %v671
        %1444 = vmatpush1.msra.mxu0 %v670
        %1445 = vmatprep.subr.mxu0 %v667
        %1446 = vmatpush1.msra.mxu0 %v666
        %1447 = vmatprep.subr.mxu0 0.0
        %1448 = vmatpush2.msra.mxu0 0.0
        %1449 = vmatprep.subr.mxu0 0.0
        %1450 = vmatpush2.msra.mxu0 0.0
        %1451 = vmatprep.subr.mxu0 0.0
        %1452 = vmatpush2.msra.mxu0 0.0
        %1453 = vmatprep.subr.mxu0 0.0
        %1454 = vmatpush2.msra.mxu0 0.0
        %1455 = vmatprep.subr.mxu0 0.0
        %1456 = vmatpush2.msra.mxu0 0.0
        %1457 = vmatprep.subr.mxu0 0.0
        %1458 = vmatpush2.msra.mxu0 0.0
        %1459 = vmatprep.subr.mxu0 0.0
        %1460 = vmatpush2.msra.mxu0 0.0
        %1461 = vmatprep.subr.mxu0 0.0
        %1462 = vmatpush2.msra.mxu0 0.0
        %1463 = vmatprep.subr.mxu0 0.0
        %1464 = vmatpush2.msra.mxu0 0.0
        %1465 = vmatprep.subr.mxu0 0.0
        %1466 = vmatpush2.msra.mxu0 0.0
        %1467 = vmatprep.subr.mxu0 0.0
        %1468 = vmatpush2.msra.mxu0 0.0
        %1469 = vmatprep.subr.mxu0 0.0
        %1470 = vmatpush2.msra.mxu0 0.0
        %1471 = vmatprep.subr.mxu0 0.0
        %1472 = vmatpush2.msra.mxu0 0.0
        %1473 = vmatprep.subr.mxu0 0.0
        %1474 = vmatpush2.msra.mxu0 0.0
        %1475 = vmatprep.subr.mxu0 0.0
        %1476 = vmatpush2.msra.mxu0 0.0
        %1477 = vmatprep.subr.mxu0 0.0
        %1478 = vmatpush2.msra.mxu0 0.0
        %1479 = vmatprep.mubr.f32.mxu0 0.0
        %1480 = vmatmul.mubr.f32.gmra.mxu0 %v1246
        %v1481 = vpop.f32.mrf.mxu0
        %v1482 = vadd.f32 0.0, %v1481
        %v1483 = vpop.f32.mrf.mxu0
        %v1484 = vadd.f32 0.0, %v1483
        %1485 = vdwg.mxu0
        %1486 = vmatprep.subr.mxu0 %v729
        %1487 = vmatpush1.msra.mxu0 %v728
        %1488 = vmatprep.subr.mxu0 %v725
        %1489 = vmatpush1.msra.mxu0 %v724
        %1490 = vmatprep.subr.mxu0 %v721
        %1491 = vmatpush1.msra.mxu0 %v720
        %1492 = vmatprep.subr.mxu0 %v717
        %1493 = vmatpush1.msra.mxu0 %v716
        %1494 = vmatprep.subr.mxu0 %v713
        %1495 = vmatpush1.msra.mxu0 %v712
        %1496 = vmatprep.subr.mxu0 %v709
        %1497 = vmatpush1.msra.mxu0 %v708
        %1498 = vmatprep.subr.mxu0 %v705
        %1499 = vmatpush1.msra.mxu0 %v704
        %1500 = vmatprep.subr.mxu0 %v701
        %1501 = vmatpush1.msra.mxu0 %v700
        %1502 = vmatprep.subr.mxu0 %v697
        %1503 = vmatpush1.msra.mxu0 %v696
        %1504 = vmatprep.subr.mxu0 %v693
        %1505 = vmatpush1.msra.mxu0 %v692
        %1506 = vmatprep.subr.mxu0 %v689
        %1507 = vmatpush1.msra.mxu0 %v688
        %1508 = vmatprep.subr.mxu0 %v685
        %1509 = vmatpush1.msra.mxu0 %v684
        %1510 = vmatprep.subr.mxu0 %v681
        %1511 = vmatpush1.msra.mxu0 %v680
        %1512 = vmatprep.subr.mxu0 %v677
        %1513 = vmatpush1.msra.mxu0 %v676
        %1514 = vmatprep.subr.mxu0 %v673
        %1515 = vmatpush1.msra.mxu0 %v672
        %1516 = vmatprep.subr.mxu0 %v669
        %1517 = vmatpush1.msra.mxu0 %v668
        %1518 = vmatprep.subr.mxu0 0.0
        %1519 = vmatpush2.msra.mxu0 0.0
        %1520 = vmatprep.subr.mxu0 0.0
        %1521 = vmatpush2.msra.mxu0 0.0
        %1522 = vmatprep.subr.mxu0 0.0
        %1523 = vmatpush2.msra.mxu0 0.0
        %1524 = vmatprep.subr.mxu0 0.0
        %1525 = vmatpush2.msra.mxu0 0.0
        %1526 = vmatprep.subr.mxu0 0.0
        %1527 = vmatpush2.msra.mxu0 0.0
        %1528 = vmatprep.subr.mxu0 0.0
        %1529 = vmatpush2.msra.mxu0 0.0
        %1530 = vmatprep.subr.mxu0 0.0
        %1531 = vmatpush2.msra.mxu0 0.0
        %1532 = vmatprep.subr.mxu0 0.0
        %1533 = vmatpush2.msra.mxu0 0.0
        %1534 = vmatprep.subr.mxu0 0.0
        %1535 = vmatpush2.msra.mxu0 0.0
        %1536 = vmatprep.subr.mxu0 0.0
        %1537 = vmatpush2.msra.mxu0 0.0
        %1538 = vmatprep.subr.mxu0 0.0
        %1539 = vmatpush2.msra.mxu0 0.0
        %1540 = vmatprep.subr.mxu0 0.0
        %1541 = vmatpush2.msra.mxu0 0.0
        %1542 = vmatprep.subr.mxu0 0.0
        %1543 = vmatpush2.msra.mxu0 0.0
        %1544 = vmatprep.subr.mxu0 0.0
        %1545 = vmatpush2.msra.mxu0 0.0
        %1546 = vmatprep.subr.mxu0 0.0
        %1547 = vmatpush2.msra.mxu0 0.0
        %1548 = vmatprep.subr.mxu0 0.0
        %1549 = vmatpush2.msra.mxu0 0.0
        %1550 = vmatprep.mubr.f32.mxu0 0.0
        %1551 = vmatmul.mubr.f32.gmra.mxu0 %v1246
        %v1552 = vpop.f32.mrf.mxu0
        %v1553 = vadd.f32 0.0, %v1552
        %v1554 = vpop.f32.mrf.mxu0
        %v1555 = vadd.f32 0.0, %v1554
        %1556 = vdwg.mxu0
        %1557 = vmatprep.subr.mxu0 %v663
        %1558 = vmatpush1.msra.mxu0 %v662
        %1559 = vmatprep.subr.mxu0 %v659
        %1560 = vmatpush1.msra.mxu0 %v658
        %1561 = vmatprep.subr.mxu0 %v655
        %1562 = vmatpush1.msra.mxu0 %v654
        %1563 = vmatprep.subr.mxu0 %v651
        %1564 = vmatpush1.msra.mxu0 %v650
        %1565 = vmatprep.subr.mxu0 %v647
        %1566 = vmatpush1.msra.mxu0 %v646
        %1567 = vmatprep.subr.mxu0 %v643
        %1568 = vmatpush1.msra.mxu0 %v642
        %1569 = vmatprep.subr.mxu0 %v639
        %1570 = vmatpush1.msra.mxu0 %v638
        %1571 = vmatprep.subr.mxu0 %v635
        %1572 = vmatpush1.msra.mxu0 %v634
        %1573 = vmatprep.subr.mxu0 %v631
        %1574 = vmatpush1.msra.mxu0 %v630
        %1575 = vmatprep.subr.mxu0 %v627
        %1576 = vmatpush1.msra.mxu0 %v626
        %1577 = vmatprep.subr.mxu0 %v623
        %1578 = vmatpush1.msra.mxu0 %v622
        %1579 = vmatprep.subr.mxu0 %v619
        %1580 = vmatpush1.msra.mxu0 %v618
        %1581 = vmatprep.subr.mxu0 %v615
        %1582 = vmatpush1.msra.mxu0 %v614
        %1583 = vmatprep.subr.mxu0 %v611
        %1584 = vmatpush1.msra.mxu0 %v610
        %1585 = vmatprep.subr.mxu0 %v607
        %1586 = vmatpush1.msra.mxu0 %v606
        %1587 = vmatprep.subr.mxu0 %v603
        %1588 = vmatpush1.msra.mxu0 %v602
        %1589 = vmatprep.subr.mxu0 0.0
        %1590 = vmatpush2.msra.mxu0 0.0
        %1591 = vmatprep.subr.mxu0 0.0
        %1592 = vmatpush2.msra.mxu0 0.0
        %1593 = vmatprep.subr.mxu0 0.0
        %1594 = vmatpush2.msra.mxu0 0.0
        %1595 = vmatprep.subr.mxu0 0.0
        %1596 = vmatpush2.msra.mxu0 0.0
        %1597 = vmatprep.subr.mxu0 0.0
        %1598 = vmatpush2.msra.mxu0 0.0
        %1599 = vmatprep.subr.mxu0 0.0
        %1600 = vmatpush2.msra.mxu0 0.0
        %1601 = vmatprep.subr.mxu0 0.0
        %1602 = vmatpush2.msra.mxu0 0.0
        %1603 = vmatprep.subr.mxu0 0.0
        %1604 = vmatpush2.msra.mxu0 0.0
        %1605 = vmatprep.subr.mxu0 0.0
        %1606 = vmatpush2.msra.mxu0 0.0
        %1607 = vmatprep.subr.mxu0 0.0
        %1608 = vmatpush2.msra.mxu0 0.0
        %1609 = vmatprep.subr.mxu0 0.0
        %1610 = vmatpush2.msra.mxu0 0.0
        %1611 = vmatprep.subr.mxu0 0.0
        %1612 = vmatpush2.msra.mxu0 0.0
        %1613 = vmatprep.subr.mxu0 0.0
        %1614 = vmatpush2.msra.mxu0 0.0
        %1615 = vmatprep.subr.mxu0 0.0
        %1616 = vmatpush2.msra.mxu0 0.0
        %1617 = vmatprep.subr.mxu0 0.0
        %1618 = vmatpush2.msra.mxu0 0.0
        %1619 = vmatprep.subr.mxu0 0.0
        %1620 = vmatpush2.msra.mxu0 0.0
        %1621 = vmatprep.mubr.f32.mxu0 0.0
        %1622 = vmatmul.mubr.f32.gmra.mxu0 %v1414
        %v1623 = vpop.f32.mrf.mxu0
        %v1624 = vadd.f32 %v1482, %v1623
        %v1625 = vpop.f32.mrf.mxu0
        %v1626 = vadd.f32 %v1484, %v1625
        %1627 = vdwg.mxu0
        %1628 = vmatprep.subr.mxu0 %v665
        %1629 = vmatpush1.msra.mxu0 %v664
        %1630 = vmatprep.subr.mxu0 %v661
        %1631 = vmatpush1.msra.mxu0 %v660
        %1632 = vmatprep.subr.mxu0 %v657
        %1633 = vmatpush1.msra.mxu0 %v656
        %1634 = vmatprep.subr.mxu0 %v653
        %1635 = vmatpush1.msra.mxu0 %v652
        %1636 = vmatprep.subr.mxu0 %v649
        %1637 = vmatpush1.msra.mxu0 %v648
        %1638 = vmatprep.subr.mxu0 %v645
        %1639 = vmatpush1.msra.mxu0 %v644
        %1640 = vmatprep.subr.mxu0 %v641
        %1641 = vmatpush1.msra.mxu0 %v640
        %1642 = vmatprep.subr.mxu0 %v637
        %1643 = vmatpush1.msra.mxu0 %v636
        %1644 = vmatprep.subr.mxu0 %v633
        %1645 = vmatpush1.msra.mxu0 %v632
        %1646 = vmatprep.subr.mxu0 %v629
        %1647 = vmatpush1.msra.mxu0 %v628
        %1648 = vmatprep.subr.mxu0 %v625
        %1649 = vmatpush1.msra.mxu0 %v624
        %1650 = vmatprep.subr.mxu0 %v621
        %1651 = vmatpush1.msra.mxu0 %v620
        %1652 = vmatprep.subr.mxu0 %v617
        %1653 = vmatpush1.msra.mxu0 %v616
        %1654 = vmatprep.subr.mxu0 %v613
        %1655 = vmatpush1.msra.mxu0 %v612
        %1656 = vmatprep.subr.mxu0 %v609
        %1657 = vmatpush1.msra.mxu0 %v608
        %1658 = vmatprep.subr.mxu0 %v605
        %1659 = vmatpush1.msra.mxu0 %v604
        %1660 = vmatprep.subr.mxu0 0.0
        %1661 = vmatpush2.msra.mxu0 0.0
        %1662 = vmatprep.subr.mxu0 0.0
        %1663 = vmatpush2.msra.mxu0 0.0
        %1664 = vmatprep.subr.mxu0 0.0
        %1665 = vmatpush2.msra.mxu0 0.0
        %1666 = vmatprep.subr.mxu0 0.0
        %1667 = vmatpush2.msra.mxu0 0.0
        %1668 = vmatprep.subr.mxu0 0.0
        %1669 = vmatpush2.msra.mxu0 0.0
        %1670 = vmatprep.subr.mxu0 0.0
        %1671 = vmatpush2.msra.mxu0 0.0
        %1672 = vmatprep.subr.mxu0 0.0
        %1673 = vmatpush2.msra.mxu0 0.0
        %1674 = vmatprep.subr.mxu0 0.0
        %1675 = vmatpush2.msra.mxu0 0.0
        %1676 = vmatprep.subr.mxu0 0.0
        %1677 = vmatpush2.msra.mxu0 0.0
        %1678 = vmatprep.subr.mxu0 0.0
        %1679 = vmatpush2.msra.mxu0 0.0
        %1680 = vmatprep.subr.mxu0 0.0
        %1681 = vmatpush2.msra.mxu0 0.0
        %1682 = vmatprep.subr.mxu0 0.0
        %1683 = vmatpush2.msra.mxu0 0.0
        %1684 = vmatprep.subr.mxu0 0.0
        %1685 = vmatpush2.msra.mxu0 0.0
        %1686 = vmatprep.subr.mxu0 0.0
        %1687 = vmatpush2.msra.mxu0 0.0
        %1688 = vmatprep.subr.mxu0 0.0
        %1689 = vmatpush2.msra.mxu0 0.0
        %1690 = vmatprep.subr.mxu0 0.0
        %1691 = vmatpush2.msra.mxu0 0.0
        %1692 = vmatprep.mubr.f32.mxu0 0.0
        %1693 = vmatmul.mubr.f32.gmra.mxu0 %v1414
        %v1694 = vpop.f32.mrf.mxu0
        %v1695 = vadd.f32 %v1553, %v1694
        %v1696 = vpop.f32.mrf.mxu0
        %v1697 = vadd.f32 %v1555, %v1696
        %1698 = vdwg.mxu0
        %v1699 = vadd.f32 %v1624, %v1210
        %v1700 = vadd.f32 %v1626, %v1214
        %v1701 = vadd.f32 %v1695, %v1218
        %v1702 = vadd.f32 %v1697, %v1222
        %v1703 = vmul.f32 %v1699, 1.442695
        %v1704 = vpow.pop %v1703
        %v1705 = vmul.f32 %v1700, 1.442695
        %v1706 = vpow.pop %v1705
        %v1707 = vtanh.pop %v1701
        %v1708 = vxor.u32 %v1702, 2147483648
        %v1709 = vmul.f32 %v1708, 1.442695
        %v1710 = vpow.pop %v1709
        %v1711 = vadd.f32 %v1710, 1.0
        %v1712 = vrcp.pop %v1711
        %v1713 = vmul.f32 1.0, %v1712
        %v1714 = vmul.f32 %v1706, %v1244
        %v1715 = vmul.f32 %v1704, %v1707
        %v1716 = vadd.f32 %v1714, %v1715
        %v1717 = vtanh.pop %v1716
        %v1718 = vmul.f32 %v1713, %v1717
        %s1719 = scalar_lea.vmem [#allocation4], 8
        %1720 = vst [vmem:[%s1719] sm:$0xff] %v1718
        %s1721 = scalar_lea.vmem %s456, 64 [#allocation5]
        %v1722 = vld [vmem:[%s1721] sm:$0xff]
        %v1723 = vld [vmem:[%s1721 + $0x8] sm:$0xff]
        %v1724 = vld [vmem:[%s1721 + $0x10] sm:$0xff]
        %v1725 = vld [vmem:[%s1721 + $0x18] sm:$0xff]
        %1726 = vmatprep.subr.mxu0 %v599
        %1727 = vmatpush1.msra.mxu0 %v598
        %1728 = vmatprep.subr.mxu0 %v595
        %1729 = vmatpush1.msra.mxu0 %v594
        %1730 = vmatprep.subr.mxu0 %v591
        %1731 = vmatpush1.msra.mxu0 %v590
        %1732 = vmatprep.subr.mxu0 %v587
        %1733 = vmatpush1.msra.mxu0 %v586
        %1734 = vmatprep.subr.mxu0 %v583
        %1735 = vmatpush1.msra.mxu0 %v582
        %1736 = vmatprep.subr.mxu0 %v579
        %1737 = vmatpush1.msra.mxu0 %v578
        %1738 = vmatprep.subr.mxu0 %v575
        %1739 = vmatpush1.msra.mxu0 %v574
        %1740 = vmatprep.subr.mxu0 %v571
        %1741 = vmatpush1.msra.mxu0 %v570
        %1742 = vmatprep.subr.mxu0 %v567
        %1743 = vmatpush1.msra.mxu0 %v566
        %1744 = vmatprep.subr.mxu0 %v563
        %1745 = vmatpush1.msra.mxu0 %v562
        %1746 = vmatprep.subr.mxu0 %v559
        %1747 = vmatpush1.msra.mxu0 %v558
        %1748 = vmatprep.subr.mxu0 %v555
        %1749 = vmatpush1.msra.mxu0 %v554
        %1750 = vmatprep.subr.mxu0 %v551
        %1751 = vmatpush1.msra.mxu0 %v550
        %1752 = vmatprep.subr.mxu0 %v547
        %1753 = vmatpush1.msra.mxu0 %v546
        %1754 = vmatprep.subr.mxu0 %v543
        %1755 = vmatpush1.msra.mxu0 %v542
        %1756 = vmatprep.subr.mxu0 %v539
        %1757 = vmatpush1.msra.mxu0 %v538
        %1758 = vmatprep.subr.mxu0 0.0
        %1759 = vmatpush2.msra.mxu0 0.0
        %1760 = vmatprep.subr.mxu0 0.0
        %1761 = vmatpush2.msra.mxu0 0.0
        %1762 = vmatprep.subr.mxu0 0.0
        %1763 = vmatpush2.msra.mxu0 0.0
        %1764 = vmatprep.subr.mxu0 0.0
        %1765 = vmatpush2.msra.mxu0 0.0
        %1766 = vmatprep.subr.mxu0 0.0
        %1767 = vmatpush2.msra.mxu0 0.0
        %1768 = vmatprep.subr.mxu0 0.0
        %1769 = vmatpush2.msra.mxu0 0.0
        %1770 = vmatprep.subr.mxu0 0.0
        %1771 = vmatpush2.msra.mxu0 0.0
        %1772 = vmatprep.subr.mxu0 0.0
        %1773 = vmatpush2.msra.mxu0 0.0
        %1774 = vmatprep.subr.mxu0 0.0
        %1775 = vmatpush2.msra.mxu0 0.0
        %1776 = vmatprep.subr.mxu0 0.0
        %1777 = vmatpush2.msra.mxu0 0.0
        %1778 = vmatprep.subr.mxu0 0.0
        %1779 = vmatpush2.msra.mxu0 0.0
        %1780 = vmatprep.subr.mxu0 0.0
        %1781 = vmatpush2.msra.mxu0 0.0
        %1782 = vmatprep.subr.mxu0 0.0
        %1783 = vmatpush2.msra.mxu0 0.0
        %1784 = vmatprep.subr.mxu0 0.0
        %1785 = vmatpush2.msra.mxu0 0.0
        %1786 = vmatprep.subr.mxu0 0.0
        %1787 = vmatpush2.msra.mxu0 0.0
        %1788 = vmatprep.subr.mxu0 0.0
        %1789 = vmatpush2.msra.mxu0 0.0
        %1790 = vmatprep.mubr.f32.mxu0 0.0
        %1791 = vmatmul.mubr.f32.gmra.mxu0 %v1414
        %v1792 = vpop.f32.mrf.mxu0
        %v1793 = vadd.f32 0.0, %v1792
        %v1794 = vpop.f32.mrf.mxu0
        %v1795 = vadd.f32 0.0, %v1794
        %1796 = vdwg.mxu0
        %1797 = vmatprep.subr.mxu0 %v601
        %1798 = vmatpush1.msra.mxu0 %v600
        %1799 = vmatprep.subr.mxu0 %v597
        %1800 = vmatpush1.msra.mxu0 %v596
        %1801 = vmatprep.subr.mxu0 %v593
        %1802 = vmatpush1.msra.mxu0 %v592
        %1803 = vmatprep.subr.mxu0 %v589
        %1804 = vmatpush1.msra.mxu0 %v588
        %1805 = vmatprep.subr.mxu0 %v585
        %1806 = vmatpush1.msra.mxu0 %v584
        %1807 = vmatprep.subr.mxu0 %v581
        %1808 = vmatpush1.msra.mxu0 %v580
        %1809 = vmatprep.subr.mxu0 %v577
        %1810 = vmatpush1.msra.mxu0 %v576
        %1811 = vmatprep.subr.mxu0 %v573
        %1812 = vmatpush1.msra.mxu0 %v572
        %1813 = vmatprep.subr.mxu0 %v569
        %1814 = vmatpush1.msra.mxu0 %v568
        %1815 = vmatprep.subr.mxu0 %v565
        %1816 = vmatpush1.msra.mxu0 %v564
        %1817 = vmatprep.subr.mxu0 %v561
        %1818 = vmatpush1.msra.mxu0 %v560
        %1819 = vmatprep.subr.mxu0 %v557
        %1820 = vmatpush1.msra.mxu0 %v556
        %1821 = vmatprep.subr.mxu0 %v553
        %1822 = vmatpush1.msra.mxu0 %v552
        %1823 = vmatprep.subr.mxu0 %v549
        %1824 = vmatpush1.msra.mxu0 %v548
        %1825 = vmatprep.subr.mxu0 %v545
        %1826 = vmatpush1.msra.mxu0 %v544
        %1827 = vmatprep.subr.mxu0 %v541
        %1828 = vmatpush1.msra.mxu0 %v540
        %1829 = vmatprep.subr.mxu0 0.0
        %1830 = vmatpush2.msra.mxu0 0.0
        %1831 = vmatprep.subr.mxu0 0.0
        %1832 = vmatpush2.msra.mxu0 0.0
        %1833 = vmatprep.subr.mxu0 0.0
        %1834 = vmatpush2.msra.mxu0 0.0
        %1835 = vmatprep.subr.mxu0 0.0
        %1836 = vmatpush2.msra.mxu0 0.0
        %1837 = vmatprep.subr.mxu0 0.0
        %1838 = vmatpush2.msra.mxu0 0.0
        %1839 = vmatprep.subr.mxu0 0.0
        %1840 = vmatpush2.msra.mxu0 0.0
        %1841 = vmatprep.subr.mxu0 0.0
        %1842 = vmatpush2.msra.mxu0 0.0
        %1843 = vmatprep.subr.mxu0 0.0
        %1844 = vmatpush2.msra.mxu0 0.0
        %1845 = vmatprep.subr.mxu0 0.0
        %1846 = vmatpush2.msra.mxu0 0.0
        %1847 = vmatprep.subr.mxu0 0.0
        %1848 = vmatpush2.msra.mxu0 0.0
        %1849 = vmatprep.subr.mxu0 0.0
        %1850 = vmatpush2.msra.mxu0 0.0
        %1851 = vmatprep.subr.mxu0 0.0
        %1852 = vmatpush2.msra.mxu0 0.0
        %1853 = vmatprep.subr.mxu0 0.0
        %1854 = vmatpush2.msra.mxu0 0.0
        %1855 = vmatprep.subr.mxu0 0.0
        %1856 = vmatpush2.msra.mxu0 0.0
        %1857 = vmatprep.subr.mxu0 0.0
        %1858 = vmatpush2.msra.mxu0 0.0
        %1859 = vmatprep.subr.mxu0 0.0
        %1860 = vmatpush2.msra.mxu0 0.0
        %1861 = vmatprep.mubr.f32.mxu0 0.0
        %1862 = vmatmul.mubr.f32.gmra.mxu0 %v1414
        %v1863 = vpop.f32.mrf.mxu0
        %v1864 = vadd.f32 0.0, %v1863
        %v1865 = vpop.f32.mrf.mxu0
        %v1866 = vadd.f32 0.0, %v1865
        %1867 = vdwg.mxu0
        %v1868 = vadd.f32 %v1722, %v1793
        %v1869 = vadd.f32 %v1723, %v1795
        %v1870 = vadd.f32 %v1724, %v1864
        %v1871 = vadd.f32 %v1725, %v1866
        %v1872 = vmul.f32 %v1868, 1.442695
        %v1873 = vpow.pop %v1872
        %v1874 = vmul.f32 %v1869, 1.442695
        %v1875 = vpow.pop %v1874
        %v1876 = vtanh.pop %v1870
        %v1877 = vxor.u32 %v1871, 2147483648
        %v1878 = vmul.f32 %v1877, 1.442695
        %v1879 = vpow.pop %v1878
        %v1880 = vadd.f32 %v1879, 1.0
        %v1881 = vrcp.pop %v1880
        %v1882 = vmul.f32 1.0, %v1881
        %v1883 = vmul.f32 %v1875, %v1412
        %v1884 = vmul.f32 %v1873, %v1876
        %v1885 = vadd.f32 %v1883, %v1884
        %v1886 = vtanh.pop %v1885
        %v1887 = vmul.f32 %v1882, %v1886
        %1888 = vmatprep.subr.mxu0 %v727
        %1889 = vmatpush1.msra.mxu0 %v726
        %1890 = vmatprep.subr.mxu0 %v723
        %1891 = vmatpush1.msra.mxu0 %v722
        %1892 = vmatprep.subr.mxu0 %v719
        %1893 = vmatpush1.msra.mxu0 %v718
        %1894 = vmatprep.subr.mxu0 %v715
        %1895 = vmatpush1.msra.mxu0 %v714
        %1896 = vmatprep.subr.mxu0 %v711
        %1897 = vmatpush1.msra.mxu0 %v710
        %1898 = vmatprep.subr.mxu0 %v707
        %1899 = vmatpush1.msra.mxu0 %v706
        %1900 = vmatprep.subr.mxu0 %v703
        %1901 = vmatpush1.msra.mxu0 %v702
        %1902 = vmatprep.subr.mxu0 %v699
        %1903 = vmatpush1.msra.mxu0 %v698
        %1904 = vmatprep.subr.mxu0 %v695
        %1905 = vmatpush1.msra.mxu0 %v694
        %1906 = vmatprep.subr.mxu0 %v691
        %1907 = vmatpush1.msra.mxu0 %v690
        %1908 = vmatprep.subr.mxu0 %v687
        %1909 = vmatpush1.msra.mxu0 %v686
        %1910 = vmatprep.subr.mxu0 %v683
        %1911 = vmatpush1.msra.mxu0 %v682
        %1912 = vmatprep.subr.mxu0 %v679
        %1913 = vmatpush1.msra.mxu0 %v678
        %1914 = vmatprep.subr.mxu0 %v675
        %1915 = vmatpush1.msra.mxu0 %v674
        %1916 = vmatprep.subr.mxu0 %v671
        %1917 = vmatpush1.msra.mxu0 %v670
        %1918 = vmatprep.subr.mxu0 %v667
        %1919 = vmatpush1.msra.mxu0 %v666
        %1920 = vmatprep.subr.mxu0 0.0
        %1921 = vmatpush2.msra.mxu0 0.0
        %1922 = vmatprep.subr.mxu0 0.0
        %1923 = vmatpush2.msra.mxu0 0.0
        %1924 = vmatprep.subr.mxu0 0.0
        %1925 = vmatpush2.msra.mxu0 0.0
        %1926 = vmatprep.subr.mxu0 0.0
        %1927 = vmatpush2.msra.mxu0 0.0
        %1928 = vmatprep.subr.mxu0 0.0
        %1929 = vmatpush2.msra.mxu0 0.0
        %1930 = vmatprep.subr.mxu0 0.0
        %1931 = vmatpush2.msra.mxu0 0.0
        %1932 = vmatprep.subr.mxu0 0.0
        %1933 = vmatpush2.msra.mxu0 0.0
        %1934 = vmatprep.subr.mxu0 0.0
        %1935 = vmatpush2.msra.mxu0 0.0
        %1936 = vmatprep.subr.mxu0 0.0
        %1937 = vmatpush2.msra.mxu0 0.0
        %1938 = vmatprep.subr.mxu0 0.0
        %1939 = vmatpush2.msra.mxu0 0.0
        %1940 = vmatprep.subr.mxu0 0.0
        %1941 = vmatpush2.msra.mxu0 0.0
        %1942 = vmatprep.subr.mxu0 0.0
        %1943 = vmatpush2.msra.mxu0 0.0
        %1944 = vmatprep.subr.mxu0 0.0
        %1945 = vmatpush2.msra.mxu0 0.0
        %1946 = vmatprep.subr.mxu0 0.0
        %1947 = vmatpush2.msra.mxu0 0.0
        %1948 = vmatprep.subr.mxu0 0.0
        %1949 = vmatpush2.msra.mxu0 0.0
        %1950 = vmatprep.subr.mxu0 0.0
        %1951 = vmatpush2.msra.mxu0 0.0
        %1952 = vmatprep.mubr.f32.mxu0 0.0
        %1953 = vmatmul.mubr.f32.gmra.mxu0 %v1718
        %v1954 = vpop.f32.mrf.mxu0
        %v1955 = vadd.f32 0.0, %v1954
        %v1956 = vpop.f32.mrf.mxu0
        %v1957 = vadd.f32 0.0, %v1956
        %1958 = vdwg.mxu0
        %1959 = vmatprep.subr.mxu0 %v729
        %1960 = vmatpush1.msra.mxu0 %v728
        %1961 = vmatprep.subr.mxu0 %v725
        %1962 = vmatpush1.msra.mxu0 %v724
        %1963 = vmatprep.subr.mxu0 %v721
        %1964 = vmatpush1.msra.mxu0 %v720
        %1965 = vmatprep.subr.mxu0 %v717
        %1966 = vmatpush1.msra.mxu0 %v716
        %1967 = vmatprep.subr.mxu0 %v713
        %1968 = vmatpush1.msra.mxu0 %v712
        %1969 = vmatprep.subr.mxu0 %v709
        %1970 = vmatpush1.msra.mxu0 %v708
        %1971 = vmatprep.subr.mxu0 %v705
        %1972 = vmatpush1.msra.mxu0 %v704
        %1973 = vmatprep.subr.mxu0 %v701
        %1974 = vmatpush1.msra.mxu0 %v700
        %1975 = vmatprep.subr.mxu0 %v697
        %1976 = vmatpush1.msra.mxu0 %v696
        %1977 = vmatprep.subr.mxu0 %v693
        %1978 = vmatpush1.msra.mxu0 %v692
        %1979 = vmatprep.subr.mxu0 %v689
        %1980 = vmatpush1.msra.mxu0 %v688
        %1981 = vmatprep.subr.mxu0 %v685
        %1982 = vmatpush1.msra.mxu0 %v684
        %1983 = vmatprep.subr.mxu0 %v681
        %1984 = vmatpush1.msra.mxu0 %v680
        %1985 = vmatprep.subr.mxu0 %v677
        %1986 = vmatpush1.msra.mxu0 %v676
        %1987 = vmatprep.subr.mxu0 %v673
        %1988 = vmatpush1.msra.mxu0 %v672
        %1989 = vmatprep.subr.mxu0 %v669
        %1990 = vmatpush1.msra.mxu0 %v668
        %1991 = vmatprep.subr.mxu0 0.0
        %1992 = vmatpush2.msra.mxu0 0.0
        %1993 = vmatprep.subr.mxu0 0.0
        %1994 = vmatpush2.msra.mxu0 0.0
        %1995 = vmatprep.subr.mxu0 0.0
        %1996 = vmatpush2.msra.mxu0 0.0
        %1997 = vmatprep.subr.mxu0 0.0
        %1998 = vmatpush2.msra.mxu0 0.0
        %1999 = vmatprep.subr.mxu0 0.0
        %2000 = vmatpush2.msra.mxu0 0.0
        %2001 = vmatprep.subr.mxu0 0.0
        %2002 = vmatpush2.msra.mxu0 0.0
        %2003 = vmatprep.subr.mxu0 0.0
        %2004 = vmatpush2.msra.mxu0 0.0
        %2005 = vmatprep.subr.mxu0 0.0
        %2006 = vmatpush2.msra.mxu0 0.0
        %2007 = vmatprep.subr.mxu0 0.0
        %2008 = vmatpush2.msra.mxu0 0.0
        %2009 = vmatprep.subr.mxu0 0.0
        %2010 = vmatpush2.msra.mxu0 0.0
        %2011 = vmatprep.subr.mxu0 0.0
        %2012 = vmatpush2.msra.mxu0 0.0
        %2013 = vmatprep.subr.mxu0 0.0
        %2014 = vmatpush2.msra.mxu0 0.0
        %2015 = vmatprep.subr.mxu0 0.0
        %2016 = vmatpush2.msra.mxu0 0.0
        %2017 = vmatprep.subr.mxu0 0.0
        %2018 = vmatpush2.msra.mxu0 0.0
        %2019 = vmatprep.subr.mxu0 0.0
        %2020 = vmatpush2.msra.mxu0 0.0
        %2021 = vmatprep.subr.mxu0 0.0
        %2022 = vmatpush2.msra.mxu0 0.0
        %2023 = vmatprep.mubr.f32.mxu0 0.0
        %2024 = vmatmul.mubr.f32.gmra.mxu0 %v1718
        %v2025 = vpop.f32.mrf.mxu0
        %v2026 = vadd.f32 0.0, %v2025
        %v2027 = vpop.f32.mrf.mxu0
        %v2028 = vadd.f32 0.0, %v2027
        %2029 = vdwg.mxu0
        %2030 = vmatprep.subr.mxu0 %v663
        %2031 = vmatpush1.msra.mxu0 %v662
        %2032 = vmatprep.subr.mxu0 %v659
        %2033 = vmatpush1.msra.mxu0 %v658
        %2034 = vmatprep.subr.mxu0 %v655
        %2035 = vmatpush1.msra.mxu0 %v654
        %2036 = vmatprep.subr.mxu0 %v651
        %2037 = vmatpush1.msra.mxu0 %v650
        %2038 = vmatprep.subr.mxu0 %v647
        %2039 = vmatpush1.msra.mxu0 %v646
        %2040 = vmatprep.subr.mxu0 %v643
        %2041 = vmatpush1.msra.mxu0 %v642
        %2042 = vmatprep.subr.mxu0 %v639
        %2043 = vmatpush1.msra.mxu0 %v638
        %2044 = vmatprep.subr.mxu0 %v635
        %2045 = vmatpush1.msra.mxu0 %v634
        %2046 = vmatprep.subr.mxu0 %v631
        %2047 = vmatpush1.msra.mxu0 %v630
        %2048 = vmatprep.subr.mxu0 %v627
        %2049 = vmatpush1.msra.mxu0 %v626
        %2050 = vmatprep.subr.mxu0 %v623
        %2051 = vmatpush1.msra.mxu0 %v622
        %2052 = vmatprep.subr.mxu0 %v619
        %2053 = vmatpush1.msra.mxu0 %v618
        %2054 = vmatprep.subr.mxu0 %v615
        %2055 = vmatpush1.msra.mxu0 %v614
        %2056 = vmatprep.subr.mxu0 %v611
        %2057 = vmatpush1.msra.mxu0 %v610
        %2058 = vmatprep.subr.mxu0 %v607
        %2059 = vmatpush1.msra.mxu0 %v606
        %2060 = vmatprep.subr.mxu0 %v603
        %2061 = vmatpush1.msra.mxu0 %v602
        %2062 = vmatprep.subr.mxu0 0.0
        %2063 = vmatpush2.msra.mxu0 0.0
        %2064 = vmatprep.subr.mxu0 0.0
        %2065 = vmatpush2.msra.mxu0 0.0
        %2066 = vmatprep.subr.mxu0 0.0
        %2067 = vmatpush2.msra.mxu0 0.0
        %2068 = vmatprep.subr.mxu0 0.0
        %2069 = vmatpush2.msra.mxu0 0.0
        %2070 = vmatprep.subr.mxu0 0.0
        %2071 = vmatpush2.msra.mxu0 0.0
        %2072 = vmatprep.subr.mxu0 0.0
        %2073 = vmatpush2.msra.mxu0 0.0
        %2074 = vmatprep.subr.mxu0 0.0
        %2075 = vmatpush2.msra.mxu0 0.0
        %2076 = vmatprep.subr.mxu0 0.0
        %2077 = vmatpush2.msra.mxu0 0.0
        %2078 = vmatprep.subr.mxu0 0.0
        %2079 = vmatpush2.msra.mxu0 0.0
        %2080 = vmatprep.subr.mxu0 0.0
        %2081 = vmatpush2.msra.mxu0 0.0
        %2082 = vmatprep.subr.mxu0 0.0
        %2083 = vmatpush2.msra.mxu0 0.0
        %2084 = vmatprep.subr.mxu0 0.0
        %2085 = vmatpush2.msra.mxu0 0.0
        %2086 = vmatprep.subr.mxu0 0.0
        %2087 = vmatpush2.msra.mxu0 0.0
        %2088 = vmatprep.subr.mxu0 0.0
        %2089 = vmatpush2.msra.mxu0 0.0
        %2090 = vmatprep.subr.mxu0 0.0
        %2091 = vmatpush2.msra.mxu0 0.0
        %2092 = vmatprep.subr.mxu0 0.0
        %2093 = vmatpush2.msra.mxu0 0.0
        %2094 = vmatprep.mubr.f32.mxu0 0.0
        %2095 = vmatmul.mubr.f32.gmra.mxu0 %v1887
        %v2096 = vpop.f32.mrf.mxu0
        %v2097 = vadd.f32 %v1955, %v2096
        %v2098 = vpop.f32.mrf.mxu0
        %v2099 = vadd.f32 %v1957, %v2098
        %2100 = vdwg.mxu0
        %2101 = vmatprep.subr.mxu0 %v665
        %2102 = vmatpush1.msra.mxu0 %v664
        %2103 = vmatprep.subr.mxu0 %v661
        %2104 = vmatpush1.msra.mxu0 %v660
        %2105 = vmatprep.subr.mxu0 %v657
        %2106 = vmatpush1.msra.mxu0 %v656
        %2107 = vmatprep.subr.mxu0 %v653
        %2108 = vmatpush1.msra.mxu0 %v652
        %2109 = vmatprep.subr.mxu0 %v649
        %2110 = vmatpush1.msra.mxu0 %v648
        %2111 = vmatprep.subr.mxu0 %v645
        %2112 = vmatpush1.msra.mxu0 %v644
        %2113 = vmatprep.subr.mxu0 %v641
        %2114 = vmatpush1.msra.mxu0 %v640
        %2115 = vmatprep.subr.mxu0 %v637
        %2116 = vmatpush1.msra.mxu0 %v636
        %2117 = vmatprep.subr.mxu0 %v633
        %2118 = vmatpush1.msra.mxu0 %v632
        %2119 = vmatprep.subr.mxu0 %v629
        %2120 = vmatpush1.msra.mxu0 %v628
        %2121 = vmatprep.subr.mxu0 %v625
        %2122 = vmatpush1.msra.mxu0 %v624
        %2123 = vmatprep.subr.mxu0 %v621
        %2124 = vmatpush1.msra.mxu0 %v620
        %2125 = vmatprep.subr.mxu0 %v617
        %2126 = vmatpush1.msra.mxu0 %v616
        %2127 = vmatprep.subr.mxu0 %v613
        %2128 = vmatpush1.msra.mxu0 %v612
        %2129 = vmatprep.subr.mxu0 %v609
        %2130 = vmatpush1.msra.mxu0 %v608
        %2131 = vmatprep.subr.mxu0 %v605
        %2132 = vmatpush1.msra.mxu0 %v604
        %2133 = vmatprep.subr.mxu0 0.0
        %2134 = vmatpush2.msra.mxu0 0.0
        %2135 = vmatprep.subr.mxu0 0.0
        %2136 = vmatpush2.msra.mxu0 0.0
        %2137 = vmatprep.subr.mxu0 0.0
        %2138 = vmatpush2.msra.mxu0 0.0
        %2139 = vmatprep.subr.mxu0 0.0
        %2140 = vmatpush2.msra.mxu0 0.0
        %2141 = vmatprep.subr.mxu0 0.0
        %2142 = vmatpush2.msra.mxu0 0.0
        %2143 = vmatprep.subr.mxu0 0.0
        %2144 = vmatpush2.msra.mxu0 0.0
        %2145 = vmatprep.subr.mxu0 0.0
        %2146 = vmatpush2.msra.mxu0 0.0
        %2147 = vmatprep.subr.mxu0 0.0
        %2148 = vmatpush2.msra.mxu0 0.0
        %2149 = vmatprep.subr.mxu0 0.0
        %2150 = vmatpush2.msra.mxu0 0.0
        %2151 = vmatprep.subr.mxu0 0.0
        %2152 = vmatpush2.msra.mxu0 0.0
        %2153 = vmatprep.subr.mxu0 0.0
        %2154 = vmatpush2.msra.mxu0 0.0
        %2155 = vmatprep.subr.mxu0 0.0
        %2156 = vmatpush2.msra.mxu0 0.0
        %2157 = vmatprep.subr.mxu0 0.0
        %2158 = vmatpush2.msra.mxu0 0.0
        %2159 = vmatprep.subr.mxu0 0.0
        %2160 = vmatpush2.msra.mxu0 0.0
        %2161 = vmatprep.subr.mxu0 0.0
        %2162 = vmatpush2.msra.mxu0 0.0
        %2163 = vmatprep.subr.mxu0 0.0
        %2164 = vmatpush2.msra.mxu0 0.0
        %2165 = vmatprep.mubr.f32.mxu0 0.0
        %2166 = vmatmul.mubr.f32.gmra.mxu0 %v1887
        %v2167 = vpop.f32.mrf.mxu0
        %v2168 = vadd.f32 %v2026, %v2167
        %v2169 = vpop.f32.mrf.mxu0
        %v2170 = vadd.f32 %v2028, %v2169
        %2171 = vdwg.mxu0
        %v2172 = vadd.f32 %v2097, %v1210
        %v2173 = vadd.f32 %v2099, %v1214
        %v2174 = vadd.f32 %v2168, %v1218
        %v2175 = vadd.f32 %v2170, %v1222
        %v2176 = vmul.f32 %v2172, 1.442695
        %v2177 = vpow.pop %v2176
        %v2178 = vmul.f32 %v2173, 1.442695
        %v2179 = vpow.pop %v2178
        %v2180 = vtanh.pop %v2174
        %v2181 = vxor.u32 %v2175, 2147483648
        %v2182 = vmul.f32 %v2181, 1.442695
        %v2183 = vpow.pop %v2182
        %v2184 = vadd.f32 %v2183, 1.0
        %v2185 = vrcp.pop %v2184
        %v2186 = vmul.f32 1.0, %v2185
        %v2187 = vmul.f32 %v2179, %v1716
        %v2188 = vmul.f32 %v2177, %v2180
        %v2189 = vadd.f32 %v2187, %v2188
        %v2190 = vtanh.pop %v2189
        %v2191 = vmul.f32 %v2186, %v2190
        %s2192 = scalar_lea.vmem [#allocation4], 16
        %2193 = vst [vmem:[%s2192] sm:$0xff] %v2191
        %s2194 = scalar_lea.vmem %s456, 96 [#allocation5]
        %v2195 = vld [vmem:[%s2194] sm:$0xff]
        %v2196 = vld [vmem:[%s2194 + $0x8] sm:$0xff]
        %v2197 = vld [vmem:[%s2194 + $0x10] sm:$0xff]
        %v2198 = vld [vmem:[%s2194 + $0x18] sm:$0xff]
        %2199 = vmatprep.subr.mxu0 %v599
        %2200 = vmatpush1.msra.mxu0 %v598
        %2201 = vmatprep.subr.mxu0 %v595
        %2202 = vmatpush1.msra.mxu0 %v594
        %2203 = vmatprep.subr.mxu0 %v591
        %2204 = vmatpush1.msra.mxu0 %v590
        %2205 = vmatprep.subr.mxu0 %v587
        %2206 = vmatpush1.msra.mxu0 %v586
        %2207 = vmatprep.subr.mxu0 %v583
        %2208 = vmatpush1.msra.mxu0 %v582
        %2209 = vmatprep.subr.mxu0 %v579
        %2210 = vmatpush1.msra.mxu0 %v578
        %2211 = vmatprep.subr.mxu0 %v575
        %2212 = vmatpush1.msra.mxu0 %v574
        %2213 = vmatprep.subr.mxu0 %v571
        %2214 = vmatpush1.msra.mxu0 %v570
        %2215 = vmatprep.subr.mxu0 %v567
        %2216 = vmatpush1.msra.mxu0 %v566
        %2217 = vmatprep.subr.mxu0 %v563
        %2218 = vmatpush1.msra.mxu0 %v562
        %2219 = vmatprep.subr.mxu0 %v559
        %2220 = vmatpush1.msra.mxu0 %v558
        %2221 = vmatprep.subr.mxu0 %v555
        %2222 = vmatpush1.msra.mxu0 %v554
        %2223 = vmatprep.subr.mxu0 %v551
        %2224 = vmatpush1.msra.mxu0 %v550
        %2225 = vmatprep.subr.mxu0 %v547
        %2226 = vmatpush1.msra.mxu0 %v546
        %2227 = vmatprep.subr.mxu0 %v543
        %2228 = vmatpush1.msra.mxu0 %v542
        %2229 = vmatprep.subr.mxu0 %v539
        %2230 = vmatpush1.msra.mxu0 %v538
        %2231 = vmatprep.subr.mxu0 0.0
        %2232 = vmatpush2.msra.mxu0 0.0
        %2233 = vmatprep.subr.mxu0 0.0
        %2234 = vmatpush2.msra.mxu0 0.0
        %2235 = vmatprep.subr.mxu0 0.0
        %2236 = vmatpush2.msra.mxu0 0.0
        %2237 = vmatprep.subr.mxu0 0.0
        %2238 = vmatpush2.msra.mxu0 0.0
        %2239 = vmatprep.subr.mxu0 0.0
        %2240 = vmatpush2.msra.mxu0 0.0
        %2241 = vmatprep.subr.mxu0 0.0
        %2242 = vmatpush2.msra.mxu0 0.0
        %2243 = vmatprep.subr.mxu0 0.0
        %2244 = vmatpush2.msra.mxu0 0.0
        %2245 = vmatprep.subr.mxu0 0.0
        %2246 = vmatpush2.msra.mxu0 0.0
        %2247 = vmatprep.subr.mxu0 0.0
        %2248 = vmatpush2.msra.mxu0 0.0
        %2249 = vmatprep.subr.mxu0 0.0
        %2250 = vmatpush2.msra.mxu0 0.0
        %2251 = vmatprep.subr.mxu0 0.0
        %2252 = vmatpush2.msra.mxu0 0.0
        %2253 = vmatprep.subr.mxu0 0.0
        %2254 = vmatpush2.msra.mxu0 0.0
        %2255 = vmatprep.subr.mxu0 0.0
        %2256 = vmatpush2.msra.mxu0 0.0
        %2257 = vmatprep.subr.mxu0 0.0
        %2258 = vmatpush2.msra.mxu0 0.0
        %2259 = vmatprep.subr.mxu0 0.0
        %2260 = vmatpush2.msra.mxu0 0.0
        %2261 = vmatprep.subr.mxu0 0.0
        %2262 = vmatpush2.msra.mxu0 0.0
        %2263 = vmatprep.mubr.f32.mxu0 0.0
        %2264 = vmatmul.mubr.f32.gmra.mxu0 %v1887
        %v2265 = vpop.f32.mrf.mxu0
        %v2266 = vadd.f32 0.0, %v2265
        %v2267 = vpop.f32.mrf.mxu0
        %v2268 = vadd.f32 0.0, %v2267
        %2269 = vdwg.mxu0
        %2270 = vmatprep.subr.mxu0 %v601
        %2271 = vmatpush1.msra.mxu0 %v600
        %2272 = vmatprep.subr.mxu0 %v597
        %2273 = vmatpush1.msra.mxu0 %v596
        %2274 = vmatprep.subr.mxu0 %v593
        %2275 = vmatpush1.msra.mxu0 %v592
        %2276 = vmatprep.subr.mxu0 %v589
        %2277 = vmatpush1.msra.mxu0 %v588
        %2278 = vmatprep.subr.mxu0 %v585
        %2279 = vmatpush1.msra.mxu0 %v584
        %2280 = vmatprep.subr.mxu0 %v581
        %2281 = vmatpush1.msra.mxu0 %v580
        %2282 = vmatprep.subr.mxu0 %v577
        %2283 = vmatpush1.msra.mxu0 %v576
        %2284 = vmatprep.subr.mxu0 %v573
        %2285 = vmatpush1.msra.mxu0 %v572
        %2286 = vmatprep.subr.mxu0 %v569
        %2287 = vmatpush1.msra.mxu0 %v568
        %2288 = vmatprep.subr.mxu0 %v565
        %2289 = vmatpush1.msra.mxu0 %v564
        %2290 = vmatprep.subr.mxu0 %v561
        %2291 = vmatpush1.msra.mxu0 %v560
        %2292 = vmatprep.subr.mxu0 %v557
        %2293 = vmatpush1.msra.mxu0 %v556
        %2294 = vmatprep.subr.mxu0 %v553
        %2295 = vmatpush1.msra.mxu0 %v552
        %2296 = vmatprep.subr.mxu0 %v549
        %2297 = vmatpush1.msra.mxu0 %v548
        %2298 = vmatprep.subr.mxu0 %v545
        %2299 = vmatpush1.msra.mxu0 %v544
        %2300 = vmatprep.subr.mxu0 %v541
        %2301 = vmatpush1.msra.mxu0 %v540
        %2302 = vmatprep.subr.mxu0 0.0
        %2303 = vmatpush2.msra.mxu0 0.0
        %2304 = vmatprep.subr.mxu0 0.0
        %2305 = vmatpush2.msra.mxu0 0.0
        %2306 = vmatprep.subr.mxu0 0.0
        %2307 = vmatpush2.msra.mxu0 0.0
        %2308 = vmatprep.subr.mxu0 0.0
        %2309 = vmatpush2.msra.mxu0 0.0
        %2310 = vmatprep.subr.mxu0 0.0
        %2311 = vmatpush2.msra.mxu0 0.0
        %2312 = vmatprep.subr.mxu0 0.0
        %2313 = vmatpush2.msra.mxu0 0.0
        %2314 = vmatprep.subr.mxu0 0.0
        %2315 = vmatpush2.msra.mxu0 0.0
        %2316 = vmatprep.subr.mxu0 0.0
        %2317 = vmatpush2.msra.mxu0 0.0
        %2318 = vmatprep.subr.mxu0 0.0
        %2319 = vmatpush2.msra.mxu0 0.0
        %2320 = vmatprep.subr.mxu0 0.0
        %2321 = vmatpush2.msra.mxu0 0.0
        %2322 = vmatprep.subr.mxu0 0.0
        %2323 = vmatpush2.msra.mxu0 0.0
        %2324 = vmatprep.subr.mxu0 0.0
        %2325 = vmatpush2.msra.mxu0 0.0
        %2326 = vmatprep.subr.mxu0 0.0
        %2327 = vmatpush2.msra.mxu0 0.0
        %2328 = vmatprep.subr.mxu0 0.0
        %2329 = vmatpush2.msra.mxu0 0.0
        %2330 = vmatprep.subr.mxu0 0.0
        %2331 = vmatpush2.msra.mxu0 0.0
        %2332 = vmatprep.subr.mxu0 0.0
        %2333 = vmatpush2.msra.mxu0 0.0
        %2334 = vmatprep.mubr.f32.mxu0 0.0
        %2335 = vmatmul.mubr.f32.gmra.mxu0 %v1887
        %v2336 = vpop.f32.mrf.mxu0
        %v2337 = vadd.f32 0.0, %v2336
        %v2338 = vpop.f32.mrf.mxu0
        %v2339 = vadd.f32 0.0, %v2338
        %2340 = vdwg.mxu0
        %v2341 = vadd.f32 %v2195, %v2266
        %v2342 = vadd.f32 %v2196, %v2268
        %v2343 = vadd.f32 %v2197, %v2337
        %v2344 = vadd.f32 %v2198, %v2339
        %v2345 = vmul.f32 %v2341, 1.442695
        %v2346 = vpow.pop %v2345
        %v2347 = vmul.f32 %v2342, 1.442695
        %v2348 = vpow.pop %v2347
        %v2349 = vtanh.pop %v2343
        %v2350 = vxor.u32 %v2344, 2147483648
        %v2351 = vmul.f32 %v2350, 1.442695
        %v2352 = vpow.pop %v2351
        %v2353 = vadd.f32 %v2352, 1.0
        %v2354 = vrcp.pop %v2353
        %v2355 = vmul.f32 1.0, %v2354
        %v2356 = vmul.f32 %v2348, %v1885
        %v2357 = vmul.f32 %v2346, %v2349
        %v2358 = vadd.f32 %v2356, %v2357
        %v2359 = vtanh.pop %v2358
        %v2360 = vmul.f32 %v2355, %v2359
        %2361 = vmatprep.subr.mxu0 %v727
        %2362 = vmatpush1.msra.mxu0 %v726
        %2363 = vmatprep.subr.mxu0 %v723
        %2364 = vmatpush1.msra.mxu0 %v722
        %2365 = vmatprep.subr.mxu0 %v719
        %2366 = vmatpush1.msra.mxu0 %v718
        %2367 = vmatprep.subr.mxu0 %v715
        %2368 = vmatpush1.msra.mxu0 %v714
        %2369 = vmatprep.subr.mxu0 %v711
        %2370 = vmatpush1.msra.mxu0 %v710
        %2371 = vmatprep.subr.mxu0 %v707
        %2372 = vmatpush1.msra.mxu0 %v706
        %2373 = vmatprep.subr.mxu0 %v703
        %2374 = vmatpush1.msra.mxu0 %v702
        %2375 = vmatprep.subr.mxu0 %v699
        %2376 = vmatpush1.msra.mxu0 %v698
        %2377 = vmatprep.subr.mxu0 %v695
        %2378 = vmatpush1.msra.mxu0 %v694
        %2379 = vmatprep.subr.mxu0 %v691
        %2380 = vmatpush1.msra.mxu0 %v690
        %2381 = vmatprep.subr.mxu0 %v687
        %2382 = vmatpush1.msra.mxu0 %v686
        %2383 = vmatprep.subr.mxu0 %v683
        %2384 = vmatpush1.msra.mxu0 %v682
        %2385 = vmatprep.subr.mxu0 %v679
        %2386 = vmatpush1.msra.mxu0 %v678
        %2387 = vmatprep.subr.mxu0 %v675
        %2388 = vmatpush1.msra.mxu0 %v674
        %2389 = vmatprep.subr.mxu0 %v671
        %2390 = vmatpush1.msra.mxu0 %v670
        %2391 = vmatprep.subr.mxu0 %v667
        %2392 = vmatpush1.msra.mxu0 %v666
        %2393 = vmatprep.subr.mxu0 0.0
        %2394 = vmatpush2.msra.mxu0 0.0
        %2395 = vmatprep.subr.mxu0 0.0
        %2396 = vmatpush2.msra.mxu0 0.0
        %2397 = vmatprep.subr.mxu0 0.0
        %2398 = vmatpush2.msra.mxu0 0.0
        %2399 = vmatprep.subr.mxu0 0.0
        %2400 = vmatpush2.msra.mxu0 0.0
        %2401 = vmatprep.subr.mxu0 0.0
        %2402 = vmatpush2.msra.mxu0 0.0
        %2403 = vmatprep.subr.mxu0 0.0
        %2404 = vmatpush2.msra.mxu0 0.0
        %2405 = vmatprep.subr.mxu0 0.0
        %2406 = vmatpush2.msra.mxu0 0.0
        %2407 = vmatprep.subr.mxu0 0.0
        %2408 = vmatpush2.msra.mxu0 0.0
        %2409 = vmatprep.subr.mxu0 0.0
        %2410 = vmatpush2.msra.mxu0 0.0
        %2411 = vmatprep.subr.mxu0 0.0
        %2412 = vmatpush2.msra.mxu0 0.0
        %2413 = vmatprep.subr.mxu0 0.0
        %2414 = vmatpush2.msra.mxu0 0.0
        %2415 = vmatprep.subr.mxu0 0.0
        %2416 = vmatpush2.msra.mxu0 0.0
        %2417 = vmatprep.subr.mxu0 0.0
        %2418 = vmatpush2.msra.mxu0 0.0
        %2419 = vmatprep.subr.mxu0 0.0
        %2420 = vmatpush2.msra.mxu0 0.0
        %2421 = vmatprep.subr.mxu0 0.0
        %2422 = vmatpush2.msra.mxu0 0.0
        %2423 = vmatprep.subr.mxu0 0.0
        %2424 = vmatpush2.msra.mxu0 0.0
        %2425 = vmatprep.mubr.f32.mxu0 0.0
        %2426 = vmatmul.mubr.f32.gmra.mxu0 %v2191
        %v2427 = vpop.f32.mrf.mxu0
        %v2428 = vadd.f32 0.0, %v2427
        %v2429 = vpop.f32.mrf.mxu0
        %v2430 = vadd.f32 0.0, %v2429
        %2431 = vdwg.mxu0
        %2432 = vmatprep.subr.mxu0 %v729
        %2433 = vmatpush1.msra.mxu0 %v728
        %2434 = vmatprep.subr.mxu0 %v725
        %2435 = vmatpush1.msra.mxu0 %v724
        %2436 = vmatprep.subr.mxu0 %v721
        %2437 = vmatpush1.msra.mxu0 %v720
        %2438 = vmatprep.subr.mxu0 %v717
        %2439 = vmatpush1.msra.mxu0 %v716
        %2440 = vmatprep.subr.mxu0 %v713
        %2441 = vmatpush1.msra.mxu0 %v712
        %2442 = vmatprep.subr.mxu0 %v709
        %2443 = vmatpush1.msra.mxu0 %v708
        %2444 = vmatprep.subr.mxu0 %v705
        %2445 = vmatpush1.msra.mxu0 %v704
        %2446 = vmatprep.subr.mxu0 %v701
        %2447 = vmatpush1.msra.mxu0 %v700
        %2448 = vmatprep.subr.mxu0 %v697
        %2449 = vmatpush1.msra.mxu0 %v696
        %2450 = vmatprep.subr.mxu0 %v693
        %2451 = vmatpush1.msra.mxu0 %v692
        %2452 = vmatprep.subr.mxu0 %v689
        %2453 = vmatpush1.msra.mxu0 %v688
        %2454 = vmatprep.subr.mxu0 %v685
        %2455 = vmatpush1.msra.mxu0 %v684
        %2456 = vmatprep.subr.mxu0 %v681
        %2457 = vmatpush1.msra.mxu0 %v680
        %2458 = vmatprep.subr.mxu0 %v677
        %2459 = vmatpush1.msra.mxu0 %v676
        %2460 = vmatprep.subr.mxu0 %v673
        %2461 = vmatpush1.msra.mxu0 %v672
        %2462 = vmatprep.subr.mxu0 %v669
        %2463 = vmatpush1.msra.mxu0 %v668
        %2464 = vmatprep.subr.mxu0 0.0
        %2465 = vmatpush2.msra.mxu0 0.0
        %2466 = vmatprep.subr.mxu0 0.0
        %2467 = vmatpush2.msra.mxu0 0.0
        %2468 = vmatprep.subr.mxu0 0.0
        %2469 = vmatpush2.msra.mxu0 0.0
        %2470 = vmatprep.subr.mxu0 0.0
        %2471 = vmatpush2.msra.mxu0 0.0
        %2472 = vmatprep.subr.mxu0 0.0
        %2473 = vmatpush2.msra.mxu0 0.0
        %2474 = vmatprep.subr.mxu0 0.0
        %2475 = vmatpush2.msra.mxu0 0.0
        %2476 = vmatprep.subr.mxu0 0.0
        %2477 = vmatpush2.msra.mxu0 0.0
        %2478 = vmatprep.subr.mxu0 0.0
        %2479 = vmatpush2.msra.mxu0 0.0
        %2480 = vmatprep.subr.mxu0 0.0
        %2481 = vmatpush2.msra.mxu0 0.0
        %2482 = vmatprep.subr.mxu0 0.0
        %2483 = vmatpush2.msra.mxu0 0.0
        %2484 = vmatprep.subr.mxu0 0.0
        %2485 = vmatpush2.msra.mxu0 0.0
        %2486 = vmatprep.subr.mxu0 0.0
        %2487 = vmatpush2.msra.mxu0 0.0
        %2488 = vmatprep.subr.mxu0 0.0
        %2489 = vmatpush2.msra.mxu0 0.0
        %2490 = vmatprep.subr.mxu0 0.0
        %2491 = vmatpush2.msra.mxu0 0.0
        %2492 = vmatprep.subr.mxu0 0.0
        %2493 = vmatpush2.msra.mxu0 0.0
        %2494 = vmatprep.subr.mxu0 0.0
        %2495 = vmatpush2.msra.mxu0 0.0
        %2496 = vmatprep.mubr.f32.mxu0 0.0
        %2497 = vmatmul.mubr.f32.gmra.mxu0 %v2191
        %v2498 = vpop.f32.mrf.mxu0
        %v2499 = vadd.f32 0.0, %v2498
        %v2500 = vpop.f32.mrf.mxu0
        %v2501 = vadd.f32 0.0, %v2500
        %2502 = vdwg.mxu0
        %2503 = vmatprep.subr.mxu0 %v663
        %2504 = vmatpush1.msra.mxu0 %v662
        %2505 = vmatprep.subr.mxu0 %v659
        %2506 = vmatpush1.msra.mxu0 %v658
        %2507 = vmatprep.subr.mxu0 %v655
        %2508 = vmatpush1.msra.mxu0 %v654
        %2509 = vmatprep.subr.mxu0 %v651
        %2510 = vmatpush1.msra.mxu0 %v650
        %2511 = vmatprep.subr.mxu0 %v647
        %2512 = vmatpush1.msra.mxu0 %v646
        %2513 = vmatprep.subr.mxu0 %v643
        %2514 = vmatpush1.msra.mxu0 %v642
        %2515 = vmatprep.subr.mxu0 %v639
        %2516 = vmatpush1.msra.mxu0 %v638
        %2517 = vmatprep.subr.mxu0 %v635
        %2518 = vmatpush1.msra.mxu0 %v634
        %2519 = vmatprep.subr.mxu0 %v631
        %2520 = vmatpush1.msra.mxu0 %v630
        %2521 = vmatprep.subr.mxu0 %v627
        %2522 = vmatpush1.msra.mxu0 %v626
        %2523 = vmatprep.subr.mxu0 %v623
        %2524 = vmatpush1.msra.mxu0 %v622
        %2525 = vmatprep.subr.mxu0 %v619
        %2526 = vmatpush1.msra.mxu0 %v618
        %2527 = vmatprep.subr.mxu0 %v615
        %2528 = vmatpush1.msra.mxu0 %v614
        %2529 = vmatprep.subr.mxu0 %v611
        %2530 = vmatpush1.msra.mxu0 %v610
        %2531 = vmatprep.subr.mxu0 %v607
        %2532 = vmatpush1.msra.mxu0 %v606
        %2533 = vmatprep.subr.mxu0 %v603
        %2534 = vmatpush1.msra.mxu0 %v602
        %2535 = vmatprep.subr.mxu0 0.0
        %2536 = vmatpush2.msra.mxu0 0.0
        %2537 = vmatprep.subr.mxu0 0.0
        %2538 = vmatpush2.msra.mxu0 0.0
        %2539 = vmatprep.subr.mxu0 0.0
        %2540 = vmatpush2.msra.mxu0 0.0
        %2541 = vmatprep.subr.mxu0 0.0
        %2542 = vmatpush2.msra.mxu0 0.0
        %2543 = vmatprep.subr.mxu0 0.0
        %2544 = vmatpush2.msra.mxu0 0.0
        %2545 = vmatprep.subr.mxu0 0.0
        %2546 = vmatpush2.msra.mxu0 0.0
        %2547 = vmatprep.subr.mxu0 0.0
        %2548 = vmatpush2.msra.mxu0 0.0
        %2549 = vmatprep.subr.mxu0 0.0
        %2550 = vmatpush2.msra.mxu0 0.0
        %2551 = vmatprep.subr.mxu0 0.0
        %2552 = vmatpush2.msra.mxu0 0.0
        %2553 = vmatprep.subr.mxu0 0.0
        %2554 = vmatpush2.msra.mxu0 0.0
        %2555 = vmatprep.subr.mxu0 0.0
        %2556 = vmatpush2.msra.mxu0 0.0
        %2557 = vmatprep.subr.mxu0 0.0
        %2558 = vmatpush2.msra.mxu0 0.0
        %2559 = vmatprep.subr.mxu0 0.0
        %2560 = vmatpush2.msra.mxu0 0.0
        %2561 = vmatprep.subr.mxu0 0.0
        %2562 = vmatpush2.msra.mxu0 0.0
        %2563 = vmatprep.subr.mxu0 0.0
        %2564 = vmatpush2.msra.mxu0 0.0
        %2565 = vmatprep.subr.mxu0 0.0
        %2566 = vmatpush2.msra.mxu0 0.0
        %2567 = vmatprep.mubr.f32.mxu0 0.0
        %2568 = vmatmul.mubr.f32.gmra.mxu0 %v2360
        %v2569 = vpop.f32.mrf.mxu0
        %v2570 = vadd.f32 %v2428, %v2569
        %v2571 = vpop.f32.mrf.mxu0
        %v2572 = vadd.f32 %v2430, %v2571
        %2573 = vdwg.mxu0
        %2574 = vmatprep.subr.mxu0 %v665
        %2575 = vmatpush1.msra.mxu0 %v664
        %2576 = vmatprep.subr.mxu0 %v661
        %2577 = vmatpush1.msra.mxu0 %v660
        %2578 = vmatprep.subr.mxu0 %v657
        %2579 = vmatpush1.msra.mxu0 %v656
        %2580 = vmatprep.subr.mxu0 %v653
        %2581 = vmatpush1.msra.mxu0 %v652
        %2582 = vmatprep.subr.mxu0 %v649
        %2583 = vmatpush1.msra.mxu0 %v648
        %2584 = vmatprep.subr.mxu0 %v645
        %2585 = vmatpush1.msra.mxu0 %v644
        %2586 = vmatprep.subr.mxu0 %v641
        %2587 = vmatpush1.msra.mxu0 %v640
        %2588 = vmatprep.subr.mxu0 %v637
        %2589 = vmatpush1.msra.mxu0 %v636
        %2590 = vmatprep.subr.mxu0 %v633
        %2591 = vmatpush1.msra.mxu0 %v632
        %2592 = vmatprep.subr.mxu0 %v629
        %2593 = vmatpush1.msra.mxu0 %v628
        %2594 = vmatprep.subr.mxu0 %v625
        %2595 = vmatpush1.msra.mxu0 %v624
        %2596 = vmatprep.subr.mxu0 %v621
        %2597 = vmatpush1.msra.mxu0 %v620
        %2598 = vmatprep.subr.mxu0 %v617
        %2599 = vmatpush1.msra.mxu0 %v616
        %2600 = vmatprep.subr.mxu0 %v613
        %2601 = vmatpush1.msra.mxu0 %v612
        %2602 = vmatprep.subr.mxu0 %v609
        %2603 = vmatpush1.msra.mxu0 %v608
        %2604 = vmatprep.subr.mxu0 %v605
        %2605 = vmatpush1.msra.mxu0 %v604
        %2606 = vmatprep.subr.mxu0 0.0
        %2607 = vmatpush2.msra.mxu0 0.0
        %2608 = vmatprep.subr.mxu0 0.0
        %2609 = vmatpush2.msra.mxu0 0.0
        %2610 = vmatprep.subr.mxu0 0.0
        %2611 = vmatpush2.msra.mxu0 0.0
        %2612 = vmatprep.subr.mxu0 0.0
        %2613 = vmatpush2.msra.mxu0 0.0
        %2614 = vmatprep.subr.mxu0 0.0
        %2615 = vmatpush2.msra.mxu0 0.0
        %2616 = vmatprep.subr.mxu0 0.0
        %2617 = vmatpush2.msra.mxu0 0.0
        %2618 = vmatprep.subr.mxu0 0.0
        %2619 = vmatpush2.msra.mxu0 0.0
        %2620 = vmatprep.subr.mxu0 0.0
        %2621 = vmatpush2.msra.mxu0 0.0
        %2622 = vmatprep.subr.mxu0 0.0
        %2623 = vmatpush2.msra.mxu0 0.0
        %2624 = vmatprep.subr.mxu0 0.0
        %2625 = vmatpush2.msra.mxu0 0.0
        %2626 = vmatprep.subr.mxu0 0.0
        %2627 = vmatpush2.msra.mxu0 0.0
        %2628 = vmatprep.subr.mxu0 0.0
        %2629 = vmatpush2.msra.mxu0 0.0
        %2630 = vmatprep.subr.mxu0 0.0
        %2631 = vmatpush2.msra.mxu0 0.0
        %2632 = vmatprep.subr.mxu0 0.0
        %2633 = vmatpush2.msra.mxu0 0.0
        %2634 = vmatprep.subr.mxu0 0.0
        %2635 = vmatpush2.msra.mxu0 0.0
        %2636 = vmatprep.subr.mxu0 0.0
        %2637 = vmatpush2.msra.mxu0 0.0
        %2638 = vmatprep.mubr.f32.mxu0 0.0
        %2639 = vmatmul.mubr.f32.gmra.mxu0 %v2360
        %v2640 = vpop.f32.mrf.mxu0
        %v2641 = vadd.f32 %v2499, %v2640
        %v2642 = vpop.f32.mrf.mxu0
        %v2643 = vadd.f32 %v2501, %v2642
        %2644 = vdwg.mxu0
        %v2645 = vadd.f32 %v2570, %v1210
        %v2646 = vadd.f32 %v2572, %v1214
        %v2647 = vadd.f32 %v2641, %v1218
        %v2648 = vadd.f32 %v2643, %v1222
        %v2649 = vmul.f32 %v2645, 1.442695
        %v2650 = vpow.pop %v2649
        %v2651 = vmul.f32 %v2646, 1.442695
        %v2652 = vpow.pop %v2651
        %v2653 = vtanh.pop %v2647
        %v2654 = vxor.u32 %v2648, 2147483648
        %v2655 = vmul.f32 %v2654, 1.442695
        %v2656 = vpow.pop %v2655
        %v2657 = vadd.f32 %v2656, 1.0
        %v2658 = vrcp.pop %v2657
        %v2659 = vmul.f32 1.0, %v2658
        %v2660 = vmul.f32 %v2652, %v2189
        %v2661 = vmul.f32 %v2650, %v2653
        %v2662 = vadd.f32 %v2660, %v2661
        %v2663 = vtanh.pop %v2662
        %v2664 = vmul.f32 %v2659, %v2663
        %s2665 = scalar_lea.vmem [#allocation4], 24
        %2666 = vst [vmem:[%s2665] sm:$0xff] %v2664
        %s2667 = scalar_lea.vmem %s456, 128 [#allocation5]
        %v2668 = vld [vmem:[%s2667] sm:$0xff]
        %v2669 = vld [vmem:[%s2667 + $0x8] sm:$0xff]
        %v2670 = vld [vmem:[%s2667 + $0x10] sm:$0xff]
        %v2671 = vld [vmem:[%s2667 + $0x18] sm:$0xff]
        %2672 = vmatprep.subr.mxu0 %v599
        %2673 = vmatpush1.msra.mxu0 %v598
        %2674 = vmatprep.subr.mxu0 %v595
        %2675 = vmatpush1.msra.mxu0 %v594
        %2676 = vmatprep.subr.mxu0 %v591
        %2677 = vmatpush1.msra.mxu0 %v590
        %2678 = vmatprep.subr.mxu0 %v587
        %2679 = vmatpush1.msra.mxu0 %v586
        %2680 = vmatprep.subr.mxu0 %v583
        %2681 = vmatpush1.msra.mxu0 %v582
        %2682 = vmatprep.subr.mxu0 %v579
        %2683 = vmatpush1.msra.mxu0 %v578
        %2684 = vmatprep.subr.mxu0 %v575
        %2685 = vmatpush1.msra.mxu0 %v574
        %2686 = vmatprep.subr.mxu0 %v571
        %2687 = vmatpush1.msra.mxu0 %v570
        %2688 = vmatprep.subr.mxu0 %v567
        %2689 = vmatpush1.msra.mxu0 %v566
        %2690 = vmatprep.subr.mxu0 %v563
        %2691 = vmatpush1.msra.mxu0 %v562
        %2692 = vmatprep.subr.mxu0 %v559
        %2693 = vmatpush1.msra.mxu0 %v558
        %2694 = vmatprep.subr.mxu0 %v555
        %2695 = vmatpush1.msra.mxu0 %v554
        %2696 = vmatprep.subr.mxu0 %v551
        %2697 = vmatpush1.msra.mxu0 %v550
        %2698 = vmatprep.subr.mxu0 %v547
        %2699 = vmatpush1.msra.mxu0 %v546
        %2700 = vmatprep.subr.mxu0 %v543
        %2701 = vmatpush1.msra.mxu0 %v542
        %2702 = vmatprep.subr.mxu0 %v539
        %2703 = vmatpush1.msra.mxu0 %v538
        %2704 = vmatprep.subr.mxu0 0.0
        %2705 = vmatpush2.msra.mxu0 0.0
        %2706 = vmatprep.subr.mxu0 0.0
        %2707 = vmatpush2.msra.mxu0 0.0
        %2708 = vmatprep.subr.mxu0 0.0
        %2709 = vmatpush2.msra.mxu0 0.0
        %2710 = vmatprep.subr.mxu0 0.0
        %2711 = vmatpush2.msra.mxu0 0.0
        %2712 = vmatprep.subr.mxu0 0.0
        %2713 = vmatpush2.msra.mxu0 0.0
        %2714 = vmatprep.subr.mxu0 0.0
        %2715 = vmatpush2.msra.mxu0 0.0
        %2716 = vmatprep.subr.mxu0 0.0
        %2717 = vmatpush2.msra.mxu0 0.0
        %2718 = vmatprep.subr.mxu0 0.0
        %2719 = vmatpush2.msra.mxu0 0.0
        %2720 = vmatprep.subr.mxu0 0.0
        %2721 = vmatpush2.msra.mxu0 0.0
        %2722 = vmatprep.subr.mxu0 0.0
        %2723 = vmatpush2.msra.mxu0 0.0
        %2724 = vmatprep.subr.mxu0 0.0
        %2725 = vmatpush2.msra.mxu0 0.0
        %2726 = vmatprep.subr.mxu0 0.0
        %2727 = vmatpush2.msra.mxu0 0.0
        %2728 = vmatprep.subr.mxu0 0.0
        %2729 = vmatpush2.msra.mxu0 0.0
        %2730 = vmatprep.subr.mxu0 0.0
        %2731 = vmatpush2.msra.mxu0 0.0
        %2732 = vmatprep.subr.mxu0 0.0
        %2733 = vmatpush2.msra.mxu0 0.0
        %2734 = vmatprep.subr.mxu0 0.0
        %2735 = vmatpush2.msra.mxu0 0.0
        %2736 = vmatprep.mubr.f32.mxu0 0.0
        %2737 = vmatmul.mubr.f32.gmra.mxu0 %v2360
        %v2738 = vpop.f32.mrf.mxu0
        %v2739 = vadd.f32 0.0, %v2738
        %v2740 = vpop.f32.mrf.mxu0
        %v2741 = vadd.f32 0.0, %v2740
        %2742 = vdwg.mxu0
        %2743 = vmatprep.subr.mxu0 %v601
        %2744 = vmatpush1.msra.mxu0 %v600
        %2745 = vmatprep.subr.mxu0 %v597
        %2746 = vmatpush1.msra.mxu0 %v596
        %2747 = vmatprep.subr.mxu0 %v593
        %2748 = vmatpush1.msra.mxu0 %v592
        %2749 = vmatprep.subr.mxu0 %v589
        %2750 = vmatpush1.msra.mxu0 %v588
        %2751 = vmatprep.subr.mxu0 %v585
        %2752 = vmatpush1.msra.mxu0 %v584
        %2753 = vmatprep.subr.mxu0 %v581
        %2754 = vmatpush1.msra.mxu0 %v580
        %2755 = vmatprep.subr.mxu0 %v577
        %2756 = vmatpush1.msra.mxu0 %v576
        %2757 = vmatprep.subr.mxu0 %v573
        %2758 = vmatpush1.msra.mxu0 %v572
        %2759 = vmatprep.subr.mxu0 %v569
        %2760 = vmatpush1.msra.mxu0 %v568
        %2761 = vmatprep.subr.mxu0 %v565
        %2762 = vmatpush1.msra.mxu0 %v564
        %2763 = vmatprep.subr.mxu0 %v561
        %2764 = vmatpush1.msra.mxu0 %v560
        %2765 = vmatprep.subr.mxu0 %v557
        %2766 = vmatpush1.msra.mxu0 %v556
        %2767 = vmatprep.subr.mxu0 %v553
        %2768 = vmatpush1.msra.mxu0 %v552
        %2769 = vmatprep.subr.mxu0 %v549
        %2770 = vmatpush1.msra.mxu0 %v548
        %2771 = vmatprep.subr.mxu0 %v545
        %2772 = vmatpush1.msra.mxu0 %v544
        %2773 = vmatprep.subr.mxu0 %v541
        %2774 = vmatpush1.msra.mxu0 %v540
        %2775 = vmatprep.subr.mxu0 0.0
        %2776 = vmatpush2.msra.mxu0 0.0
        %2777 = vmatprep.subr.mxu0 0.0
        %2778 = vmatpush2.msra.mxu0 0.0
        %2779 = vmatprep.subr.mxu0 0.0
        %2780 = vmatpush2.msra.mxu0 0.0
        %2781 = vmatprep.subr.mxu0 0.0
        %2782 = vmatpush2.msra.mxu0 0.0
        %2783 = vmatprep.subr.mxu0 0.0
        %2784 = vmatpush2.msra.mxu0 0.0
        %2785 = vmatprep.subr.mxu0 0.0
        %2786 = vmatpush2.msra.mxu0 0.0
        %2787 = vmatprep.subr.mxu0 0.0
        %2788 = vmatpush2.msra.mxu0 0.0
        %2789 = vmatprep.subr.mxu0 0.0
        %2790 = vmatpush2.msra.mxu0 0.0
        %2791 = vmatprep.subr.mxu0 0.0
        %2792 = vmatpush2.msra.mxu0 0.0
        %2793 = vmatprep.subr.mxu0 0.0
        %2794 = vmatpush2.msra.mxu0 0.0
        %2795 = vmatprep.subr.mxu0 0.0
        %2796 = vmatpush2.msra.mxu0 0.0
        %2797 = vmatprep.subr.mxu0 0.0
        %2798 = vmatpush2.msra.mxu0 0.0
        %2799 = vmatprep.subr.mxu0 0.0
        %2800 = vmatpush2.msra.mxu0 0.0
        %2801 = vmatprep.subr.mxu0 0.0
        %2802 = vmatpush2.msra.mxu0 0.0
        %2803 = vmatprep.subr.mxu0 0.0
        %2804 = vmatpush2.msra.mxu0 0.0
        %2805 = vmatprep.subr.mxu0 0.0
        %2806 = vmatpush2.msra.mxu0 0.0
        %2807 = vmatprep.mubr.f32.mxu0 0.0
        %2808 = vmatmul.mubr.f32.gmra.mxu0 %v2360
        %v2809 = vpop.f32.mrf.mxu0
        %v2810 = vadd.f32 0.0, %v2809
        %v2811 = vpop.f32.mrf.mxu0
        %v2812 = vadd.f32 0.0, %v2811
        %2813 = vdwg.mxu0
        %v2814 = vadd.f32 %v2668, %v2739
        %v2815 = vadd.f32 %v2669, %v2741
        %v2816 = vadd.f32 %v2670, %v2810
        %v2817 = vadd.f32 %v2671, %v2812
        %v2818 = vmul.f32 %v2814, 1.442695
        %v2819 = vpow.pop %v2818
        %v2820 = vmul.f32 %v2815, 1.442695
        %v2821 = vpow.pop %v2820
        %v2822 = vtanh.pop %v2816
        %v2823 = vxor.u32 %v2817, 2147483648
        %v2824 = vmul.f32 %v2823, 1.442695
        %v2825 = vpow.pop %v2824
        %v2826 = vadd.f32 %v2825, 1.0
        %v2827 = vrcp.pop %v2826
        %v2828 = vmul.f32 1.0, %v2827
        %v2829 = vmul.f32 %v2821, %v2358
        %v2830 = vmul.f32 %v2819, %v2822
        %v2831 = vadd.f32 %v2829, %v2830
        %v2832 = vtanh.pop %v2831
        %v2833 = vmul.f32 %v2828, %v2832
        %2834 = vmatprep.subr.mxu0 %v727
        %2835 = vmatpush1.msra.mxu0 %v726
        %2836 = vmatprep.subr.mxu0 %v723
        %2837 = vmatpush1.msra.mxu0 %v722
        %2838 = vmatprep.subr.mxu0 %v719
        %2839 = vmatpush1.msra.mxu0 %v718
        %2840 = vmatprep.subr.mxu0 %v715
        %2841 = vmatpush1.msra.mxu0 %v714
        %2842 = vmatprep.subr.mxu0 %v711
        %2843 = vmatpush1.msra.mxu0 %v710
        %2844 = vmatprep.subr.mxu0 %v707
        %2845 = vmatpush1.msra.mxu0 %v706
        %2846 = vmatprep.subr.mxu0 %v703
        %2847 = vmatpush1.msra.mxu0 %v702
        %2848 = vmatprep.subr.mxu0 %v699
        %2849 = vmatpush1.msra.mxu0 %v698
        %2850 = vmatprep.subr.mxu0 %v695
        %2851 = vmatpush1.msra.mxu0 %v694
        %2852 = vmatprep.subr.mxu0 %v691
        %2853 = vmatpush1.msra.mxu0 %v690
        %2854 = vmatprep.subr.mxu0 %v687
        %2855 = vmatpush1.msra.mxu0 %v686
        %2856 = vmatprep.subr.mxu0 %v683
        %2857 = vmatpush1.msra.mxu0 %v682
        %2858 = vmatprep.subr.mxu0 %v679
        %2859 = vmatpush1.msra.mxu0 %v678
        %2860 = vmatprep.subr.mxu0 %v675
        %2861 = vmatpush1.msra.mxu0 %v674
        %2862 = vmatprep.subr.mxu0 %v671
        %2863 = vmatpush1.msra.mxu0 %v670
        %2864 = vmatprep.subr.mxu0 %v667
        %2865 = vmatpush1.msra.mxu0 %v666
        %2866 = vmatprep.subr.mxu0 0.0
        %2867 = vmatpush2.msra.mxu0 0.0
        %2868 = vmatprep.subr.mxu0 0.0
        %2869 = vmatpush2.msra.mxu0 0.0
        %2870 = vmatprep.subr.mxu0 0.0
        %2871 = vmatpush2.msra.mxu0 0.0
        %2872 = vmatprep.subr.mxu0 0.0
        %2873 = vmatpush2.msra.mxu0 0.0
        %2874 = vmatprep.subr.mxu0 0.0
        %2875 = vmatpush2.msra.mxu0 0.0
        %2876 = vmatprep.subr.mxu0 0.0
        %2877 = vmatpush2.msra.mxu0 0.0
        %2878 = vmatprep.subr.mxu0 0.0
        %2879 = vmatpush2.msra.mxu0 0.0
        %2880 = vmatprep.subr.mxu0 0.0
        %2881 = vmatpush2.msra.mxu0 0.0
        %2882 = vmatprep.subr.mxu0 0.0
        %2883 = vmatpush2.msra.mxu0 0.0
        %2884 = vmatprep.subr.mxu0 0.0
        %2885 = vmatpush2.msra.mxu0 0.0
        %2886 = vmatprep.subr.mxu0 0.0
        %2887 = vmatpush2.msra.mxu0 0.0
        %2888 = vmatprep.subr.mxu0 0.0
        %2889 = vmatpush2.msra.mxu0 0.0
        %2890 = vmatprep.subr.mxu0 0.0
        %2891 = vmatpush2.msra.mxu0 0.0
        %2892 = vmatprep.subr.mxu0 0.0
        %2893 = vmatpush2.msra.mxu0 0.0
        %2894 = vmatprep.subr.mxu0 0.0
        %2895 = vmatpush2.msra.mxu0 0.0
        %2896 = vmatprep.subr.mxu0 0.0
        %2897 = vmatpush2.msra.mxu0 0.0
        %2898 = vmatprep.mubr.f32.mxu0 0.0
        %2899 = vmatmul.mubr.f32.gmra.mxu0 %v2664
        %v2900 = vpop.f32.mrf.mxu0
        %v2901 = vadd.f32 0.0, %v2900
        %v2902 = vpop.f32.mrf.mxu0
        %v2903 = vadd.f32 0.0, %v2902
        %2904 = vdwg.mxu0
        %2905 = vmatprep.subr.mxu0 %v729
        %2906 = vmatpush1.msra.mxu0 %v728
        %2907 = vmatprep.subr.mxu0 %v725
        %2908 = vmatpush1.msra.mxu0 %v724
        %2909 = vmatprep.subr.mxu0 %v721
        %2910 = vmatpush1.msra.mxu0 %v720
        %2911 = vmatprep.subr.mxu0 %v717
        %2912 = vmatpush1.msra.mxu0 %v716
        %2913 = vmatprep.subr.mxu0 %v713
        %2914 = vmatpush1.msra.mxu0 %v712
        %2915 = vmatprep.subr.mxu0 %v709
        %2916 = vmatpush1.msra.mxu0 %v708
        %2917 = vmatprep.subr.mxu0 %v705
        %2918 = vmatpush1.msra.mxu0 %v704
        %2919 = vmatprep.subr.mxu0 %v701
        %2920 = vmatpush1.msra.mxu0 %v700
        %2921 = vmatprep.subr.mxu0 %v697
        %2922 = vmatpush1.msra.mxu0 %v696
        %2923 = vmatprep.subr.mxu0 %v693
        %2924 = vmatpush1.msra.mxu0 %v692
        %2925 = vmatprep.subr.mxu0 %v689
        %2926 = vmatpush1.msra.mxu0 %v688
        %2927 = vmatprep.subr.mxu0 %v685
        %2928 = vmatpush1.msra.mxu0 %v684
        %2929 = vmatprep.subr.mxu0 %v681
        %2930 = vmatpush1.msra.mxu0 %v680
        %2931 = vmatprep.subr.mxu0 %v677
        %2932 = vmatpush1.msra.mxu0 %v676
        %2933 = vmatprep.subr.mxu0 %v673
        %2934 = vmatpush1.msra.mxu0 %v672
        %2935 = vmatprep.subr.mxu0 %v669
        %2936 = vmatpush1.msra.mxu0 %v668
        %2937 = vmatprep.subr.mxu0 0.0
        %2938 = vmatpush2.msra.mxu0 0.0
        %2939 = vmatprep.subr.mxu0 0.0
        %2940 = vmatpush2.msra.mxu0 0.0
        %2941 = vmatprep.subr.mxu0 0.0
        %2942 = vmatpush2.msra.mxu0 0.0
        %2943 = vmatprep.subr.mxu0 0.0
        %2944 = vmatpush2.msra.mxu0 0.0
        %2945 = vmatprep.subr.mxu0 0.0
        %2946 = vmatpush2.msra.mxu0 0.0
        %2947 = vmatprep.subr.mxu0 0.0
        %2948 = vmatpush2.msra.mxu0 0.0
        %2949 = vmatprep.subr.mxu0 0.0
        %2950 = vmatpush2.msra.mxu0 0.0
        %2951 = vmatprep.subr.mxu0 0.0
        %2952 = vmatpush2.msra.mxu0 0.0
        %2953 = vmatprep.subr.mxu0 0.0
        %2954 = vmatpush2.msra.mxu0 0.0
        %2955 = vmatprep.subr.mxu0 0.0
        %2956 = vmatpush2.msra.mxu0 0.0
        %2957 = vmatprep.subr.mxu0 0.0
        %2958 = vmatpush2.msra.mxu0 0.0
        %2959 = vmatprep.subr.mxu0 0.0
        %2960 = vmatpush2.msra.mxu0 0.0
        %2961 = vmatprep.subr.mxu0 0.0
        %2962 = vmatpush2.msra.mxu0 0.0
        %2963 = vmatprep.subr.mxu0 0.0
        %2964 = vmatpush2.msra.mxu0 0.0
        %2965 = vmatprep.subr.mxu0 0.0
        %2966 = vmatpush2.msra.mxu0 0.0
        %2967 = vmatprep.subr.mxu0 0.0
        %2968 = vmatpush2.msra.mxu0 0.0
        %2969 = vmatprep.mubr.f32.mxu0 0.0
        %2970 = vmatmul.mubr.f32.gmra.mxu0 %v2664
        %v2971 = vpop.f32.mrf.mxu0
        %v2972 = vadd.f32 0.0, %v2971
        %v2973 = vpop.f32.mrf.mxu0
        %v2974 = vadd.f32 0.0, %v2973
        %2975 = vdwg.mxu0
        %2976 = vmatprep.subr.mxu0 %v663
        %2977 = vmatpush1.msra.mxu0 %v662
        %2978 = vmatprep.subr.mxu0 %v659
        %2979 = vmatpush1.msra.mxu0 %v658
        %2980 = vmatprep.subr.mxu0 %v655
        %2981 = vmatpush1.msra.mxu0 %v654
        %2982 = vmatprep.subr.mxu0 %v651
        %2983 = vmatpush1.msra.mxu0 %v650
        %2984 = vmatprep.subr.mxu0 %v647
        %2985 = vmatpush1.msra.mxu0 %v646
        %2986 = vmatprep.subr.mxu0 %v643
        %2987 = vmatpush1.msra.mxu0 %v642
        %2988 = vmatprep.subr.mxu0 %v639
        %2989 = vmatpush1.msra.mxu0 %v638
        %2990 = vmatprep.subr.mxu0 %v635
        %2991 = vmatpush1.msra.mxu0 %v634
        %2992 = vmatprep.subr.mxu0 %v631
        %2993 = vmatpush1.msra.mxu0 %v630
        %2994 = vmatprep.subr.mxu0 %v627
        %2995 = vmatpush1.msra.mxu0 %v626
        %2996 = vmatprep.subr.mxu0 %v623
        %2997 = vmatpush1.msra.mxu0 %v622
        %2998 = vmatprep.subr.mxu0 %v619
        %2999 = vmatpush1.msra.mxu0 %v618
        %3000 = vmatprep.subr.mxu0 %v615
        %3001 = vmatpush1.msra.mxu0 %v614
        %3002 = vmatprep.subr.mxu0 %v611
        %3003 = vmatpush1.msra.mxu0 %v610
        %3004 = vmatprep.subr.mxu0 %v607
        %3005 = vmatpush1.msra.mxu0 %v606
        %3006 = vmatprep.subr.mxu0 %v603
        %3007 = vmatpush1.msra.mxu0 %v602
        %3008 = vmatprep.subr.mxu0 0.0
        %3009 = vmatpush2.msra.mxu0 0.0
        %3010 = vmatprep.subr.mxu0 0.0
        %3011 = vmatpush2.msra.mxu0 0.0
        %3012 = vmatprep.subr.mxu0 0.0
        %3013 = vmatpush2.msra.mxu0 0.0
        %3014 = vmatprep.subr.mxu0 0.0
        %3015 = vmatpush2.msra.mxu0 0.0
        %3016 = vmatprep.subr.mxu0 0.0
        %3017 = vmatpush2.msra.mxu0 0.0
        %3018 = vmatprep.subr.mxu0 0.0
        %3019 = vmatpush2.msra.mxu0 0.0
        %3020 = vmatprep.subr.mxu0 0.0
        %3021 = vmatpush2.msra.mxu0 0.0
        %3022 = vmatprep.subr.mxu0 0.0
        %3023 = vmatpush2.msra.mxu0 0.0
        %3024 = vmatprep.subr.mxu0 0.0
        %3025 = vmatpush2.msra.mxu0 0.0
        %3026 = vmatprep.subr.mxu0 0.0
        %3027 = vmatpush2.msra.mxu0 0.0
        %3028 = vmatprep.subr.mxu0 0.0
        %3029 = vmatpush2.msra.mxu0 0.0
        %3030 = vmatprep.subr.mxu0 0.0
        %3031 = vmatpush2.msra.mxu0 0.0
        %3032 = vmatprep.subr.mxu0 0.0
        %3033 = vmatpush2.msra.mxu0 0.0
        %3034 = vmatprep.subr.mxu0 0.0
        %3035 = vmatpush2.msra.mxu0 0.0
        %3036 = vmatprep.subr.mxu0 0.0
        %3037 = vmatpush2.msra.mxu0 0.0
        %3038 = vmatprep.subr.mxu0 0.0
        %3039 = vmatpush2.msra.mxu0 0.0
        %3040 = vmatprep.mubr.f32.mxu0 0.0
        %3041 = vmatmul.mubr.f32.gmra.mxu0 %v2833
        %v3042 = vpop.f32.mrf.mxu0
        %v3043 = vadd.f32 %v2901, %v3042
        %v3044 = vpop.f32.mrf.mxu0
        %v3045 = vadd.f32 %v2903, %v3044
        %3046 = vdwg.mxu0
        %3047 = vmatprep.subr.mxu0 %v665
        %3048 = vmatpush1.msra.mxu0 %v664
        %3049 = vmatprep.subr.mxu0 %v661
        %3050 = vmatpush1.msra.mxu0 %v660
        %3051 = vmatprep.subr.mxu0 %v657
        %3052 = vmatpush1.msra.mxu0 %v656
        %3053 = vmatprep.subr.mxu0 %v653
        %3054 = vmatpush1.msra.mxu0 %v652
        %3055 = vmatprep.subr.mxu0 %v649
        %3056 = vmatpush1.msra.mxu0 %v648
        %3057 = vmatprep.subr.mxu0 %v645
        %3058 = vmatpush1.msra.mxu0 %v644
        %3059 = vmatprep.subr.mxu0 %v641
        %3060 = vmatpush1.msra.mxu0 %v640
        %3061 = vmatprep.subr.mxu0 %v637
        %3062 = vmatpush1.msra.mxu0 %v636
        %3063 = vmatprep.subr.mxu0 %v633
        %3064 = vmatpush1.msra.mxu0 %v632
        %3065 = vmatprep.subr.mxu0 %v629
        %3066 = vmatpush1.msra.mxu0 %v628
        %3067 = vmatprep.subr.mxu0 %v625
        %3068 = vmatpush1.msra.mxu0 %v624
        %3069 = vmatprep.subr.mxu0 %v621
        %3070 = vmatpush1.msra.mxu0 %v620
        %3071 = vmatprep.subr.mxu0 %v617
        %3072 = vmatpush1.msra.mxu0 %v616
        %3073 = vmatprep.subr.mxu0 %v613
        %3074 = vmatpush1.msra.mxu0 %v612
        %3075 = vmatprep.subr.mxu0 %v609
        %3076 = vmatpush1.msra.mxu0 %v608
        %3077 = vmatprep.subr.mxu0 %v605
        %3078 = vmatpush1.msra.mxu0 %v604
        %3079 = vmatprep.subr.mxu0 0.0
        %3080 = vmatpush2.msra.mxu0 0.0
        %3081 = vmatprep.subr.mxu0 0.0
        %3082 = vmatpush2.msra.mxu0 0.0
        %3083 = vmatprep.subr.mxu0 0.0
        %3084 = vmatpush2.msra.mxu0 0.0
        %3085 = vmatprep.subr.mxu0 0.0
        %3086 = vmatpush2.msra.mxu0 0.0
        %3087 = vmatprep.subr.mxu0 0.0
        %3088 = vmatpush2.msra.mxu0 0.0
        %3089 = vmatprep.subr.mxu0 0.0
        %3090 = vmatpush2.msra.mxu0 0.0
        %3091 = vmatprep.subr.mxu0 0.0
        %3092 = vmatpush2.msra.mxu0 0.0
        %3093 = vmatprep.subr.mxu0 0.0
        %3094 = vmatpush2.msra.mxu0 0.0
        %3095 = vmatprep.subr.mxu0 0.0
        %3096 = vmatpush2.msra.mxu0 0.0
        %3097 = vmatprep.subr.mxu0 0.0
        %3098 = vmatpush2.msra.mxu0 0.0
        %3099 = vmatprep.subr.mxu0 0.0
        %3100 = vmatpush2.msra.mxu0 0.0
        %3101 = vmatprep.subr.mxu0 0.0
        %3102 = vmatpush2.msra.mxu0 0.0
        %3103 = vmatprep.subr.mxu0 0.0
        %3104 = vmatpush2.msra.mxu0 0.0
        %3105 = vmatprep.subr.mxu0 0.0
        %3106 = vmatpush2.msra.mxu0 0.0
        %3107 = vmatprep.subr.mxu0 0.0
        %3108 = vmatpush2.msra.mxu0 0.0
        %3109 = vmatprep.subr.mxu0 0.0
        %3110 = vmatpush2.msra.mxu0 0.0
        %3111 = vmatprep.mubr.f32.mxu0 0.0
        %3112 = vmatmul.mubr.f32.gmra.mxu0 %v2833
        %v3113 = vpop.f32.mrf.mxu0
        %v3114 = vadd.f32 %v2972, %v3113
        %v3115 = vpop.f32.mrf.mxu0
        %v3116 = vadd.f32 %v2974, %v3115
        %3117 = vdwg.mxu0
        %v3118 = vadd.f32 %v3043, %v1210
        %v3119 = vadd.f32 %v3045, %v1214
        %v3120 = vadd.f32 %v3114, %v1218
        %v3121 = vadd.f32 %v3116, %v1222
        %v3122 = vmul.f32 %v3118, 1.442695
        %v3123 = vpow.pop %v3122
        %v3124 = vmul.f32 %v3119, 1.442695
        %v3125 = vpow.pop %v3124
        %v3126 = vtanh.pop %v3120
        %v3127 = vxor.u32 %v3121, 2147483648
        %v3128 = vmul.f32 %v3127, 1.442695
        %v3129 = vpow.pop %v3128
        %v3130 = vadd.f32 %v3129, 1.0
        %v3131 = vrcp.pop %v3130
        %v3132 = vmul.f32 1.0, %v3131
        %v3133 = vmul.f32 %v3125, %v2662
        %v3134 = vmul.f32 %v3123, %v3126
        %v3135 = vadd.f32 %v3133, %v3134
        %v3136 = vtanh.pop %v3135
        %v3137 = vmul.f32 %v3132, %v3136
        %s3138 = scalar_lea.vmem [#allocation4], 32
        %3139 = vst [vmem:[%s3138] sm:$0xff] %v3137
        %s3140 = scalar_lea.vmem %s456, 160 [#allocation5]
        %v3141 = vld [vmem:[%s3140] sm:$0xff]
        %v3142 = vld [vmem:[%s3140 + $0x8] sm:$0xff]
        %v3143 = vld [vmem:[%s3140 + $0x10] sm:$0xff]
        %v3144 = vld [vmem:[%s3140 + $0x18] sm:$0xff]
        %3145 = vmatprep.subr.mxu0 %v599
        %3146 = vmatpush1.msra.mxu0 %v598
        %3147 = vmatprep.subr.mxu0 %v595
        %3148 = vmatpush1.msra.mxu0 %v594
        %3149 = vmatprep.subr.mxu0 %v591
        %3150 = vmatpush1.msra.mxu0 %v590
        %3151 = vmatprep.subr.mxu0 %v587
        %3152 = vmatpush1.msra.mxu0 %v586
        %3153 = vmatprep.subr.mxu0 %v583
        %3154 = vmatpush1.msra.mxu0 %v582
        %3155 = vmatprep.subr.mxu0 %v579
        %3156 = vmatpush1.msra.mxu0 %v578
        %3157 = vmatprep.subr.mxu0 %v575
        %3158 = vmatpush1.msra.mxu0 %v574
        %3159 = vmatprep.subr.mxu0 %v571
        %3160 = vmatpush1.msra.mxu0 %v570
        %3161 = vmatprep.subr.mxu0 %v567
        %3162 = vmatpush1.msra.mxu0 %v566
        %3163 = vmatprep.subr.mxu0 %v563
        %3164 = vmatpush1.msra.mxu0 %v562
        %3165 = vmatprep.subr.mxu0 %v559
        %3166 = vmatpush1.msra.mxu0 %v558
        %3167 = vmatprep.subr.mxu0 %v555
        %3168 = vmatpush1.msra.mxu0 %v554
        %3169 = vmatprep.subr.mxu0 %v551
        %3170 = vmatpush1.msra.mxu0 %v550
        %3171 = vmatprep.subr.mxu0 %v547
        %3172 = vmatpush1.msra.mxu0 %v546
        %3173 = vmatprep.subr.mxu0 %v543
        %3174 = vmatpush1.msra.mxu0 %v542
        %3175 = vmatprep.subr.mxu0 %v539
        %3176 = vmatpush1.msra.mxu0 %v538
        %3177 = vmatprep.subr.mxu0 0.0
        %3178 = vmatpush2.msra.mxu0 0.0
        %3179 = vmatprep.subr.mxu0 0.0
        %3180 = vmatpush2.msra.mxu0 0.0
        %3181 = vmatprep.subr.mxu0 0.0
        %3182 = vmatpush2.msra.mxu0 0.0
        %3183 = vmatprep.subr.mxu0 0.0
        %3184 = vmatpush2.msra.mxu0 0.0
        %3185 = vmatprep.subr.mxu0 0.0
        %3186 = vmatpush2.msra.mxu0 0.0
        %3187 = vmatprep.subr.mxu0 0.0
        %3188 = vmatpush2.msra.mxu0 0.0
        %3189 = vmatprep.subr.mxu0 0.0
        %3190 = vmatpush2.msra.mxu0 0.0
        %3191 = vmatprep.subr.mxu0 0.0
        %3192 = vmatpush2.msra.mxu0 0.0
        %3193 = vmatprep.subr.mxu0 0.0
        %3194 = vmatpush2.msra.mxu0 0.0
        %3195 = vmatprep.subr.mxu0 0.0
        %3196 = vmatpush2.msra.mxu0 0.0
        %3197 = vmatprep.subr.mxu0 0.0
        %3198 = vmatpush2.msra.mxu0 0.0
        %3199 = vmatprep.subr.mxu0 0.0
        %3200 = vmatpush2.msra.mxu0 0.0
        %3201 = vmatprep.subr.mxu0 0.0
        %3202 = vmatpush2.msra.mxu0 0.0
        %3203 = vmatprep.subr.mxu0 0.0
        %3204 = vmatpush2.msra.mxu0 0.0
        %3205 = vmatprep.subr.mxu0 0.0
        %3206 = vmatpush2.msra.mxu0 0.0
        %3207 = vmatprep.subr.mxu0 0.0
        %3208 = vmatpush2.msra.mxu0 0.0
        %3209 = vmatprep.mubr.f32.mxu0 0.0
        %3210 = vmatmul.mubr.f32.gmra.mxu0 %v2833
        %v3211 = vpop.f32.mrf.mxu0
        %v3212 = vadd.f32 0.0, %v3211
        %v3213 = vpop.f32.mrf.mxu0
        %v3214 = vadd.f32 0.0, %v3213
        %3215 = vdwg.mxu0
        %3216 = vmatprep.subr.mxu0 %v601
        %3217 = vmatpush1.msra.mxu0 %v600
        %3218 = vmatprep.subr.mxu0 %v597
        %3219 = vmatpush1.msra.mxu0 %v596
        %3220 = vmatprep.subr.mxu0 %v593
        %3221 = vmatpush1.msra.mxu0 %v592
        %3222 = vmatprep.subr.mxu0 %v589
        %3223 = vmatpush1.msra.mxu0 %v588
        %3224 = vmatprep.subr.mxu0 %v585
        %3225 = vmatpush1.msra.mxu0 %v584
        %3226 = vmatprep.subr.mxu0 %v581
        %3227 = vmatpush1.msra.mxu0 %v580
        %3228 = vmatprep.subr.mxu0 %v577
        %3229 = vmatpush1.msra.mxu0 %v576
        %3230 = vmatprep.subr.mxu0 %v573
        %3231 = vmatpush1.msra.mxu0 %v572
        %3232 = vmatprep.subr.mxu0 %v569
        %3233 = vmatpush1.msra.mxu0 %v568
        %3234 = vmatprep.subr.mxu0 %v565
        %3235 = vmatpush1.msra.mxu0 %v564
        %3236 = vmatprep.subr.mxu0 %v561
        %3237 = vmatpush1.msra.mxu0 %v560
        %3238 = vmatprep.subr.mxu0 %v557
        %3239 = vmatpush1.msra.mxu0 %v556
        %3240 = vmatprep.subr.mxu0 %v553
        %3241 = vmatpush1.msra.mxu0 %v552
        %3242 = vmatprep.subr.mxu0 %v549
        %3243 = vmatpush1.msra.mxu0 %v548
        %3244 = vmatprep.subr.mxu0 %v545
        %3245 = vmatpush1.msra.mxu0 %v544
        %3246 = vmatprep.subr.mxu0 %v541
        %3247 = vmatpush1.msra.mxu0 %v540
        %3248 = vmatprep.subr.mxu0 0.0
        %3249 = vmatpush2.msra.mxu0 0.0
        %3250 = vmatprep.subr.mxu0 0.0
        %3251 = vmatpush2.msra.mxu0 0.0
        %3252 = vmatprep.subr.mxu0 0.0
        %3253 = vmatpush2.msra.mxu0 0.0
        %3254 = vmatprep.subr.mxu0 0.0
        %3255 = vmatpush2.msra.mxu0 0.0
        %3256 = vmatprep.subr.mxu0 0.0
        %3257 = vmatpush2.msra.mxu0 0.0
        %3258 = vmatprep.subr.mxu0 0.0
        %3259 = vmatpush2.msra.mxu0 0.0
        %3260 = vmatprep.subr.mxu0 0.0
        %3261 = vmatpush2.msra.mxu0 0.0
        %3262 = vmatprep.subr.mxu0 0.0
        %3263 = vmatpush2.msra.mxu0 0.0
        %3264 = vmatprep.subr.mxu0 0.0
        %3265 = vmatpush2.msra.mxu0 0.0
        %3266 = vmatprep.subr.mxu0 0.0
        %3267 = vmatpush2.msra.mxu0 0.0
        %3268 = vmatprep.subr.mxu0 0.0
        %3269 = vmatpush2.msra.mxu0 0.0
        %3270 = vmatprep.subr.mxu0 0.0
        %3271 = vmatpush2.msra.mxu0 0.0
        %3272 = vmatprep.subr.mxu0 0.0
        %3273 = vmatpush2.msra.mxu0 0.0
        %3274 = vmatprep.subr.mxu0 0.0
        %3275 = vmatpush2.msra.mxu0 0.0
        %3276 = vmatprep.subr.mxu0 0.0
        %3277 = vmatpush2.msra.mxu0 0.0
        %3278 = vmatprep.subr.mxu0 0.0
        %3279 = vmatpush2.msra.mxu0 0.0
        %3280 = vmatprep.mubr.f32.mxu0 0.0
        %3281 = vmatmul.mubr.f32.gmra.mxu0 %v2833
        %v3282 = vpop.f32.mrf.mxu0
        %v3283 = vadd.f32 0.0, %v3282
        %v3284 = vpop.f32.mrf.mxu0
        %v3285 = vadd.f32 0.0, %v3284
        %3286 = vdwg.mxu0
        %v3287 = vadd.f32 %v3141, %v3212
        %v3288 = vadd.f32 %v3142, %v3214
        %v3289 = vadd.f32 %v3143, %v3283
        %v3290 = vadd.f32 %v3144, %v3285
        %v3291 = vmul.f32 %v3287, 1.442695
        %v3292 = vpow.pop %v3291
        %v3293 = vmul.f32 %v3288, 1.442695
        %v3294 = vpow.pop %v3293
        %v3295 = vtanh.pop %v3289
        %v3296 = vxor.u32 %v3290, 2147483648
        %v3297 = vmul.f32 %v3296, 1.442695
        %v3298 = vpow.pop %v3297
        %v3299 = vadd.f32 %v3298, 1.0
        %v3300 = vrcp.pop %v3299
        %v3301 = vmul.f32 1.0, %v3300
        %v3302 = vmul.f32 %v3294, %v2831
        %v3303 = vmul.f32 %v3292, %v3295
        %v3304 = vadd.f32 %v3302, %v3303
        %v3305 = vtanh.pop %v3304
        %v3306 = vmul.f32 %v3301, %v3305
        %3307 = vmatprep.subr.mxu0 %v727
        %3308 = vmatpush1.msra.mxu0 %v726
        %3309 = vmatprep.subr.mxu0 %v723
        %3310 = vmatpush1.msra.mxu0 %v722
        %3311 = vmatprep.subr.mxu0 %v719
        %3312 = vmatpush1.msra.mxu0 %v718
        %3313 = vmatprep.subr.mxu0 %v715
        %3314 = vmatpush1.msra.mxu0 %v714
        %3315 = vmatprep.subr.mxu0 %v711
        %3316 = vmatpush1.msra.mxu0 %v710
        %3317 = vmatprep.subr.mxu0 %v707
        %3318 = vmatpush1.msra.mxu0 %v706
        %3319 = vmatprep.subr.mxu0 %v703
        %3320 = vmatpush1.msra.mxu0 %v702
        %3321 = vmatprep.subr.mxu0 %v699
        %3322 = vmatpush1.msra.mxu0 %v698
        %3323 = vmatprep.subr.mxu0 %v695
        %3324 = vmatpush1.msra.mxu0 %v694
        %3325 = vmatprep.subr.mxu0 %v691
        %3326 = vmatpush1.msra.mxu0 %v690
        %3327 = vmatprep.subr.mxu0 %v687
        %3328 = vmatpush1.msra.mxu0 %v686
        %3329 = vmatprep.subr.mxu0 %v683
        %3330 = vmatpush1.msra.mxu0 %v682
        %3331 = vmatprep.subr.mxu0 %v679
        %3332 = vmatpush1.msra.mxu0 %v678
        %3333 = vmatprep.subr.mxu0 %v675
        %3334 = vmatpush1.msra.mxu0 %v674
        %3335 = vmatprep.subr.mxu0 %v671
        %3336 = vmatpush1.msra.mxu0 %v670
        %3337 = vmatprep.subr.mxu0 %v667
        %3338 = vmatpush1.msra.mxu0 %v666
        %3339 = vmatprep.subr.mxu0 0.0
        %3340 = vmatpush2.msra.mxu0 0.0
        %3341 = vmatprep.subr.mxu0 0.0
        %3342 = vmatpush2.msra.mxu0 0.0
        %3343 = vmatprep.subr.mxu0 0.0
        %3344 = vmatpush2.msra.mxu0 0.0
        %3345 = vmatprep.subr.mxu0 0.0
        %3346 = vmatpush2.msra.mxu0 0.0
        %3347 = vmatprep.subr.mxu0 0.0
        %3348 = vmatpush2.msra.mxu0 0.0
        %3349 = vmatprep.subr.mxu0 0.0
        %3350 = vmatpush2.msra.mxu0 0.0
        %3351 = vmatprep.subr.mxu0 0.0
        %3352 = vmatpush2.msra.mxu0 0.0
        %3353 = vmatprep.subr.mxu0 0.0
        %3354 = vmatpush2.msra.mxu0 0.0
        %3355 = vmatprep.subr.mxu0 0.0
        %3356 = vmatpush2.msra.mxu0 0.0
        %3357 = vmatprep.subr.mxu0 0.0
        %3358 = vmatpush2.msra.mxu0 0.0
        %3359 = vmatprep.subr.mxu0 0.0
        %3360 = vmatpush2.msra.mxu0 0.0
        %3361 = vmatprep.subr.mxu0 0.0
        %3362 = vmatpush2.msra.mxu0 0.0
        %3363 = vmatprep.subr.mxu0 0.0
        %3364 = vmatpush2.msra.mxu0 0.0
        %3365 = vmatprep.subr.mxu0 0.0
        %3366 = vmatpush2.msra.mxu0 0.0
        %3367 = vmatprep.subr.mxu0 0.0
        %3368 = vmatpush2.msra.mxu0 0.0
        %3369 = vmatprep.subr.mxu0 0.0
        %3370 = vmatpush2.msra.mxu0 0.0
        %3371 = vmatprep.mubr.f32.mxu0 0.0
        %3372 = vmatmul.mubr.f32.gmra.mxu0 %v3137
        %v3373 = vpop.f32.mrf.mxu0
        %v3374 = vadd.f32 0.0, %v3373
        %v3375 = vpop.f32.mrf.mxu0
        %v3376 = vadd.f32 0.0, %v3375
        %3377 = vdwg.mxu0
        %3378 = vmatprep.subr.mxu0 %v729
        %3379 = vmatpush1.msra.mxu0 %v728
        %3380 = vmatprep.subr.mxu0 %v725
        %3381 = vmatpush1.msra.mxu0 %v724
        %3382 = vmatprep.subr.mxu0 %v721
        %3383 = vmatpush1.msra.mxu0 %v720
        %3384 = vmatprep.subr.mxu0 %v717
        %3385 = vmatpush1.msra.mxu0 %v716
        %3386 = vmatprep.subr.mxu0 %v713
        %3387 = vmatpush1.msra.mxu0 %v712
        %3388 = vmatprep.subr.mxu0 %v709
        %3389 = vmatpush1.msra.mxu0 %v708
        %3390 = vmatprep.subr.mxu0 %v705
        %3391 = vmatpush1.msra.mxu0 %v704
        %3392 = vmatprep.subr.mxu0 %v701
        %3393 = vmatpush1.msra.mxu0 %v700
        %3394 = vmatprep.subr.mxu0 %v697
        %3395 = vmatpush1.msra.mxu0 %v696
        %3396 = vmatprep.subr.mxu0 %v693
        %3397 = vmatpush1.msra.mxu0 %v692
        %3398 = vmatprep.subr.mxu0 %v689
        %3399 = vmatpush1.msra.mxu0 %v688
        %3400 = vmatprep.subr.mxu0 %v685
        %3401 = vmatpush1.msra.mxu0 %v684
        %3402 = vmatprep.subr.mxu0 %v681
        %3403 = vmatpush1.msra.mxu0 %v680
        %3404 = vmatprep.subr.mxu0 %v677
        %3405 = vmatpush1.msra.mxu0 %v676
        %3406 = vmatprep.subr.mxu0 %v673
        %3407 = vmatpush1.msra.mxu0 %v672
        %3408 = vmatprep.subr.mxu0 %v669
        %3409 = vmatpush1.msra.mxu0 %v668
        %3410 = vmatprep.subr.mxu0 0.0
        %3411 = vmatpush2.msra.mxu0 0.0
        %3412 = vmatprep.subr.mxu0 0.0
        %3413 = vmatpush2.msra.mxu0 0.0
        %3414 = vmatprep.subr.mxu0 0.0
        %3415 = vmatpush2.msra.mxu0 0.0
        %3416 = vmatprep.subr.mxu0 0.0
        %3417 = vmatpush2.msra.mxu0 0.0
        %3418 = vmatprep.subr.mxu0 0.0
        %3419 = vmatpush2.msra.mxu0 0.0
        %3420 = vmatprep.subr.mxu0 0.0
        %3421 = vmatpush2.msra.mxu0 0.0
        %3422 = vmatprep.subr.mxu0 0.0
        %3423 = vmatpush2.msra.mxu0 0.0
        %3424 = vmatprep.subr.mxu0 0.0
        %3425 = vmatpush2.msra.mxu0 0.0
        %3426 = vmatprep.subr.mxu0 0.0
        %3427 = vmatpush2.msra.mxu0 0.0
        %3428 = vmatprep.subr.mxu0 0.0
        %3429 = vmatpush2.msra.mxu0 0.0
        %3430 = vmatprep.subr.mxu0 0.0
        %3431 = vmatpush2.msra.mxu0 0.0
        %3432 = vmatprep.subr.mxu0 0.0
        %3433 = vmatpush2.msra.mxu0 0.0
        %3434 = vmatprep.subr.mxu0 0.0
        %3435 = vmatpush2.msra.mxu0 0.0
        %3436 = vmatprep.subr.mxu0 0.0
        %3437 = vmatpush2.msra.mxu0 0.0
        %3438 = vmatprep.subr.mxu0 0.0
        %3439 = vmatpush2.msra.mxu0 0.0
        %3440 = vmatprep.subr.mxu0 0.0
        %3441 = vmatpush2.msra.mxu0 0.0
        %3442 = vmatprep.mubr.f32.mxu0 0.0
        %3443 = vmatmul.mubr.f32.gmra.mxu0 %v3137
        %v3444 = vpop.f32.mrf.mxu0
        %v3445 = vadd.f32 0.0, %v3444
        %v3446 = vpop.f32.mrf.mxu0
        %v3447 = vadd.f32 0.0, %v3446
        %3448 = vdwg.mxu0
        %3449 = vmatprep.subr.mxu0 %v663
        %3450 = vmatpush1.msra.mxu0 %v662
        %3451 = vmatprep.subr.mxu0 %v659
        %3452 = vmatpush1.msra.mxu0 %v658
        %3453 = vmatprep.subr.mxu0 %v655
        %3454 = vmatpush1.msra.mxu0 %v654
        %3455 = vmatprep.subr.mxu0 %v651
        %3456 = vmatpush1.msra.mxu0 %v650
        %3457 = vmatprep.subr.mxu0 %v647
        %3458 = vmatpush1.msra.mxu0 %v646
        %3459 = vmatprep.subr.mxu0 %v643
        %3460 = vmatpush1.msra.mxu0 %v642
        %3461 = vmatprep.subr.mxu0 %v639
        %3462 = vmatpush1.msra.mxu0 %v638
        %3463 = vmatprep.subr.mxu0 %v635
        %3464 = vmatpush1.msra.mxu0 %v634
        %3465 = vmatprep.subr.mxu0 %v631
        %3466 = vmatpush1.msra.mxu0 %v630
        %3467 = vmatprep.subr.mxu0 %v627
        %3468 = vmatpush1.msra.mxu0 %v626
        %3469 = vmatprep.subr.mxu0 %v623
        %3470 = vmatpush1.msra.mxu0 %v622
        %3471 = vmatprep.subr.mxu0 %v619
        %3472 = vmatpush1.msra.mxu0 %v618
        %3473 = vmatprep.subr.mxu0 %v615
        %3474 = vmatpush1.msra.mxu0 %v614
        %3475 = vmatprep.subr.mxu0 %v611
        %3476 = vmatpush1.msra.mxu0 %v610
        %3477 = vmatprep.subr.mxu0 %v607
        %3478 = vmatpush1.msra.mxu0 %v606
        %3479 = vmatprep.subr.mxu0 %v603
        %3480 = vmatpush1.msra.mxu0 %v602
        %3481 = vmatprep.subr.mxu0 0.0
        %3482 = vmatpush2.msra.mxu0 0.0
        %3483 = vmatprep.subr.mxu0 0.0
        %3484 = vmatpush2.msra.mxu0 0.0
        %3485 = vmatprep.subr.mxu0 0.0
        %3486 = vmatpush2.msra.mxu0 0.0
        %3487 = vmatprep.subr.mxu0 0.0
        %3488 = vmatpush2.msra.mxu0 0.0
        %3489 = vmatprep.subr.mxu0 0.0
        %3490 = vmatpush2.msra.mxu0 0.0
        %3491 = vmatprep.subr.mxu0 0.0
        %3492 = vmatpush2.msra.mxu0 0.0
        %3493 = vmatprep.subr.mxu0 0.0
        %3494 = vmatpush2.msra.mxu0 0.0
        %3495 = vmatprep.subr.mxu0 0.0
        %3496 = vmatpush2.msra.mxu0 0.0
        %3497 = vmatprep.subr.mxu0 0.0
        %3498 = vmatpush2.msra.mxu0 0.0
        %3499 = vmatprep.subr.mxu0 0.0
        %3500 = vmatpush2.msra.mxu0 0.0
        %3501 = vmatprep.subr.mxu0 0.0
        %3502 = vmatpush2.msra.mxu0 0.0
        %3503 = vmatprep.subr.mxu0 0.0
        %3504 = vmatpush2.msra.mxu0 0.0
        %3505 = vmatprep.subr.mxu0 0.0
        %3506 = vmatpush2.msra.mxu0 0.0
        %3507 = vmatprep.subr.mxu0 0.0
        %3508 = vmatpush2.msra.mxu0 0.0
        %3509 = vmatprep.subr.mxu0 0.0
        %3510 = vmatpush2.msra.mxu0 0.0
        %3511 = vmatprep.subr.mxu0 0.0
        %3512 = vmatpush2.msra.mxu0 0.0
        %3513 = vmatprep.mubr.f32.mxu0 0.0
        %3514 = vmatmul.mubr.f32.gmra.mxu0 %v3306
        %v3515 = vpop.f32.mrf.mxu0
        %v3516 = vadd.f32 %v3374, %v3515
        %v3517 = vpop.f32.mrf.mxu0
        %v3518 = vadd.f32 %v3376, %v3517
        %3519 = vdwg.mxu0
        %3520 = vmatprep.subr.mxu0 %v665
        %3521 = vmatpush1.msra.mxu0 %v664
        %3522 = vmatprep.subr.mxu0 %v661
        %3523 = vmatpush1.msra.mxu0 %v660
        %3524 = vmatprep.subr.mxu0 %v657
        %3525 = vmatpush1.msra.mxu0 %v656
        %3526 = vmatprep.subr.mxu0 %v653
        %3527 = vmatpush1.msra.mxu0 %v652
        %3528 = vmatprep.subr.mxu0 %v649
        %3529 = vmatpush1.msra.mxu0 %v648
        %3530 = vmatprep.subr.mxu0 %v645
        %3531 = vmatpush1.msra.mxu0 %v644
        %3532 = vmatprep.subr.mxu0 %v641
        %3533 = vmatpush1.msra.mxu0 %v640
        %3534 = vmatprep.subr.mxu0 %v637
        %3535 = vmatpush1.msra.mxu0 %v636
        %3536 = vmatprep.subr.mxu0 %v633
        %3537 = vmatpush1.msra.mxu0 %v632
        %3538 = vmatprep.subr.mxu0 %v629
        %3539 = vmatpush1.msra.mxu0 %v628
        %3540 = vmatprep.subr.mxu0 %v625
        %3541 = vmatpush1.msra.mxu0 %v624
        %3542 = vmatprep.subr.mxu0 %v621
        %3543 = vmatpush1.msra.mxu0 %v620
        %3544 = vmatprep.subr.mxu0 %v617
        %3545 = vmatpush1.msra.mxu0 %v616
        %3546 = vmatprep.subr.mxu0 %v613
        %3547 = vmatpush1.msra.mxu0 %v612
        %3548 = vmatprep.subr.mxu0 %v609
        %3549 = vmatpush1.msra.mxu0 %v608
        %3550 = vmatprep.subr.mxu0 %v605
        %3551 = vmatpush1.msra.mxu0 %v604
        %3552 = vmatprep.subr.mxu0 0.0
        %3553 = vmatpush2.msra.mxu0 0.0
        %3554 = vmatprep.subr.mxu0 0.0
        %3555 = vmatpush2.msra.mxu0 0.0
        %3556 = vmatprep.subr.mxu0 0.0
        %3557 = vmatpush2.msra.mxu0 0.0
        %3558 = vmatprep.subr.mxu0 0.0
        %3559 = vmatpush2.msra.mxu0 0.0
        %3560 = vmatprep.subr.mxu0 0.0
        %3561 = vmatpush2.msra.mxu0 0.0
        %3562 = vmatprep.subr.mxu0 0.0
        %3563 = vmatpush2.msra.mxu0 0.0
        %3564 = vmatprep.subr.mxu0 0.0
        %3565 = vmatpush2.msra.mxu0 0.0
        %3566 = vmatprep.subr.mxu0 0.0
        %3567 = vmatpush2.msra.mxu0 0.0
        %3568 = vmatprep.subr.mxu0 0.0
        %3569 = vmatpush2.msra.mxu0 0.0
        %3570 = vmatprep.subr.mxu0 0.0
        %3571 = vmatpush2.msra.mxu0 0.0
        %3572 = vmatprep.subr.mxu0 0.0
        %3573 = vmatpush2.msra.mxu0 0.0
        %3574 = vmatprep.subr.mxu0 0.0
        %3575 = vmatpush2.msra.mxu0 0.0
        %3576 = vmatprep.subr.mxu0 0.0
        %3577 = vmatpush2.msra.mxu0 0.0
        %3578 = vmatprep.subr.mxu0 0.0
        %3579 = vmatpush2.msra.mxu0 0.0
        %3580 = vmatprep.subr.mxu0 0.0
        %3581 = vmatpush2.msra.mxu0 0.0
        %3582 = vmatprep.subr.mxu0 0.0
        %3583 = vmatpush2.msra.mxu0 0.0
        %3584 = vmatprep.mubr.f32.mxu0 0.0
        %3585 = vmatmul.mubr.f32.gmra.mxu0 %v3306
        %v3586 = vpop.f32.mrf.mxu0
        %v3587 = vadd.f32 %v3445, %v3586
        %v3588 = vpop.f32.mrf.mxu0
        %v3589 = vadd.f32 %v3447, %v3588
        %3590 = vdwg.mxu0
        %v3591 = vadd.f32 %v3516, %v1210
        %v3592 = vadd.f32 %v3518, %v1214
        %v3593 = vadd.f32 %v3587, %v1218
        %v3594 = vadd.f32 %v3589, %v1222
        %v3595 = vmul.f32 %v3591, 1.442695
        %v3596 = vpow.pop %v3595
        %v3597 = vmul.f32 %v3592, 1.442695
        %v3598 = vpow.pop %v3597
        %v3599 = vtanh.pop %v3593
        %v3600 = vxor.u32 %v3594, 2147483648
        %v3601 = vmul.f32 %v3600, 1.442695
        %v3602 = vpow.pop %v3601
        %v3603 = vadd.f32 %v3602, 1.0
        %v3604 = vrcp.pop %v3603
        %v3605 = vmul.f32 1.0, %v3604
        %v3606 = vmul.f32 %v3598, %v3135
        %v3607 = vmul.f32 %v3596, %v3599
        %v3608 = vadd.f32 %v3606, %v3607
        %v3609 = vtanh.pop %v3608
        %v3610 = vmul.f32 %v3605, %v3609
        %s3611 = scalar_lea.vmem [#allocation4], 40
        %3612 = vst [vmem:[%s3611] sm:$0xff] %v3610
        %s3613 = scalar_lea.vmem %s456, 192 [#allocation5]
        %v3614 = vld [vmem:[%s3613] sm:$0xff]
        %v3615 = vld [vmem:[%s3613 + $0x8] sm:$0xff]
        %v3616 = vld [vmem:[%s3613 + $0x10] sm:$0xff]
        %v3617 = vld [vmem:[%s3613 + $0x18] sm:$0xff]
        %3618 = vmatprep.subr.mxu0 %v599
        %3619 = vmatpush1.msra.mxu0 %v598
        %3620 = vmatprep.subr.mxu0 %v595
        %3621 = vmatpush1.msra.mxu0 %v594
        %3622 = vmatprep.subr.mxu0 %v591
        %3623 = vmatpush1.msra.mxu0 %v590
        %3624 = vmatprep.subr.mxu0 %v587
        %3625 = vmatpush1.msra.mxu0 %v586
        %3626 = vmatprep.subr.mxu0 %v583
        %3627 = vmatpush1.msra.mxu0 %v582
        %3628 = vmatprep.subr.mxu0 %v579
        %3629 = vmatpush1.msra.mxu0 %v578
        %3630 = vmatprep.subr.mxu0 %v575
        %3631 = vmatpush1.msra.mxu0 %v574
        %3632 = vmatprep.subr.mxu0 %v571
        %3633 = vmatpush1.msra.mxu0 %v570
        %3634 = vmatprep.subr.mxu0 %v567
        %3635 = vmatpush1.msra.mxu0 %v566
        %3636 = vmatprep.subr.mxu0 %v563
        %3637 = vmatpush1.msra.mxu0 %v562
        %3638 = vmatprep.subr.mxu0 %v559
        %3639 = vmatpush1.msra.mxu0 %v558
        %3640 = vmatprep.subr.mxu0 %v555
        %3641 = vmatpush1.msra.mxu0 %v554
        %3642 = vmatprep.subr.mxu0 %v551
        %3643 = vmatpush1.msra.mxu0 %v550
        %3644 = vmatprep.subr.mxu0 %v547
        %3645 = vmatpush1.msra.mxu0 %v546
        %3646 = vmatprep.subr.mxu0 %v543
        %3647 = vmatpush1.msra.mxu0 %v542
        %3648 = vmatprep.subr.mxu0 %v539
        %3649 = vmatpush1.msra.mxu0 %v538
        %3650 = vmatprep.subr.mxu0 0.0
        %3651 = vmatpush2.msra.mxu0 0.0
        %3652 = vmatprep.subr.mxu0 0.0
        %3653 = vmatpush2.msra.mxu0 0.0
        %3654 = vmatprep.subr.mxu0 0.0
        %3655 = vmatpush2.msra.mxu0 0.0
        %3656 = vmatprep.subr.mxu0 0.0
        %3657 = vmatpush2.msra.mxu0 0.0
        %3658 = vmatprep.subr.mxu0 0.0
        %3659 = vmatpush2.msra.mxu0 0.0
        %3660 = vmatprep.subr.mxu0 0.0
        %3661 = vmatpush2.msra.mxu0 0.0
        %3662 = vmatprep.subr.mxu0 0.0
        %3663 = vmatpush2.msra.mxu0 0.0
        %3664 = vmatprep.subr.mxu0 0.0
        %3665 = vmatpush2.msra.mxu0 0.0
        %3666 = vmatprep.subr.mxu0 0.0
        %3667 = vmatpush2.msra.mxu0 0.0
        %3668 = vmatprep.subr.mxu0 0.0
        %3669 = vmatpush2.msra.mxu0 0.0
        %3670 = vmatprep.subr.mxu0 0.0
        %3671 = vmatpush2.msra.mxu0 0.0
        %3672 = vmatprep.subr.mxu0 0.0
        %3673 = vmatpush2.msra.mxu0 0.0
        %3674 = vmatprep.subr.mxu0 0.0
        %3675 = vmatpush2.msra.mxu0 0.0
        %3676 = vmatprep.subr.mxu0 0.0
        %3677 = vmatpush2.msra.mxu0 0.0
        %3678 = vmatprep.subr.mxu0 0.0
        %3679 = vmatpush2.msra.mxu0 0.0
        %3680 = vmatprep.subr.mxu0 0.0
        %3681 = vmatpush2.msra.mxu0 0.0
        %3682 = vmatprep.mubr.f32.mxu0 0.0
        %3683 = vmatmul.mubr.f32.gmra.mxu0 %v3306
        %v3684 = vpop.f32.mrf.mxu0
        %v3685 = vadd.f32 0.0, %v3684
        %v3686 = vpop.f32.mrf.mxu0
        %v3687 = vadd.f32 0.0, %v3686
        %3688 = vdwg.mxu0
        %3689 = vmatprep.subr.mxu0 %v601
        %3690 = vmatpush1.msra.mxu0 %v600
        %3691 = vmatprep.subr.mxu0 %v597
        %3692 = vmatpush1.msra.mxu0 %v596
        %3693 = vmatprep.subr.mxu0 %v593
        %3694 = vmatpush1.msra.mxu0 %v592
        %3695 = vmatprep.subr.mxu0 %v589
        %3696 = vmatpush1.msra.mxu0 %v588
        %3697 = vmatprep.subr.mxu0 %v585
        %3698 = vmatpush1.msra.mxu0 %v584
        %3699 = vmatprep.subr.mxu0 %v581
        %3700 = vmatpush1.msra.mxu0 %v580
        %3701 = vmatprep.subr.mxu0 %v577
        %3702 = vmatpush1.msra.mxu0 %v576
        %3703 = vmatprep.subr.mxu0 %v573
        %3704 = vmatpush1.msra.mxu0 %v572
        %3705 = vmatprep.subr.mxu0 %v569
        %3706 = vmatpush1.msra.mxu0 %v568
        %3707 = vmatprep.subr.mxu0 %v565
        %3708 = vmatpush1.msra.mxu0 %v564
        %3709 = vmatprep.subr.mxu0 %v561
        %3710 = vmatpush1.msra.mxu0 %v560
        %3711 = vmatprep.subr.mxu0 %v557
        %3712 = vmatpush1.msra.mxu0 %v556
        %3713 = vmatprep.subr.mxu0 %v553
        %3714 = vmatpush1.msra.mxu0 %v552
        %3715 = vmatprep.subr.mxu0 %v549
        %3716 = vmatpush1.msra.mxu0 %v548
        %3717 = vmatprep.subr.mxu0 %v545
        %3718 = vmatpush1.msra.mxu0 %v544
        %3719 = vmatprep.subr.mxu0 %v541
        %3720 = vmatpush1.msra.mxu0 %v540
        %3721 = vmatprep.subr.mxu0 0.0
        %3722 = vmatpush2.msra.mxu0 0.0
        %3723 = vmatprep.subr.mxu0 0.0
        %3724 = vmatpush2.msra.mxu0 0.0
        %3725 = vmatprep.subr.mxu0 0.0
        %3726 = vmatpush2.msra.mxu0 0.0
        %3727 = vmatprep.subr.mxu0 0.0
        %3728 = vmatpush2.msra.mxu0 0.0
        %3729 = vmatprep.subr.mxu0 0.0
        %3730 = vmatpush2.msra.mxu0 0.0
        %3731 = vmatprep.subr.mxu0 0.0
        %3732 = vmatpush2.msra.mxu0 0.0
        %3733 = vmatprep.subr.mxu0 0.0
        %3734 = vmatpush2.msra.mxu0 0.0
        %3735 = vmatprep.subr.mxu0 0.0
        %3736 = vmatpush2.msra.mxu0 0.0
        %3737 = vmatprep.subr.mxu0 0.0
        %3738 = vmatpush2.msra.mxu0 0.0
        %3739 = vmatprep.subr.mxu0 0.0
        %3740 = vmatpush2.msra.mxu0 0.0
        %3741 = vmatprep.subr.mxu0 0.0
        %3742 = vmatpush2.msra.mxu0 0.0
        %3743 = vmatprep.subr.mxu0 0.0
        %3744 = vmatpush2.msra.mxu0 0.0
        %3745 = vmatprep.subr.mxu0 0.0
        %3746 = vmatpush2.msra.mxu0 0.0
        %3747 = vmatprep.subr.mxu0 0.0
        %3748 = vmatpush2.msra.mxu0 0.0
        %3749 = vmatprep.subr.mxu0 0.0
        %3750 = vmatpush2.msra.mxu0 0.0
        %3751 = vmatprep.subr.mxu0 0.0
        %3752 = vmatpush2.msra.mxu0 0.0
        %3753 = vmatprep.mubr.f32.mxu0 0.0
        %3754 = vmatmul.mubr.f32.gmra.mxu0 %v3306
        %v3755 = vpop.f32.mrf.mxu0
        %v3756 = vadd.f32 0.0, %v3755
        %v3757 = vpop.f32.mrf.mxu0
        %v3758 = vadd.f32 0.0, %v3757
        %3759 = vdwg.mxu0
        %v3760 = vadd.f32 %v3614, %v3685
        %v3761 = vadd.f32 %v3615, %v3687
        %v3762 = vadd.f32 %v3616, %v3756
        %v3763 = vadd.f32 %v3617, %v3758
        %v3764 = vmul.f32 %v3760, 1.442695
        %v3765 = vpow.pop %v3764
        %v3766 = vmul.f32 %v3761, 1.442695
        %v3767 = vpow.pop %v3766
        %v3768 = vtanh.pop %v3762
        %v3769 = vxor.u32 %v3763, 2147483648
        %v3770 = vmul.f32 %v3769, 1.442695
        %v3771 = vpow.pop %v3770
        %v3772 = vadd.f32 %v3771, 1.0
        %v3773 = vrcp.pop %v3772
        %v3774 = vmul.f32 1.0, %v3773
        %v3775 = vmul.f32 %v3767, %v3304
        %v3776 = vmul.f32 %v3765, %v3768
        %v3777 = vadd.f32 %v3775, %v3776
        %v3778 = vtanh.pop %v3777
        %v3779 = vmul.f32 %v3774, %v3778
        %3780 = vmatprep.subr.mxu0 %v727
        %3781 = vmatpush1.msra.mxu0 %v726
        %3782 = vmatprep.subr.mxu0 %v723
        %3783 = vmatpush1.msra.mxu0 %v722
        %3784 = vmatprep.subr.mxu0 %v719
        %3785 = vmatpush1.msra.mxu0 %v718
        %3786 = vmatprep.subr.mxu0 %v715
        %3787 = vmatpush1.msra.mxu0 %v714
        %3788 = vmatprep.subr.mxu0 %v711
        %3789 = vmatpush1.msra.mxu0 %v710
        %3790 = vmatprep.subr.mxu0 %v707
        %3791 = vmatpush1.msra.mxu0 %v706
        %3792 = vmatprep.subr.mxu0 %v703
        %3793 = vmatpush1.msra.mxu0 %v702
        %3794 = vmatprep.subr.mxu0 %v699
        %3795 = vmatpush1.msra.mxu0 %v698
        %3796 = vmatprep.subr.mxu0 %v695
        %3797 = vmatpush1.msra.mxu0 %v694
        %3798 = vmatprep.subr.mxu0 %v691
        %3799 = vmatpush1.msra.mxu0 %v690
        %3800 = vmatprep.subr.mxu0 %v687
        %3801 = vmatpush1.msra.mxu0 %v686
        %3802 = vmatprep.subr.mxu0 %v683
        %3803 = vmatpush1.msra.mxu0 %v682
        %3804 = vmatprep.subr.mxu0 %v679
        %3805 = vmatpush1.msra.mxu0 %v678
        %3806 = vmatprep.subr.mxu0 %v675
        %3807 = vmatpush1.msra.mxu0 %v674
        %3808 = vmatprep.subr.mxu0 %v671
        %3809 = vmatpush1.msra.mxu0 %v670
        %3810 = vmatprep.subr.mxu0 %v667
        %3811 = vmatpush1.msra.mxu0 %v666
        %3812 = vmatprep.subr.mxu0 0.0
        %3813 = vmatpush2.msra.mxu0 0.0
        %3814 = vmatprep.subr.mxu0 0.0
        %3815 = vmatpush2.msra.mxu0 0.0
        %3816 = vmatprep.subr.mxu0 0.0
        %3817 = vmatpush2.msra.mxu0 0.0
        %3818 = vmatprep.subr.mxu0 0.0
        %3819 = vmatpush2.msra.mxu0 0.0
        %3820 = vmatprep.subr.mxu0 0.0
        %3821 = vmatpush2.msra.mxu0 0.0
        %3822 = vmatprep.subr.mxu0 0.0
        %3823 = vmatpush2.msra.mxu0 0.0
        %3824 = vmatprep.subr.mxu0 0.0
        %3825 = vmatpush2.msra.mxu0 0.0
        %3826 = vmatprep.subr.mxu0 0.0
        %3827 = vmatpush2.msra.mxu0 0.0
        %3828 = vmatprep.subr.mxu0 0.0
        %3829 = vmatpush2.msra.mxu0 0.0
        %3830 = vmatprep.subr.mxu0 0.0
        %3831 = vmatpush2.msra.mxu0 0.0
        %3832 = vmatprep.subr.mxu0 0.0
        %3833 = vmatpush2.msra.mxu0 0.0
        %3834 = vmatprep.subr.mxu0 0.0
        %3835 = vmatpush2.msra.mxu0 0.0
        %3836 = vmatprep.subr.mxu0 0.0
        %3837 = vmatpush2.msra.mxu0 0.0
        %3838 = vmatprep.subr.mxu0 0.0
        %3839 = vmatpush2.msra.mxu0 0.0
        %3840 = vmatprep.subr.mxu0 0.0
        %3841 = vmatpush2.msra.mxu0 0.0
        %3842 = vmatprep.subr.mxu0 0.0
        %3843 = vmatpush2.msra.mxu0 0.0
        %3844 = vmatprep.mubr.f32.mxu0 0.0
        %3845 = vmatmul.mubr.f32.gmra.mxu0 %v3610
        %v3846 = vpop.f32.mrf.mxu0
        %v3847 = vadd.f32 0.0, %v3846
        %v3848 = vpop.f32.mrf.mxu0
        %v3849 = vadd.f32 0.0, %v3848
        %3850 = vdwg.mxu0
        %3851 = vmatprep.subr.mxu0 %v729
        %3852 = vmatpush1.msra.mxu0 %v728
        %3853 = vmatprep.subr.mxu0 %v725
        %3854 = vmatpush1.msra.mxu0 %v724
        %3855 = vmatprep.subr.mxu0 %v721
        %3856 = vmatpush1.msra.mxu0 %v720
        %3857 = vmatprep.subr.mxu0 %v717
        %3858 = vmatpush1.msra.mxu0 %v716
        %3859 = vmatprep.subr.mxu0 %v713
        %3860 = vmatpush1.msra.mxu0 %v712
        %3861 = vmatprep.subr.mxu0 %v709
        %3862 = vmatpush1.msra.mxu0 %v708
        %3863 = vmatprep.subr.mxu0 %v705
        %3864 = vmatpush1.msra.mxu0 %v704
        %3865 = vmatprep.subr.mxu0 %v701
        %3866 = vmatpush1.msra.mxu0 %v700
        %3867 = vmatprep.subr.mxu0 %v697
        %3868 = vmatpush1.msra.mxu0 %v696
        %3869 = vmatprep.subr.mxu0 %v693
        %3870 = vmatpush1.msra.mxu0 %v692
        %3871 = vmatprep.subr.mxu0 %v689
        %3872 = vmatpush1.msra.mxu0 %v688
        %3873 = vmatprep.subr.mxu0 %v685
        %3874 = vmatpush1.msra.mxu0 %v684
        %3875 = vmatprep.subr.mxu0 %v681
        %3876 = vmatpush1.msra.mxu0 %v680
        %3877 = vmatprep.subr.mxu0 %v677
        %3878 = vmatpush1.msra.mxu0 %v676
        %3879 = vmatprep.subr.mxu0 %v673
        %3880 = vmatpush1.msra.mxu0 %v672
        %3881 = vmatprep.subr.mxu0 %v669
        %3882 = vmatpush1.msra.mxu0 %v668
        %3883 = vmatprep.subr.mxu0 0.0
        %3884 = vmatpush2.msra.mxu0 0.0
        %3885 = vmatprep.subr.mxu0 0.0
        %3886 = vmatpush2.msra.mxu0 0.0
        %3887 = vmatprep.subr.mxu0 0.0
        %3888 = vmatpush2.msra.mxu0 0.0
        %3889 = vmatprep.subr.mxu0 0.0
        %3890 = vmatpush2.msra.mxu0 0.0
        %3891 = vmatprep.subr.mxu0 0.0
        %3892 = vmatpush2.msra.mxu0 0.0
        %3893 = vmatprep.subr.mxu0 0.0
        %3894 = vmatpush2.msra.mxu0 0.0
        %3895 = vmatprep.subr.mxu0 0.0
        %3896 = vmatpush2.msra.mxu0 0.0
        %3897 = vmatprep.subr.mxu0 0.0
        %3898 = vmatpush2.msra.mxu0 0.0
        %3899 = vmatprep.subr.mxu0 0.0
        %3900 = vmatpush2.msra.mxu0 0.0
        %3901 = vmatprep.subr.mxu0 0.0
        %3902 = vmatpush2.msra.mxu0 0.0
        %3903 = vmatprep.subr.mxu0 0.0
        %3904 = vmatpush2.msra.mxu0 0.0
        %3905 = vmatprep.subr.mxu0 0.0
        %3906 = vmatpush2.msra.mxu0 0.0
        %3907 = vmatprep.subr.mxu0 0.0
        %3908 = vmatpush2.msra.mxu0 0.0
        %3909 = vmatprep.subr.mxu0 0.0
        %3910 = vmatpush2.msra.mxu0 0.0
        %3911 = vmatprep.subr.mxu0 0.0
        %3912 = vmatpush2.msra.mxu0 0.0
        %3913 = vmatprep.subr.mxu0 0.0
        %3914 = vmatpush2.msra.mxu0 0.0
        %3915 = vmatprep.mubr.f32.mxu0 0.0
        %3916 = vmatmul.mubr.f32.gmra.mxu0 %v3610
        %v3917 = vpop.f32.mrf.mxu0
        %v3918 = vadd.f32 0.0, %v3917
        %v3919 = vpop.f32.mrf.mxu0
        %v3920 = vadd.f32 0.0, %v3919
        %3921 = vdwg.mxu0
        %3922 = vmatprep.subr.mxu0 %v663
        %3923 = vmatpush1.msra.mxu0 %v662
        %3924 = vmatprep.subr.mxu0 %v659
        %3925 = vmatpush1.msra.mxu0 %v658
        %3926 = vmatprep.subr.mxu0 %v655
        %3927 = vmatpush1.msra.mxu0 %v654
        %3928 = vmatprep.subr.mxu0 %v651
        %3929 = vmatpush1.msra.mxu0 %v650
        %3930 = vmatprep.subr.mxu0 %v647
        %3931 = vmatpush1.msra.mxu0 %v646
        %3932 = vmatprep.subr.mxu0 %v643
        %3933 = vmatpush1.msra.mxu0 %v642
        %3934 = vmatprep.subr.mxu0 %v639
        %3935 = vmatpush1.msra.mxu0 %v638
        %3936 = vmatprep.subr.mxu0 %v635
        %3937 = vmatpush1.msra.mxu0 %v634
        %3938 = vmatprep.subr.mxu0 %v631
        %3939 = vmatpush1.msra.mxu0 %v630
        %3940 = vmatprep.subr.mxu0 %v627
        %3941 = vmatpush1.msra.mxu0 %v626
        %3942 = vmatprep.subr.mxu0 %v623
        %3943 = vmatpush1.msra.mxu0 %v622
        %3944 = vmatprep.subr.mxu0 %v619
        %3945 = vmatpush1.msra.mxu0 %v618
        %3946 = vmatprep.subr.mxu0 %v615
        %3947 = vmatpush1.msra.mxu0 %v614
        %3948 = vmatprep.subr.mxu0 %v611
        %3949 = vmatpush1.msra.mxu0 %v610
        %3950 = vmatprep.subr.mxu0 %v607
        %3951 = vmatpush1.msra.mxu0 %v606
        %3952 = vmatprep.subr.mxu0 %v603
        %3953 = vmatpush1.msra.mxu0 %v602
        %3954 = vmatprep.subr.mxu0 0.0
        %3955 = vmatpush2.msra.mxu0 0.0
        %3956 = vmatprep.subr.mxu0 0.0
        %3957 = vmatpush2.msra.mxu0 0.0
        %3958 = vmatprep.subr.mxu0 0.0
        %3959 = vmatpush2.msra.mxu0 0.0
        %3960 = vmatprep.subr.mxu0 0.0
        %3961 = vmatpush2.msra.mxu0 0.0
        %3962 = vmatprep.subr.mxu0 0.0
        %3963 = vmatpush2.msra.mxu0 0.0
        %3964 = vmatprep.subr.mxu0 0.0
        %3965 = vmatpush2.msra.mxu0 0.0
        %3966 = vmatprep.subr.mxu0 0.0
        %3967 = vmatpush2.msra.mxu0 0.0
        %3968 = vmatprep.subr.mxu0 0.0
        %3969 = vmatpush2.msra.mxu0 0.0
        %3970 = vmatprep.subr.mxu0 0.0
        %3971 = vmatpush2.msra.mxu0 0.0
        %3972 = vmatprep.subr.mxu0 0.0
        %3973 = vmatpush2.msra.mxu0 0.0
        %3974 = vmatprep.subr.mxu0 0.0
        %3975 = vmatpush2.msra.mxu0 0.0
        %3976 = vmatprep.subr.mxu0 0.0
        %3977 = vmatpush2.msra.mxu0 0.0
        %3978 = vmatprep.subr.mxu0 0.0
        %3979 = vmatpush2.msra.mxu0 0.0
        %3980 = vmatprep.subr.mxu0 0.0
        %3981 = vmatpush2.msra.mxu0 0.0
        %3982 = vmatprep.subr.mxu0 0.0
        %3983 = vmatpush2.msra.mxu0 0.0
        %3984 = vmatprep.subr.mxu0 0.0
        %3985 = vmatpush2.msra.mxu0 0.0
        %3986 = vmatprep.mubr.f32.mxu0 0.0
        %3987 = vmatmul.mubr.f32.gmra.mxu0 %v3779
        %v3988 = vpop.f32.mrf.mxu0
        %v3989 = vadd.f32 %v3847, %v3988
        %v3990 = vpop.f32.mrf.mxu0
        %v3991 = vadd.f32 %v3849, %v3990
        %3992 = vdwg.mxu0
        %3993 = vmatprep.subr.mxu0 %v665
        %3994 = vmatpush1.msra.mxu0 %v664
        %3995 = vmatprep.subr.mxu0 %v661
        %3996 = vmatpush1.msra.mxu0 %v660
        %3997 = vmatprep.subr.mxu0 %v657
        %3998 = vmatpush1.msra.mxu0 %v656
        %3999 = vmatprep.subr.mxu0 %v653
        %4000 = vmatpush1.msra.mxu0 %v652
        %4001 = vmatprep.subr.mxu0 %v649
        %4002 = vmatpush1.msra.mxu0 %v648
        %4003 = vmatprep.subr.mxu0 %v645
        %4004 = vmatpush1.msra.mxu0 %v644
        %4005 = vmatprep.subr.mxu0 %v641
        %4006 = vmatpush1.msra.mxu0 %v640
        %4007 = vmatprep.subr.mxu0 %v637
        %4008 = vmatpush1.msra.mxu0 %v636
        %4009 = vmatprep.subr.mxu0 %v633
        %4010 = vmatpush1.msra.mxu0 %v632
        %4011 = vmatprep.subr.mxu0 %v629
        %4012 = vmatpush1.msra.mxu0 %v628
        %4013 = vmatprep.subr.mxu0 %v625
        %4014 = vmatpush1.msra.mxu0 %v624
        %4015 = vmatprep.subr.mxu0 %v621
        %4016 = vmatpush1.msra.mxu0 %v620
        %4017 = vmatprep.subr.mxu0 %v617
        %4018 = vmatpush1.msra.mxu0 %v616
        %4019 = vmatprep.subr.mxu0 %v613
        %4020 = vmatpush1.msra.mxu0 %v612
        %4021 = vmatprep.subr.mxu0 %v609
        %4022 = vmatpush1.msra.mxu0 %v608
        %4023 = vmatprep.subr.mxu0 %v605
        %4024 = vmatpush1.msra.mxu0 %v604
        %4025 = vmatprep.subr.mxu0 0.0
        %4026 = vmatpush2.msra.mxu0 0.0
        %4027 = vmatprep.subr.mxu0 0.0
        %4028 = vmatpush2.msra.mxu0 0.0
        %4029 = vmatprep.subr.mxu0 0.0
        %4030 = vmatpush2.msra.mxu0 0.0
        %4031 = vmatprep.subr.mxu0 0.0
        %4032 = vmatpush2.msra.mxu0 0.0
        %4033 = vmatprep.subr.mxu0 0.0
        %4034 = vmatpush2.msra.mxu0 0.0
        %4035 = vmatprep.subr.mxu0 0.0
        %4036 = vmatpush2.msra.mxu0 0.0
        %4037 = vmatprep.subr.mxu0 0.0
        %4038 = vmatpush2.msra.mxu0 0.0
        %4039 = vmatprep.subr.mxu0 0.0
        %4040 = vmatpush2.msra.mxu0 0.0
        %4041 = vmatprep.subr.mxu0 0.0
        %4042 = vmatpush2.msra.mxu0 0.0
        %4043 = vmatprep.subr.mxu0 0.0
        %4044 = vmatpush2.msra.mxu0 0.0
        %4045 = vmatprep.subr.mxu0 0.0
        %4046 = vmatpush2.msra.mxu0 0.0
        %4047 = vmatprep.subr.mxu0 0.0
        %4048 = vmatpush2.msra.mxu0 0.0
        %4049 = vmatprep.subr.mxu0 0.0
        %4050 = vmatpush2.msra.mxu0 0.0
        %4051 = vmatprep.subr.mxu0 0.0
        %4052 = vmatpush2.msra.mxu0 0.0
        %4053 = vmatprep.subr.mxu0 0.0
        %4054 = vmatpush2.msra.mxu0 0.0
        %4055 = vmatprep.subr.mxu0 0.0
        %4056 = vmatpush2.msra.mxu0 0.0
        %4057 = vmatprep.mubr.f32.mxu0 0.0
        %4058 = vmatmul.mubr.f32.gmra.mxu0 %v3779
        %v4059 = vpop.f32.mrf.mxu0
        %v4060 = vadd.f32 %v3918, %v4059
        %v4061 = vpop.f32.mrf.mxu0
        %v4062 = vadd.f32 %v3920, %v4061
        %4063 = vdwg.mxu0
        %v4064 = vadd.f32 %v3989, %v1210
        %v4065 = vadd.f32 %v3991, %v1214
        %v4066 = vadd.f32 %v4060, %v1218
        %v4067 = vadd.f32 %v4062, %v1222
        %v4068 = vmul.f32 %v4064, 1.442695
        %v4069 = vpow.pop %v4068
        %v4070 = vmul.f32 %v4065, 1.442695
        %v4071 = vpow.pop %v4070
        %v4072 = vtanh.pop %v4066
        %v4073 = vxor.u32 %v4067, 2147483648
        %v4074 = vmul.f32 %v4073, 1.442695
        %v4075 = vpow.pop %v4074
        %v4076 = vadd.f32 %v4075, 1.0
        %v4077 = vrcp.pop %v4076
        %v4078 = vmul.f32 1.0, %v4077
        %v4079 = vmul.f32 %v4071, %v3608
        %v4080 = vmul.f32 %v4069, %v4072
        %v4081 = vadd.f32 %v4079, %v4080
        %v4082 = vtanh.pop %v4081
        %v4083 = vmul.f32 %v4078, %v4082
        %s4084 = scalar_lea.vmem [#allocation4], 48
        %4085 = vst [vmem:[%s4084] sm:$0xff] %v4083
        %s4086 = scalar_lea.vmem %s456, 224 [#allocation5]
        %v4087 = vld [vmem:[%s4086] sm:$0xff]
        %v4088 = vld [vmem:[%s4086 + $0x8] sm:$0xff]
        %v4089 = vld [vmem:[%s4086 + $0x10] sm:$0xff]
        %v4090 = vld [vmem:[%s4086 + $0x18] sm:$0xff]
        %4091 = vmatprep.subr.mxu0 %v599
        %4092 = vmatpush1.msra.mxu0 %v598
        %4093 = vmatprep.subr.mxu0 %v595
        %4094 = vmatpush1.msra.mxu0 %v594
        %4095 = vmatprep.subr.mxu0 %v591
        %4096 = vmatpush1.msra.mxu0 %v590
        %4097 = vmatprep.subr.mxu0 %v587
        %4098 = vmatpush1.msra.mxu0 %v586
        %4099 = vmatprep.subr.mxu0 %v583
        %4100 = vmatpush1.msra.mxu0 %v582
        %4101 = vmatprep.subr.mxu0 %v579
        %4102 = vmatpush1.msra.mxu0 %v578
        %4103 = vmatprep.subr.mxu0 %v575
        %4104 = vmatpush1.msra.mxu0 %v574
        %4105 = vmatprep.subr.mxu0 %v571
        %4106 = vmatpush1.msra.mxu0 %v570
        %4107 = vmatprep.subr.mxu0 %v567
        %4108 = vmatpush1.msra.mxu0 %v566
        %4109 = vmatprep.subr.mxu0 %v563
        %4110 = vmatpush1.msra.mxu0 %v562
        %4111 = vmatprep.subr.mxu0 %v559
        %4112 = vmatpush1.msra.mxu0 %v558
        %4113 = vmatprep.subr.mxu0 %v555
        %4114 = vmatpush1.msra.mxu0 %v554
        %4115 = vmatprep.subr.mxu0 %v551
        %4116 = vmatpush1.msra.mxu0 %v550
        %4117 = vmatprep.subr.mxu0 %v547
        %4118 = vmatpush1.msra.mxu0 %v546
        %4119 = vmatprep.subr.mxu0 %v543
        %4120 = vmatpush1.msra.mxu0 %v542
        %4121 = vmatprep.subr.mxu0 %v539
        %4122 = vmatpush1.msra.mxu0 %v538
        %4123 = vmatprep.subr.mxu0 0.0
        %4124 = vmatpush2.msra.mxu0 0.0
        %4125 = vmatprep.subr.mxu0 0.0
        %4126 = vmatpush2.msra.mxu0 0.0
        %4127 = vmatprep.subr.mxu0 0.0
        %4128 = vmatpush2.msra.mxu0 0.0
        %4129 = vmatprep.subr.mxu0 0.0
        %4130 = vmatpush2.msra.mxu0 0.0
        %4131 = vmatprep.subr.mxu0 0.0
        %4132 = vmatpush2.msra.mxu0 0.0
        %4133 = vmatprep.subr.mxu0 0.0
        %4134 = vmatpush2.msra.mxu0 0.0
        %4135 = vmatprep.subr.mxu0 0.0
        %4136 = vmatpush2.msra.mxu0 0.0
        %4137 = vmatprep.subr.mxu0 0.0
        %4138 = vmatpush2.msra.mxu0 0.0
        %4139 = vmatprep.subr.mxu0 0.0
        %4140 = vmatpush2.msra.mxu0 0.0
        %4141 = vmatprep.subr.mxu0 0.0
        %4142 = vmatpush2.msra.mxu0 0.0
        %4143 = vmatprep.subr.mxu0 0.0
        %4144 = vmatpush2.msra.mxu0 0.0
        %4145 = vmatprep.subr.mxu0 0.0
        %4146 = vmatpush2.msra.mxu0 0.0
        %4147 = vmatprep.subr.mxu0 0.0
        %4148 = vmatpush2.msra.mxu0 0.0
        %4149 = vmatprep.subr.mxu0 0.0
        %4150 = vmatpush2.msra.mxu0 0.0
        %4151 = vmatprep.subr.mxu0 0.0
        %4152 = vmatpush2.msra.mxu0 0.0
        %4153 = vmatprep.subr.mxu0 0.0
        %4154 = vmatpush2.msra.mxu0 0.0
        %4155 = vmatprep.mubr.f32.mxu0 0.0
        %4156 = vmatmul.mubr.f32.gmra.mxu0 %v3779
        %v4157 = vpop.f32.mrf.mxu0
        %v4158 = vadd.f32 0.0, %v4157
        %v4159 = vpop.f32.mrf.mxu0
        %v4160 = vadd.f32 0.0, %v4159
        %4161 = vdwg.mxu0
        %4162 = vmatprep.subr.mxu0 %v601
        %4163 = vmatpush1.msra.mxu0 %v600
        %4164 = vmatprep.subr.mxu0 %v597
        %4165 = vmatpush1.msra.mxu0 %v596
        %4166 = vmatprep.subr.mxu0 %v593
        %4167 = vmatpush1.msra.mxu0 %v592
        %4168 = vmatprep.subr.mxu0 %v589
        %4169 = vmatpush1.msra.mxu0 %v588
        %4170 = vmatprep.subr.mxu0 %v585
        %4171 = vmatpush1.msra.mxu0 %v584
        %4172 = vmatprep.subr.mxu0 %v581
        %4173 = vmatpush1.msra.mxu0 %v580
        %4174 = vmatprep.subr.mxu0 %v577
        %4175 = vmatpush1.msra.mxu0 %v576
        %4176 = vmatprep.subr.mxu0 %v573
        %4177 = vmatpush1.msra.mxu0 %v572
        %4178 = vmatprep.subr.mxu0 %v569
        %4179 = vmatpush1.msra.mxu0 %v568
        %4180 = vmatprep.subr.mxu0 %v565
        %4181 = vmatpush1.msra.mxu0 %v564
        %4182 = vmatprep.subr.mxu0 %v561
        %4183 = vmatpush1.msra.mxu0 %v560
        %4184 = vmatprep.subr.mxu0 %v557
        %4185 = vmatpush1.msra.mxu0 %v556
        %4186 = vmatprep.subr.mxu0 %v553
        %4187 = vmatpush1.msra.mxu0 %v552
        %4188 = vmatprep.subr.mxu0 %v549
        %4189 = vmatpush1.msra.mxu0 %v548
        %4190 = vmatprep.subr.mxu0 %v545
        %4191 = vmatpush1.msra.mxu0 %v544
        %4192 = vmatprep.subr.mxu0 %v541
        %4193 = vmatpush1.msra.mxu0 %v540
        %4194 = vmatprep.subr.mxu0 0.0
        %4195 = vmatpush2.msra.mxu0 0.0
        %4196 = vmatprep.subr.mxu0 0.0
        %4197 = vmatpush2.msra.mxu0 0.0
        %4198 = vmatprep.subr.mxu0 0.0
        %4199 = vmatpush2.msra.mxu0 0.0
        %4200 = vmatprep.subr.mxu0 0.0
        %4201 = vmatpush2.msra.mxu0 0.0
        %4202 = vmatprep.subr.mxu0 0.0
        %4203 = vmatpush2.msra.mxu0 0.0
        %4204 = vmatprep.subr.mxu0 0.0
        %4205 = vmatpush2.msra.mxu0 0.0
        %4206 = vmatprep.subr.mxu0 0.0
        %4207 = vmatpush2.msra.mxu0 0.0
        %4208 = vmatprep.subr.mxu0 0.0
        %4209 = vmatpush2.msra.mxu0 0.0
        %4210 = vmatprep.subr.mxu0 0.0
        %4211 = vmatpush2.msra.mxu0 0.0
        %4212 = vmatprep.subr.mxu0 0.0
        %4213 = vmatpush2.msra.mxu0 0.0
        %4214 = vmatprep.subr.mxu0 0.0
        %4215 = vmatpush2.msra.mxu0 0.0
        %4216 = vmatprep.subr.mxu0 0.0
        %4217 = vmatpush2.msra.mxu0 0.0
        %4218 = vmatprep.subr.mxu0 0.0
        %4219 = vmatpush2.msra.mxu0 0.0
        %4220 = vmatprep.subr.mxu0 0.0
        %4221 = vmatpush2.msra.mxu0 0.0
        %4222 = vmatprep.subr.mxu0 0.0
        %4223 = vmatpush2.msra.mxu0 0.0
        %4224 = vmatprep.subr.mxu0 0.0
        %4225 = vmatpush2.msra.mxu0 0.0
        %4226 = vmatprep.mubr.f32.mxu0 0.0
        %4227 = vmatmul.mubr.f32.gmra.mxu0 %v3779
        %v4228 = vpop.f32.mrf.mxu0
        %v4229 = vadd.f32 0.0, %v4228
        %v4230 = vpop.f32.mrf.mxu0
        %v4231 = vadd.f32 0.0, %v4230
        %4232 = vdwg.mxu0
        %v4233 = vadd.f32 %v4087, %v4158
        %v4234 = vadd.f32 %v4088, %v4160
        %v4235 = vadd.f32 %v4089, %v4229
        %v4236 = vadd.f32 %v4090, %v4231
        %v4237 = vmul.f32 %v4233, 1.442695
        %v4238 = vpow.pop %v4237
        %v4239 = vmul.f32 %v4234, 1.442695
        %v4240 = vpow.pop %v4239
        %v4241 = vtanh.pop %v4235
        %v4242 = vxor.u32 %v4236, 2147483648
        %v4243 = vmul.f32 %v4242, 1.442695
        %v4244 = vpow.pop %v4243
        %v4245 = vadd.f32 %v4244, 1.0
        %v4246 = vrcp.pop %v4245
        %v4247 = vmul.f32 1.0, %v4246
        %v4248 = vmul.f32 %v4240, %v3777
        %v4249 = vmul.f32 %v4238, %v4241
        %v4250 = vadd.f32 %v4248, %v4249
        %v4251 = vtanh.pop %v4250
        %v4252 = vmul.f32 %v4247, %v4251
        %4253 = vmatprep.subr.mxu0 %v727
        %4254 = vmatpush1.msra.mxu0 %v726
        %4255 = vmatprep.subr.mxu0 %v723
        %4256 = vmatpush1.msra.mxu0 %v722
        %4257 = vmatprep.subr.mxu0 %v719
        %4258 = vmatpush1.msra.mxu0 %v718
        %4259 = vmatprep.subr.mxu0 %v715
        %4260 = vmatpush1.msra.mxu0 %v714
        %4261 = vmatprep.subr.mxu0 %v711
        %4262 = vmatpush1.msra.mxu0 %v710
        %4263 = vmatprep.subr.mxu0 %v707
        %4264 = vmatpush1.msra.mxu0 %v706
        %4265 = vmatprep.subr.mxu0 %v703
        %4266 = vmatpush1.msra.mxu0 %v702
        %4267 = vmatprep.subr.mxu0 %v699
        %4268 = vmatpush1.msra.mxu0 %v698
        %4269 = vmatprep.subr.mxu0 %v695
        %4270 = vmatpush1.msra.mxu0 %v694
        %4271 = vmatprep.subr.mxu0 %v691
        %4272 = vmatpush1.msra.mxu0 %v690
        %4273 = vmatprep.subr.mxu0 %v687
        %4274 = vmatpush1.msra.mxu0 %v686
        %4275 = vmatprep.subr.mxu0 %v683
        %4276 = vmatpush1.msra.mxu0 %v682
        %4277 = vmatprep.subr.mxu0 %v679
        %4278 = vmatpush1.msra.mxu0 %v678
        %4279 = vmatprep.subr.mxu0 %v675
        %4280 = vmatpush1.msra.mxu0 %v674
        %4281 = vmatprep.subr.mxu0 %v671
        %4282 = vmatpush1.msra.mxu0 %v670
        %4283 = vmatprep.subr.mxu0 %v667
        %4284 = vmatpush1.msra.mxu0 %v666
        %4285 = vmatprep.subr.mxu0 0.0
        %4286 = vmatpush2.msra.mxu0 0.0
        %4287 = vmatprep.subr.mxu0 0.0
        %4288 = vmatpush2.msra.mxu0 0.0
        %4289 = vmatprep.subr.mxu0 0.0
        %4290 = vmatpush2.msra.mxu0 0.0
        %4291 = vmatprep.subr.mxu0 0.0
        %4292 = vmatpush2.msra.mxu0 0.0
        %4293 = vmatprep.subr.mxu0 0.0
        %4294 = vmatpush2.msra.mxu0 0.0
        %4295 = vmatprep.subr.mxu0 0.0
        %4296 = vmatpush2.msra.mxu0 0.0
        %4297 = vmatprep.subr.mxu0 0.0
        %4298 = vmatpush2.msra.mxu0 0.0
        %4299 = vmatprep.subr.mxu0 0.0
        %4300 = vmatpush2.msra.mxu0 0.0
        %4301 = vmatprep.subr.mxu0 0.0
        %4302 = vmatpush2.msra.mxu0 0.0
        %4303 = vmatprep.subr.mxu0 0.0
        %4304 = vmatpush2.msra.mxu0 0.0
        %4305 = vmatprep.subr.mxu0 0.0
        %4306 = vmatpush2.msra.mxu0 0.0
        %4307 = vmatprep.subr.mxu0 0.0
        %4308 = vmatpush2.msra.mxu0 0.0
        %4309 = vmatprep.subr.mxu0 0.0
        %4310 = vmatpush2.msra.mxu0 0.0
        %4311 = vmatprep.subr.mxu0 0.0
        %4312 = vmatpush2.msra.mxu0 0.0
        %4313 = vmatprep.subr.mxu0 0.0
        %4314 = vmatpush2.msra.mxu0 0.0
        %4315 = vmatprep.subr.mxu0 0.0
        %4316 = vmatpush2.msra.mxu0 0.0
        %4317 = vmatprep.mubr.f32.mxu0 0.0
        %4318 = vmatmul.mubr.f32.gmra.mxu0 %v4083
        %v4319 = vpop.f32.mrf.mxu0
        %v4320 = vadd.f32 0.0, %v4319
        %v4321 = vpop.f32.mrf.mxu0
        %v4322 = vadd.f32 0.0, %v4321
        %4323 = vdwg.mxu0
        %4324 = vmatprep.subr.mxu0 %v729
        %4325 = vmatpush1.msra.mxu0 %v728
        %4326 = vmatprep.subr.mxu0 %v725
        %4327 = vmatpush1.msra.mxu0 %v724
        %4328 = vmatprep.subr.mxu0 %v721
        %4329 = vmatpush1.msra.mxu0 %v720
        %4330 = vmatprep.subr.mxu0 %v717
        %4331 = vmatpush1.msra.mxu0 %v716
        %4332 = vmatprep.subr.mxu0 %v713
        %4333 = vmatpush1.msra.mxu0 %v712
        %4334 = vmatprep.subr.mxu0 %v709
        %4335 = vmatpush1.msra.mxu0 %v708
        %4336 = vmatprep.subr.mxu0 %v705
        %4337 = vmatpush1.msra.mxu0 %v704
        %4338 = vmatprep.subr.mxu0 %v701
        %4339 = vmatpush1.msra.mxu0 %v700
        %4340 = vmatprep.subr.mxu0 %v697
        %4341 = vmatpush1.msra.mxu0 %v696
        %4342 = vmatprep.subr.mxu0 %v693
        %4343 = vmatpush1.msra.mxu0 %v692
        %4344 = vmatprep.subr.mxu0 %v689
        %4345 = vmatpush1.msra.mxu0 %v688
        %4346 = vmatprep.subr.mxu0 %v685
        %4347 = vmatpush1.msra.mxu0 %v684
        %4348 = vmatprep.subr.mxu0 %v681
        %4349 = vmatpush1.msra.mxu0 %v680
        %4350 = vmatprep.subr.mxu0 %v677
        %4351 = vmatpush1.msra.mxu0 %v676
        %4352 = vmatprep.subr.mxu0 %v673
        %4353 = vmatpush1.msra.mxu0 %v672
        %4354 = vmatprep.subr.mxu0 %v669
        %4355 = vmatpush1.msra.mxu0 %v668
        %4356 = vmatprep.subr.mxu0 0.0
        %4357 = vmatpush2.msra.mxu0 0.0
        %4358 = vmatprep.subr.mxu0 0.0
        %4359 = vmatpush2.msra.mxu0 0.0
        %4360 = vmatprep.subr.mxu0 0.0
        %4361 = vmatpush2.msra.mxu0 0.0
        %4362 = vmatprep.subr.mxu0 0.0
        %4363 = vmatpush2.msra.mxu0 0.0
        %4364 = vmatprep.subr.mxu0 0.0
        %4365 = vmatpush2.msra.mxu0 0.0
        %4366 = vmatprep.subr.mxu0 0.0
        %4367 = vmatpush2.msra.mxu0 0.0
        %4368 = vmatprep.subr.mxu0 0.0
        %4369 = vmatpush2.msra.mxu0 0.0
        %4370 = vmatprep.subr.mxu0 0.0
        %4371 = vmatpush2.msra.mxu0 0.0
        %4372 = vmatprep.subr.mxu0 0.0
        %4373 = vmatpush2.msra.mxu0 0.0
        %4374 = vmatprep.subr.mxu0 0.0
        %4375 = vmatpush2.msra.mxu0 0.0
        %4376 = vmatprep.subr.mxu0 0.0
        %4377 = vmatpush2.msra.mxu0 0.0
        %4378 = vmatprep.subr.mxu0 0.0
        %4379 = vmatpush2.msra.mxu0 0.0
        %4380 = vmatprep.subr.mxu0 0.0
        %4381 = vmatpush2.msra.mxu0 0.0
        %4382 = vmatprep.subr.mxu0 0.0
        %4383 = vmatpush2.msra.mxu0 0.0
        %4384 = vmatprep.subr.mxu0 0.0
        %4385 = vmatpush2.msra.mxu0 0.0
        %4386 = vmatprep.subr.mxu0 0.0
        %4387 = vmatpush2.msra.mxu0 0.0
        %4388 = vmatprep.mubr.f32.mxu0 0.0
        %4389 = vmatmul.mubr.f32.gmra.mxu0 %v4083
        %v4390 = vpop.f32.mrf.mxu0
        %v4391 = vadd.f32 0.0, %v4390
        %v4392 = vpop.f32.mrf.mxu0
        %v4393 = vadd.f32 0.0, %v4392
        %4394 = vdwg.mxu0
        %4395 = vmatprep.subr.mxu0 %v663
        %4396 = vmatpush1.msra.mxu0 %v662
        %4397 = vmatprep.subr.mxu0 %v659
        %4398 = vmatpush1.msra.mxu0 %v658
        %4399 = vmatprep.subr.mxu0 %v655
        %4400 = vmatpush1.msra.mxu0 %v654
        %4401 = vmatprep.subr.mxu0 %v651
        %4402 = vmatpush1.msra.mxu0 %v650
        %4403 = vmatprep.subr.mxu0 %v647
        %4404 = vmatpush1.msra.mxu0 %v646
        %4405 = vmatprep.subr.mxu0 %v643
        %4406 = vmatpush1.msra.mxu0 %v642
        %4407 = vmatprep.subr.mxu0 %v639
        %4408 = vmatpush1.msra.mxu0 %v638
        %4409 = vmatprep.subr.mxu0 %v635
        %4410 = vmatpush1.msra.mxu0 %v634
        %4411 = vmatprep.subr.mxu0 %v631
        %4412 = vmatpush1.msra.mxu0 %v630
        %4413 = vmatprep.subr.mxu0 %v627
        %4414 = vmatpush1.msra.mxu0 %v626
        %4415 = vmatprep.subr.mxu0 %v623
        %4416 = vmatpush1.msra.mxu0 %v622
        %4417 = vmatprep.subr.mxu0 %v619
        %4418 = vmatpush1.msra.mxu0 %v618
        %4419 = vmatprep.subr.mxu0 %v615
        %4420 = vmatpush1.msra.mxu0 %v614
        %4421 = vmatprep.subr.mxu0 %v611
        %4422 = vmatpush1.msra.mxu0 %v610
        %4423 = vmatprep.subr.mxu0 %v607
        %4424 = vmatpush1.msra.mxu0 %v606
        %4425 = vmatprep.subr.mxu0 %v603
        %4426 = vmatpush1.msra.mxu0 %v602
        %4427 = vmatprep.subr.mxu0 0.0
        %4428 = vmatpush2.msra.mxu0 0.0
        %4429 = vmatprep.subr.mxu0 0.0
        %4430 = vmatpush2.msra.mxu0 0.0
        %4431 = vmatprep.subr.mxu0 0.0
        %4432 = vmatpush2.msra.mxu0 0.0
        %4433 = vmatprep.subr.mxu0 0.0
        %4434 = vmatpush2.msra.mxu0 0.0
        %4435 = vmatprep.subr.mxu0 0.0
        %4436 = vmatpush2.msra.mxu0 0.0
        %4437 = vmatprep.subr.mxu0 0.0
        %4438 = vmatpush2.msra.mxu0 0.0
        %4439 = vmatprep.subr.mxu0 0.0
        %4440 = vmatpush2.msra.mxu0 0.0
        %4441 = vmatprep.subr.mxu0 0.0
        %4442 = vmatpush2.msra.mxu0 0.0
        %4443 = vmatprep.subr.mxu0 0.0
        %4444 = vmatpush2.msra.mxu0 0.0
        %4445 = vmatprep.subr.mxu0 0.0
        %4446 = vmatpush2.msra.mxu0 0.0
        %4447 = vmatprep.subr.mxu0 0.0
        %4448 = vmatpush2.msra.mxu0 0.0
        %4449 = vmatprep.subr.mxu0 0.0
        %4450 = vmatpush2.msra.mxu0 0.0
        %4451 = vmatprep.subr.mxu0 0.0
        %4452 = vmatpush2.msra.mxu0 0.0
        %4453 = vmatprep.subr.mxu0 0.0
        %4454 = vmatpush2.msra.mxu0 0.0
        %4455 = vmatprep.subr.mxu0 0.0
        %4456 = vmatpush2.msra.mxu0 0.0
        %4457 = vmatprep.subr.mxu0 0.0
        %4458 = vmatpush2.msra.mxu0 0.0
        %4459 = vmatprep.mubr.f32.mxu0 0.0
        %4460 = vmatmul.mubr.f32.gmra.mxu0 %v4252
        %v4461 = vpop.f32.mrf.mxu0
        %v4462 = vadd.f32 %v4320, %v4461
        %v4463 = vpop.f32.mrf.mxu0
        %v4464 = vadd.f32 %v4322, %v4463
        %4465 = vdwg.mxu0
        %4466 = vmatprep.subr.mxu0 %v665
        %4467 = vmatpush1.msra.mxu0 %v664
        %4468 = vmatprep.subr.mxu0 %v661
        %4469 = vmatpush1.msra.mxu0 %v660
        %4470 = vmatprep.subr.mxu0 %v657
        %4471 = vmatpush1.msra.mxu0 %v656
        %4472 = vmatprep.subr.mxu0 %v653
        %4473 = vmatpush1.msra.mxu0 %v652
        %4474 = vmatprep.subr.mxu0 %v649
        %4475 = vmatpush1.msra.mxu0 %v648
        %4476 = vmatprep.subr.mxu0 %v645
        %4477 = vmatpush1.msra.mxu0 %v644
        %4478 = vmatprep.subr.mxu0 %v641
        %4479 = vmatpush1.msra.mxu0 %v640
        %4480 = vmatprep.subr.mxu0 %v637
        %4481 = vmatpush1.msra.mxu0 %v636
        %4482 = vmatprep.subr.mxu0 %v633
        %4483 = vmatpush1.msra.mxu0 %v632
        %4484 = vmatprep.subr.mxu0 %v629
        %4485 = vmatpush1.msra.mxu0 %v628
        %4486 = vmatprep.subr.mxu0 %v625
        %4487 = vmatpush1.msra.mxu0 %v624
        %4488 = vmatprep.subr.mxu0 %v621
        %4489 = vmatpush1.msra.mxu0 %v620
        %4490 = vmatprep.subr.mxu0 %v617
        %4491 = vmatpush1.msra.mxu0 %v616
        %4492 = vmatprep.subr.mxu0 %v613
        %4493 = vmatpush1.msra.mxu0 %v612
        %4494 = vmatprep.subr.mxu0 %v609
        %4495 = vmatpush1.msra.mxu0 %v608
        %4496 = vmatprep.subr.mxu0 %v605
        %4497 = vmatpush1.msra.mxu0 %v604
        %4498 = vmatprep.subr.mxu0 0.0
        %4499 = vmatpush2.msra.mxu0 0.0
        %4500 = vmatprep.subr.mxu0 0.0
        %4501 = vmatpush2.msra.mxu0 0.0
        %4502 = vmatprep.subr.mxu0 0.0
        %4503 = vmatpush2.msra.mxu0 0.0
        %4504 = vmatprep.subr.mxu0 0.0
        %4505 = vmatpush2.msra.mxu0 0.0
        %4506 = vmatprep.subr.mxu0 0.0
        %4507 = vmatpush2.msra.mxu0 0.0
        %4508 = vmatprep.subr.mxu0 0.0
        %4509 = vmatpush2.msra.mxu0 0.0
        %4510 = vmatprep.subr.mxu0 0.0
        %4511 = vmatpush2.msra.mxu0 0.0
        %4512 = vmatprep.subr.mxu0 0.0
        %4513 = vmatpush2.msra.mxu0 0.0
        %4514 = vmatprep.subr.mxu0 0.0
        %4515 = vmatpush2.msra.mxu0 0.0
        %4516 = vmatprep.subr.mxu0 0.0
        %4517 = vmatpush2.msra.mxu0 0.0
        %4518 = vmatprep.subr.mxu0 0.0
        %4519 = vmatpush2.msra.mxu0 0.0
        %4520 = vmatprep.subr.mxu0 0.0
        %4521 = vmatpush2.msra.mxu0 0.0
        %4522 = vmatprep.subr.mxu0 0.0
        %4523 = vmatpush2.msra.mxu0 0.0
        %4524 = vmatprep.subr.mxu0 0.0
        %4525 = vmatpush2.msra.mxu0 0.0
        %4526 = vmatprep.subr.mxu0 0.0
        %4527 = vmatpush2.msra.mxu0 0.0
        %4528 = vmatprep.subr.mxu0 0.0
        %4529 = vmatpush2.msra.mxu0 0.0
        %4530 = vmatprep.mubr.f32.mxu0 0.0
        %4531 = vmatmul.mubr.f32.gmra.mxu0 %v4252
        %v4532 = vpop.f32.mrf.mxu0
        %v4533 = vadd.f32 %v4391, %v4532
        %v4534 = vpop.f32.mrf.mxu0
        %v4535 = vadd.f32 %v4393, %v4534
        %4536 = vdwg.mxu0
        %v4537 = vadd.f32 %v4462, %v1210
        %v4538 = vadd.f32 %v4464, %v1214
        %v4539 = vadd.f32 %v4533, %v1218
        %v4540 = vadd.f32 %v4535, %v1222
        %v4541 = vmul.f32 %v4537, 1.442695
        %v4542 = vpow.pop %v4541
        %v4543 = vmul.f32 %v4538, 1.442695
        %v4544 = vpow.pop %v4543
        %v4545 = vtanh.pop %v4539
        %v4546 = vxor.u32 %v4540, 2147483648
        %v4547 = vmul.f32 %v4546, 1.442695
        %v4548 = vpow.pop %v4547
        %v4549 = vadd.f32 %v4548, 1.0
        %v4550 = vrcp.pop %v4549
        %v4551 = vmul.f32 1.0, %v4550
        %v4552 = vmul.f32 %v4544, %v4081
        %v4553 = vmul.f32 %v4542, %v4545
        %v4554 = vadd.f32 %v4552, %v4553
        %v4555 = vtanh.pop %v4554
        %v4556 = vmul.f32 %v4551, %v4555
        %s4557 = scalar_lea.vmem [#allocation4], 56
        %4558 = vst [vmem:[%s4557] sm:$0xff] %v4556
        %4559 = vst [vmem:[#allocation2] sm:$0xff] %v4252
        %4560 = vst [vmem:[#allocation2 + $0x8] sm:$0xff] %v4556
        %4561 = vst [vmem:[#allocation3] sm:$0xff] %v4250
        %4562 = vst [vmem:[#allocation3 + $0x8] sm:$0xff] %v4554
        %v4563 = vld [vmem:[#allocation4] sm:$0xff]
        %v4564 = vld [vmem:[#allocation4 + $0x8] sm:$0xff]
        %v4565 = vld [vmem:[#allocation4 + $0x10] sm:$0xff]
        %v4566 = vld [vmem:[#allocation4 + $0x18] sm:$0xff]
        %v4567 = vld [vmem:[#allocation4 + $0x20] sm:$0xff]
        %v4568 = vld [vmem:[#allocation4 + $0x28] sm:$0xff]
        %v4569 = vld [vmem:[#allocation4 + $0x30] sm:$0xff]
        %v4570 = vld [vmem:[#allocation4 + $0x38] sm:$0xff]
        %v4571 = vmul.f32 %v4563, 0.5
        %v4572 = vmul.f32 %v4564, 0.5
        %v4573 = vmul.f32 %v4565, 0.5
        %v4574 = vmul.f32 %v4566, 0.5
        %v4575 = vmul.f32 %v4567, 0.5
        %v4576 = vmul.f32 %v4568, 0.5
        %v4577 = vmul.f32 %v4569, 0.5
        %v4578 = vmul.f32 %v4570, 0.5
        %v4579 = vrcp.pop 1.4142135
        %v4580 = vmul.f32 %v4563, %v4579
        %v4581 = vmul.f32 %v4564, %v4579
        %v4582 = vmul.f32 %v4565, %v4579
        %v4583 = vmul.f32 %v4566, %v4579
        %v4584 = vmul.f32 %v4567, %v4579
        %v4585 = vmul.f32 %v4568, %v4579
        %v4586 = vmul.f32 %v4569, %v4579
        %v4587 = vmul.f32 %v4570, %v4579
        %v4588 = verf.f32.pop %v4580
        %v4589 = verf.f32.pop %v4581
        %v4590 = verf.f32.pop %v4582
        %v4591 = verf.f32.pop %v4583
        %v4592 = verf.f32.pop %v4584
        %v4593 = verf.f32.pop %v4585
        %v4594 = verf.f32.pop %v4586
        %v4595 = verf.f32.pop %v4587
        %v4596 = vadd.f32 %v4588, 1.0
        %v4597 = vadd.f32 %v4589, 1.0
        %v4598 = vadd.f32 %v4590, 1.0
        %v4599 = vadd.f32 %v4591, 1.0
        %v4600 = vadd.f32 %v4592, 1.0
        %v4601 = vadd.f32 %v4593, 1.0
        %v4602 = vadd.f32 %v4594, 1.0
        %v4603 = vadd.f32 %v4595, 1.0
        %v4604 = vmul.f32 %v4571, %v4596
        %v4605 = vmul.f32 %v4572, %v4597
        %v4606 = vmul.f32 %v4573, %v4598
        %v4607 = vmul.f32 %v4574, %v4599
        %v4608 = vmul.f32 %v4575, %v4600
        %v4609 = vmul.f32 %v4576, %v4601
        %v4610 = vmul.f32 %v4577, %v4602
        %v4611 = vmul.f32 %v4578, %v4603
        %4612 = vadd.xlane.f32.xlu0 %v4604
        %v4613 = vpop.xlane.xlu0 %4612
        %4614 = vadd.xlane.f32.xlu0 %v4605
        %v4615 = vpop.xlane.xlu0 %4614
        %4616 = vadd.xlane.f32.xlu0 %v4606
        %v4617 = vpop.xlane.xlu0 %4616
        %4618 = vadd.xlane.f32.xlu0 %v4607
        %v4619 = vpop.xlane.xlu0 %4618
        %4620 = vadd.xlane.f32.xlu0 %v4608
        %v4621 = vpop.xlane.xlu0 %4620
        %4622 = vadd.xlane.f32.xlu0 %v4609
        %v4623 = vpop.xlane.xlu0 %4622
        %4624 = vadd.xlane.f32.xlu0 %v4610
        %v4625 = vpop.xlane.xlu0 %4624
        %4626 = vadd.xlane.f32.xlu0 %v4611
        %v4627 = vpop.xlane.xlu0 %4626
        %v4628 = vrcp.pop 128.0
        %v4629 = vmul.f32 %v4613, %v4628
        %v4630 = vmul.f32 %v4615, %v4628
        %v4631 = vmul.f32 %v4617, %v4628
        %v4632 = vmul.f32 %v4619, %v4628
        %v4633 = vmul.f32 %v4621, %v4628
        %v4634 = vmul.f32 %v4623, %v4628
        %v4635 = vmul.f32 %v4625, %v4628
        %v4636 = vmul.f32 %v4627, %v4628
        %v4637 = vmul.f32 %v4604, %v4604
        %v4638 = vmul.f32 %v4605, %v4605
        %v4639 = vmul.f32 %v4606, %v4606
        %v4640 = vmul.f32 %v4607, %v4607
        %v4641 = vmul.f32 %v4608, %v4608
        %v4642 = vmul.f32 %v4609, %v4609
        %v4643 = vmul.f32 %v4610, %v4610
        %v4644 = vmul.f32 %v4611, %v4611
        %4645 = vadd.xlane.f32.xlu0 %v4637
        %v4646 = vpop.xlane.xlu0 %4645
        %4647 = vadd.xlane.f32.xlu0 %v4638
        %v4648 = vpop.xlane.xlu0 %4647
        %4649 = vadd.xlane.f32.xlu0 %v4639
        %v4650 = vpop.xlane.xlu0 %4649
        %4651 = vadd.xlane.f32.xlu0 %v4640
        %v4652 = vpop.xlane.xlu0 %4651
        %4653 = vadd.xlane.f32.xlu0 %v4641
        %v4654 = vpop.xlane.xlu0 %4653
        %4655 = vadd.xlane.f32.xlu0 %v4642
        %v4656 = vpop.xlane.xlu0 %4655
        %4657 = vadd.xlane.f32.xlu0 %v4643
        %v4658 = vpop.xlane.xlu0 %4657
        %4659 = vadd.xlane.f32.xlu0 %v4644
        %v4660 = vpop.xlane.xlu0 %4659
        %v4661 = vmul.f32 %v4646, %v4628
        %v4662 = vmul.f32 %v4648, %v4628
        %v4663 = vmul.f32 %v4650, %v4628
        %v4664 = vmul.f32 %v4652, %v4628
        %v4665 = vmul.f32 %v4654, %v4628
        %v4666 = vmul.f32 %v4656, %v4628
        %v4667 = vmul.f32 %v4658, %v4628
        %v4668 = vmul.f32 %v4660, %v4628
        %v4669 = vmul.f32 %v4629, %v4629
        %v4670 = vmul.f32 %v4630, %v4630
        %v4671 = vmul.f32 %v4631, %v4631
        %v4672 = vmul.f32 %v4632, %v4632
        %v4673 = vmul.f32 %v4633, %v4633
        %v4674 = vmul.f32 %v4634, %v4634
        %v4675 = vmul.f32 %v4635, %v4635
        %v4676 = vmul.f32 %v4636, %v4636
        %v4677 = vsub.f32 %v4661, %v4669
        %v4678 = vsub.f32 %v4662, %v4670
        %v4679 = vsub.f32 %v4663, %v4671
        %v4680 = vsub.f32 %v4664, %v4672
        %v4681 = vsub.f32 %v4665, %v4673
        %v4682 = vsub.f32 %v4666, %v4674
        %v4683 = vsub.f32 %v4667, %v4675
        %v4684 = vsub.f32 %v4668, %v4676
        %v4685 = vmax.f32 %v4677, 0.0
        %v4686 = vmax.f32 %v4678, 0.0
        %v4687 = vmax.f32 %v4679, 0.0
        %v4688 = vmax.f32 %v4680, 0.0
        %v4689 = vmax.f32 %v4681, 0.0
        %v4690 = vmax.f32 %v4682, 0.0
        %v4691 = vmax.f32 %v4683, 0.0
        %v4692 = vmax.f32 %v4684, 0.0
        %v4693 = vsub.f32 %v4604, %v4629
        %v4694 = vsub.f32 %v4605, %v4630
        %v4695 = vsub.f32 %v4606, %v4631
        %v4696 = vsub.f32 %v4607, %v4632
        %v4697 = vsub.f32 %v4608, %v4633
        %v4698 = vsub.f32 %v4609, %v4634
        %v4699 = vsub.f32 %v4610, %v4635
        %v4700 = vsub.f32 %v4611, %v4636
        %v4701 = vadd.f32 %v4685, 1e-05
        %v4702 = vadd.f32 %v4686, 1e-05
        %v4703 = vadd.f32 %v4687, 1e-05
        %v4704 = vadd.f32 %v4688, 1e-05
        %v4705 = vadd.f32 %v4689, 1e-05
        %v4706 = vadd.f32 %v4690, 1e-05
        %v4707 = vadd.f32 %v4691, 1e-05
        %v4708 = vadd.f32 %v4692, 1e-05
        %v4709 = vrsqrt.pop %v4701
        %v4710 = vrsqrt.pop %v4702
        %v4711 = vrsqrt.pop %v4703
        %v4712 = vrsqrt.pop %v4704
        %v4713 = vrsqrt.pop %v4705
        %v4714 = vrsqrt.pop %v4706
        %v4715 = vrsqrt.pop %v4707
        %v4716 = vrsqrt.pop %v4708
        %v4717 = vmul.f32 %v4693, %v4709
        %v4718 = vmul.f32 %v4694, %v4710
        %v4719 = vmul.f32 %v4695, %v4711
        %v4720 = vmul.f32 %v4696, %v4712
        %v4721 = vmul.f32 %v4697, %v4713
        %v4722 = vmul.f32 %v4698, %v4714
        %v4723 = vmul.f32 %v4699, %v4715
        %v4724 = vmul.f32 %v4700, %v4716
        %v4726 = vlaneseq
        %v4727 = vshrl.u32 %v4726, 7
        %v4728 = vsub.s32 0, %v4727
        %v4729 = vrot.slane %v731, %v4728
        %v4731 = vmul.f32 %v4717, %v4729
        %v4732 = vmul.f32 %v4718, %v4729
        %v4733 = vmul.f32 %v4719, %v4729
        %v4734 = vmul.f32 %v4720, %v4729
        %v4735 = vmul.f32 %v4721, %v4729
        %v4736 = vmul.f32 %v4722, %v4729
        %v4737 = vmul.f32 %v4723, %v4729
        %v4738 = vmul.f32 %v4724, %v4729
        %v4740 = vlaneseq
        %v4741 = vshrl.u32 %v4740, 7
        %v4742 = vsub.s32 0, %v4741
        %v4743 = vrot.slane %v732, %v4742
        %v4745 = vadd.f32 %v4731, %v4743
        %v4746 = vadd.f32 %v4732, %v4743
        %v4747 = vadd.f32 %v4733, %v4743
        %v4748 = vadd.f32 %v4734, %v4743
        %v4749 = vadd.f32 %v4735, %v4743
        %v4750 = vadd.f32 %v4736, %v4743
        %v4751 = vadd.f32 %v4737, %v4743
        %v4752 = vadd.f32 %v4738, %v4743
        %v4754 = vlaneseq
        %v4755 = vshrl.u32 %v4754, 7
        %v4756 = vsub.s32 0, %v4755
        %v4757 = vrot.slane %v749, %v4756
        %4759 = vmatprep.subr.mxu0 0.0
        %4760 = vmatpush1.msra.mxu0 %v748
        %4761 = vmatprep.subr.mxu0 0.0
        %4762 = vmatpush1.msra.mxu0 %v747
        %4763 = vmatprep.subr.mxu0 0.0
        %4764 = vmatpush1.msra.mxu0 %v746
        %4765 = vmatprep.subr.mxu0 0.0
        %4766 = vmatpush1.msra.mxu0 %v745
        %4767 = vmatprep.subr.mxu0 0.0
        %4768 = vmatpush1.msra.mxu0 %v744
        %4769 = vmatprep.subr.mxu0 0.0
        %4770 = vmatpush1.msra.mxu0 %v743
        %4771 = vmatprep.subr.mxu0 0.0
        %4772 = vmatpush1.msra.mxu0 %v742
        %4773 = vmatprep.subr.mxu0 0.0
        %4774 = vmatpush1.msra.mxu0 %v741
        %4775 = vmatprep.subr.mxu0 0.0
        %4776 = vmatpush1.msra.mxu0 %v740
        %4777 = vmatprep.subr.mxu0 0.0
        %4778 = vmatpush1.msra.mxu0 %v739
        %4779 = vmatprep.subr.mxu0 0.0
        %4780 = vmatpush1.msra.mxu0 %v738
        %4781 = vmatprep.subr.mxu0 0.0
        %4782 = vmatpush1.msra.mxu0 %v737
        %4783 = vmatprep.subr.mxu0 0.0
        %4784 = vmatpush1.msra.mxu0 %v736
        %4785 = vmatprep.subr.mxu0 0.0
        %4786 = vmatpush1.msra.mxu0 %v735
        %4787 = vmatprep.subr.mxu0 0.0
        %4788 = vmatpush1.msra.mxu0 %v734
        %4789 = vmatprep.subr.mxu0 0.0
        %4790 = vmatpush1.msra.mxu0 %v733
        %4791 = vmatprep.subr.mxu0 0.0
        %4792 = vmatpush2.msra.mxu0 0.0
        %4793 = vmatprep.subr.mxu0 0.0
        %4794 = vmatpush2.msra.mxu0 0.0
        %4795 = vmatprep.subr.mxu0 0.0
        %4796 = vmatpush2.msra.mxu0 0.0
        %4797 = vmatprep.subr.mxu0 0.0
        %4798 = vmatpush2.msra.mxu0 0.0
        %4799 = vmatprep.subr.mxu0 0.0
        %4800 = vmatpush2.msra.mxu0 0.0
        %4801 = vmatprep.subr.mxu0 0.0
        %4802 = vmatpush2.msra.mxu0 0.0
        %4803 = vmatprep.subr.mxu0 0.0
        %4804 = vmatpush2.msra.mxu0 0.0
        %4805 = vmatprep.subr.mxu0 0.0
        %4806 = vmatpush2.msra.mxu0 0.0
        %4807 = vmatprep.subr.mxu0 0.0
        %4808 = vmatpush2.msra.mxu0 0.0
        %4809 = vmatprep.subr.mxu0 0.0
        %4810 = vmatpush2.msra.mxu0 0.0
        %4811 = vmatprep.subr.mxu0 0.0
        %4812 = vmatpush2.msra.mxu0 0.0
        %4813 = vmatprep.subr.mxu0 0.0
        %4814 = vmatpush2.msra.mxu0 0.0
        %4815 = vmatprep.subr.mxu0 0.0
        %4816 = vmatpush2.msra.mxu0 0.0
        %4817 = vmatprep.subr.mxu0 0.0
        %4818 = vmatpush2.msra.mxu0 0.0
        %4819 = vmatprep.subr.mxu0 0.0
        %4820 = vmatpush2.msra.mxu0 0.0
        %4821 = vmatprep.subr.mxu0 0.0
        %4822 = vmatpush2.msra.mxu0 0.0
        %4823 = vmatprep.mubr.f32.mxu0 0.0
        %4824 = vmatmul.mubr.f32.gmra.mxu0 %v4745
        %v4825 = vpop.f32.mrf.mxu0
        %v4826 = vadd.f32 %v4757, %v4825
        %v4827 = vpop.f32.mrf.mxu0
        %4828 = vmatprep.mubr.f32.mxu0 0.0
        %4829 = vmatmul.mubr.f32.gmra.mxu0 %v4746
        %v4830 = vpop.f32.mrf.mxu0
        %v4831 = vadd.f32 %v4757, %v4830
        %v4832 = vpop.f32.mrf.mxu0
        %4833 = vmatprep.mubr.f32.mxu0 0.0
        %4834 = vmatmul.mubr.f32.gmra.mxu0 %v4747
        %v4835 = vpop.f32.mrf.mxu0
        %v4836 = vadd.f32 %v4757, %v4835
        %v4837 = vpop.f32.mrf.mxu0
        %4838 = vmatprep.mubr.f32.mxu0 0.0
        %4839 = vmatmul.mubr.f32.gmra.mxu0 %v4748
        %v4840 = vpop.f32.mrf.mxu0
        %v4841 = vadd.f32 %v4757, %v4840
        %v4842 = vpop.f32.mrf.mxu0
        %4843 = vmatprep.mubr.f32.mxu0 0.0
        %4844 = vmatmul.mubr.f32.gmra.mxu0 %v4749
        %v4845 = vpop.f32.mrf.mxu0
        %v4846 = vadd.f32 %v4757, %v4845
        %v4847 = vpop.f32.mrf.mxu0
        %4848 = vmatprep.mubr.f32.mxu0 0.0
        %4849 = vmatmul.mubr.f32.gmra.mxu0 %v4750
        %v4850 = vpop.f32.mrf.mxu0
        %v4851 = vadd.f32 %v4757, %v4850
        %v4852 = vpop.f32.mrf.mxu0
        %4853 = vmatprep.mubr.f32.mxu0 0.0
        %4854 = vmatmul.mubr.f32.gmra.mxu0 %v4751
        %v4855 = vpop.f32.mrf.mxu0
        %v4856 = vadd.f32 %v4757, %v4855
        %v4857 = vpop.f32.mrf.mxu0
        %4858 = vmatprep.mubr.f32.mxu0 0.0
        %4859 = vmatmul.mubr.f32.gmra.mxu0 %v4752
        %v4860 = vpop.f32.mrf.mxu0
        %v4861 = vadd.f32 %v4757, %v4860
        %v4862 = vpop.f32.mrf.mxu0
        %4863 = vdwg.mxu0
        %v4864 = vld [vmem:[%s465] sm:$0xff]
        %v4865 = vld [vmem:[%s465 + $0x8] sm:$0xff]
        %v4866 = vld [vmem:[%s465 + $0x10] sm:$0xff]
        %v4867 = vld [vmem:[%s465 + $0x18] sm:$0xff]
        %v4868 = vld [vmem:[%s465 + $0x20] sm:$0xff]
        %v4869 = vld [vmem:[%s465 + $0x28] sm:$0xff]
        %v4870 = vld [vmem:[%s465 + $0x30] sm:$0xff]
        %v4871 = vld [vmem:[%s465 + $0x38] sm:$0xff]
        %v4872 = vadd.f32 %v4826, %v4864
        %v4873 = vadd.f32 %v4831, %v4865
        %v4874 = vadd.f32 %v4836, %v4866
        %v4875 = vadd.f32 %v4841, %v4867
        %v4876 = vadd.f32 %v4846, %v4868
        %v4877 = vadd.f32 %v4851, %v4869
        %v4878 = vadd.f32 %v4856, %v4870
        %v4879 = vadd.f32 %v4861, %v4871
        %4880 = vst [vmem:[%s522] sm:$0xff] %v4872
        %4881 = vst [vmem:[%s522 + $0x8] sm:$0xff] %v4873
        %4882 = vst [vmem:[%s522 + $0x10] sm:$0xff] %v4874
        %4883 = vst [vmem:[%s522 + $0x18] sm:$0xff] %v4875
        %4884 = vst [vmem:[%s522 + $0x20] sm:$0xff] %v4876
        %4885 = vst [vmem:[%s522 + $0x28] sm:$0xff] %v4877
        %4886 = vst [vmem:[%s522 + $0x30] sm:$0xff] %v4878
        %4887 = vst [vmem:[%s522 + $0x38] sm:$0xff] %v4879
        %p4888 = scmp.eq.s32.totalorder %s36, 1
        // Predicated region
        $region89: #{tpu_custom_call.1} parent=59 // pred_check
          %p4889 = pneg %p4888
        $region90: #{tpu_custom_call.1} parent=59 // pred_check_branch
          %4891 = sbr.rel (%p4889) target = $region92
        $region91: #{tpu_custom_call.1} parent=59 // pred_region
          %v4892 = vld [vmem:[#allocation2] sm:$0xff]
          %v4893 = vld [vmem:[#allocation2 + $0x8] sm:$0xff]
          %4894 = vst [vmem:[#allocation17] sm:$0xff] %v4892
          %4895 = vst [vmem:[#allocation17 + $0x8] sm:$0xff] %v4893
          %v4896 = vld [vmem:[#allocation3] sm:$0xff]
          %v4897 = vld [vmem:[#allocation3 + $0x8] sm:$0xff]
          %4898 = vst [vmem:[#allocation19] sm:$0xff] %v4896
          %4899 = vst [vmem:[#allocation19 + $0x8] sm:$0xff] %v4897
        $region92: #{tpu_custom_call.1} parent=59 // pred_fallthru
          _
        %s4900 = sand.u32 %s264, 1
        %s4901 = scalar_lea.sflag [#allocation7], %s4900
        %s4902 = sand.u32 %s264, 1
        %s4903 = smul.addr %s4902, 64
        %s4904 = scalar_lea.vmem [#allocation16], %s4903
        // Predicated region
        $region93: #{tpu_custom_call.1} parent=59 // pred_check
          %p4905 = pneg %p274
        $region94: #{tpu_custom_call.1} parent=59 // pred_check_branch
          %4907 = sbr.rel (%p4905) target = $region96
        $region95: #{tpu_custom_call.1} parent=59 // pred_region
          %s4908 = smul.u32 8, %s36
          %s4910 = ssub.s32 1024, 1024
          %4911 = vsyncadd %s4901, %s4910
          %s4912 = smul.addr %s4908, 128
          %s4913 = scalar_lea.hbm %s10, %s4912
          %s4914 = sshll.u32 %s4904, 4
          %s4915 = int_to_ptr.vmem [resolvable:$true] %s4914
          %4920 = dma.vmem_to_hbm [thread:$0]  %s4915, 1024, %s4913, %s4901, 128, 128, 8
        $region96: #{tpu_custom_call.1} parent=59 // pred_fallthru
          _
        // Predicated region
        $region97: #{tpu_custom_call.1} parent=59 // pred_check
          %p4921 = pneg %p295
        $region98: #{tpu_custom_call.1} parent=59 // pred_check_branch
          %4923 = sbr.rel (%p4921) target = $region100
        $region99: #{tpu_custom_call.1} parent=59 // pred_region
          %s4925 = ssub.s32 256, 256
          %4926 = vsyncadd [#allocation18], %s4925
          %s4927 = sshll.u32 [#allocation17], 4
          %s4928 = int_to_ptr.vmem [resolvable:$true] %s4927
          %4933 = dma.vmem_to_hbm [thread:$0]  %s4928, 256, %s11, [#allocation18], 128, 128, 8
        $region100: #{tpu_custom_call.1} parent=59 // pred_fallthru
          _
        // Predicated region
        $region101: #{tpu_custom_call.1} parent=59 // pred_check
          %p4934 = pneg %p316
        $region102: #{tpu_custom_call.1} parent=59 // pred_check_branch
          %4936 = sbr.rel (%p4934) target = $region104
        $region103: #{tpu_custom_call.1} parent=59 // pred_region
          %s4938 = ssub.s32 256, 256
          %4939 = vsyncadd [#allocation18], %s4938
          %s4940 = sshll.u32 [#allocation19], 4
          %s4941 = int_to_ptr.vmem [resolvable:$true] %s4940
          %4946 = dma.vmem_to_hbm [thread:$0]  %s4941, 256, %s12, [#allocation18], 128, 128, 8
        $region104: #{tpu_custom_call.1} parent=59 // pred_fallthru
          _
        // Predicated region
        $region105: #{tpu_custom_call.1} parent=59 // pred_check
          %p4947 = pneg %p295
        $region106: #{tpu_custom_call.1} parent=59 // pred_check_branch
          %4949 = sbr.rel (%p4947) target = $region108
        $region107: #{tpu_custom_call.1} parent=59 // pred_region
          %4950 = dma.done [#allocation18], 256
        $region108: #{tpu_custom_call.1} parent=59 // pred_fallthru
          _
        // Predicated region
        $region109: #{tpu_custom_call.1} parent=59 // pred_check
          %p4951 = pneg %p316
        $region110: #{tpu_custom_call.1} parent=59 // pred_check_branch
          %4953 = sbr.rel (%p4951) target = $region112
        $region111: #{tpu_custom_call.1} parent=59 // pred_region
          %4954 = dma.done [#allocation18], 256
        $region112: #{tpu_custom_call.1} parent=59 // pred_fallthru
          _
      $region60: #{tpu_custom_call.1} parent=5 // pred_fallthru
        _
      %p4955 = scmp.le.s32.totalorder 2, %s31
      // Predicated region
      $region113: #{tpu_custom_call.1} parent=5 // pred_check
        %p4956 = pneg %p4955
      $region114: #{tpu_custom_call.1} parent=5 // pred_check_branch
        %4958 = sbr.rel (%p4956) target = $region116
      $region115: #{tpu_custom_call.1} parent=5 // pred_region
        %s4959 = ssub.s32 %s31, 2
        // Predicated region
        $region117: #{tpu_custom_call.1} parent=115 // pred_check
          %p4960 = pneg %p280
        $region118: #{tpu_custom_call.1} parent=115 // pred_check_branch
          %4962 = sbr.rel (%p4960) target = $region120
        $region119: #{tpu_custom_call.1} parent=115 // pred_region
          %s4963 = sand.u32 %s265, 1
          %s4964 = scalar_lea.sflag [#allocation7], %s4963
          %s4965 = sand.u32 %s265, 1
          %s4966 = smul.addr %s4965, 64
          %s4967 = scalar_lea.vmem [#allocation16], %s4966
          %4968 = dma.done %s4964, 1024
        $region120: #{tpu_custom_call.1} parent=115 // pred_fallthru
          _
      $region116: #{tpu_custom_call.1} parent=5 // pred_fallthru
        _
    $region6: #{tpu_custom_call.1} parent=1 // loop_footer
      %s35 = sadd.s32 1, %s31
    $region7: #{tpu_custom_call.1} parent=1 // loop_footer_branch
      %30 = sbr.rel target = $region3
    $region8: #{tpu_custom_call.1} parent=1 // loop_exit
      _
    %4969 = vsyncpa [#allocation6], 1
    %s4970 = scalar_lea.sflag [#allocation6], 1
    %4971 = vsyncpa %s4970, 1
    %4972 = vsyncpa [#allocation9], 1
    %s4973 = scalar_lea.sflag [#allocation9], 1
    %4974 = vsyncpa %s4973, 1
    %4975 = vsyncpa [#allocation12], 1
    %4976 = vsyncpa [#allocation15], 1
    %4977 = vsyncpa [#allocation7], 1
    %s4978 = scalar_lea.sflag [#allocation7], 1
    %4979 = vsyncpa %s4978, 1
    %4980 = vsyncpa [#allocation18], 1

</llo_original>
